<compile_context>
chip_gen: v5e
topology: v5e:2x2
jax: 0.10.0
libtpu: 0.0.40
codegen_flags: <defaults>
</compile_context>

<pallas_src>
import functools

import jax
import jax.numpy as jnp
from jax.experimental import pallas as pl
from jax.experimental.pallas import tpu as pltpu

EPS = 1e-6


# ----------------------------------------------------------------------------
# Position embedding (glue, plain JAX — one-time elementwise setup)
# ----------------------------------------------------------------------------
def position_embedding_sine_erp(b, h, w, lat_range, long_range, num_pos_feats,
                                temperature=10000.0):
    ys = (jnp.arange(h, dtype=jnp.float32) + 0.5) / h
    xs = (jnp.arange(w, dtype=jnp.float32) + 0.5) / w
    lat = lat_range[:, 0:1] + ys[None, :] * (lat_range[:, 1:2] - lat_range[:, 0:1])   # (b, h)
    lon = long_range[:, 0:1] + xs[None, :] * (long_range[:, 1:2] - long_range[:, 0:1])  # (b, w)
    y_embed = jnp.broadcast_to(lat[:, :, None], (b, h, w))
    x_embed = jnp.broadcast_to(lon[:, None, :], (b, h, w))
    dim_t = temperature ** (
        2.0 * (jnp.arange(num_pos_feats) // 2).astype(jnp.float32) / num_pos_feats)
    pos_x = x_embed[..., None] / dim_t
    pos_y = y_embed[..., None] / dim_t
    pos_x = jnp.stack([jnp.sin(pos_x[..., 0::2]), jnp.cos(pos_x[..., 1::2])],
                      axis=-1).reshape(b, h, w, num_pos_feats)
    pos_y = jnp.stack([jnp.sin(pos_y[..., 0::2]), jnp.cos(pos_y[..., 1::2])],
                      axis=-1).reshape(b, h, w, num_pos_feats)
    return jnp.concatenate([pos_y, pos_x], axis=-1)  # (b, h, w, 2*num_pos_feats)


# ----------------------------------------------------------------------------
# In-kernel helpers
# ----------------------------------------------------------------------------
def _ln(x, g, b, eps):
    mu = jnp.mean(x, axis=-1, keepdims=True)
    xc = x - mu
    var = jnp.mean(xc * xc, axis=-1, keepdims=True)
    return xc * jax.lax.rsqrt(var + eps) * g + b


def _ln_concat(x, pe, gx, bx, gp, bp, eps):
    """LayerNorm over the (virtual) concatenation [x, pe] without a concat op."""
    c = x.shape[-1]
    n = c + pe.shape[-1]
    s = jnp.sum(x, axis=-1, keepdims=True) + jnp.sum(pe, axis=-1, keepdims=True)
    mu = s / n
    xc = x - mu
    pc = pe - mu
    ss = (jnp.sum(xc * xc, axis=-1, keepdims=True)
          + jnp.sum(pc * pc, axis=-1, keepdims=True))
    inv = jax.lax.rsqrt(ss / n + eps)
    return xc * inv * gx + bx, pc * inv * gp + bp


# ----------------------------------------------------------------------------
# Pallas kernel: one (batch, HW tile, depth) grid step
# ----------------------------------------------------------------------------
def isd_head_kernel(
        # tensors
        fm_ref, pe_ref, idr_ref,
        # per-depth params (leading depth dim blocked to 1)
        gsx_ref, bsx_ref, gsp_ref, bsp_ref, gsr_ref, bsr_ref,
        wqx_ref, wqp_ref, bq_ref, wk_ref, bk_ref, wv_ref, bv_ref, wo_ref, bo_ref,
        gm_ref, bm_ref, w1_ref, b1_ref, w2_ref, b2_ref,
        # proj_output params (depth-invariant)
        g_po1_ref, b_po1_ref, w_po1_ref, c_po1_ref,
        g_po2_ref, b_po2_ref, w_po2t_ref, c_po2_ref,
        # output / scratch
        out_ref, x_ref,
        *, num_heads, eps):
    d = pl.program_id(2)
    bf = jnp.bfloat16

    # Initialize the residual-stream carry at the first depth step of this tile.
    @pl.when(d == 0)
    def _init():
        x_ref[...] = fm_ref[0].astype(jnp.float32)

    x = x_ref[...]            # (T, C) f32 carry
    pe = pe_ref[0]            # (T, PE)
    src = idr_ref[0]          # (N, Q)
    T, C = x.shape
    PE = pe.shape[-1]
    N, Q = src.shape
    nh = num_heads
    dh = wqx_ref.shape[-1]
    scale = 1.0 / (dh ** 0.5)

    # ---------------- AttentionLayerIsoPE (pre-norm cross attention) ---------
    xn, pen = _ln_concat(x, pe, gsx_ref[0], bsx_ref[0], gsp_ref[0], bsp_ref[0], eps)
    sn = _ln(src, gsr_ref[0], bsr_ref[0], eps)

    # Head-batched projections: lhs broadcast over heads, weights pre-split
    # host-side to (nh, Cin, dh).  All dots are canonical leading-batch matmuls.
    xn_b = jnp.broadcast_to(xn.astype(bf)[None], (nh, T, C))
    pen_b = jnp.broadcast_to(pen.astype(bf)[None], (nh, T, PE))
    sn_b = jnp.broadcast_to(sn.astype(bf)[None], (nh, N, Q))

    dn_proj = (((2,), (1,)), ((0,), (0,)))   # htc,hcd->htd
    q = (jax.lax.dot_general(xn_b, wqx_ref[0], dn_proj,
                             preferred_element_type=jnp.float32)
         + jax.lax.dot_general(pen_b, wqp_ref[0], dn_proj,
                               preferred_element_type=jnp.float32)
         + bq_ref[0])                                                  # (nh, T, dh)
    k = jax.lax.dot_general(sn_b, wk_ref[0], dn_proj,
                            preferred_element_type=jnp.float32) + bk_ref[0]
    v = jax.lax.dot_general(sn_b, wv_ref[0], dn_proj,
                            preferred_element_type=jnp.float32) + bv_ref[0]

    # scores: htd,hnd->htn
    s = jax.lax.dot_general(q.astype(bf), k.astype(bf),
                            (((2,), (2,)), ((0,), (0,))),
                            preferred_element_type=jnp.float32) * scale
    s = s - jnp.max(s, axis=-1, keepdims=True)
    p = jnp.exp(s)
    p = p * pl.reciprocal(jnp.sum(p, axis=-1, keepdims=True), approx=True)

    # attention output: htn,hnd->htd
    o = jax.lax.dot_general(p.astype(bf), v.astype(bf),
                            (((2,), (1,)), ((0,), (0,))),
                            preferred_element_type=jnp.float32)        # (nh, T, dh)
    # merged output projection: htd,hdc->htc, then sum over heads
    upd3 = jax.lax.dot_general(o.astype(bf), wo_ref[0],
                               (((2,), (1,)), ((0,), (0,))),
                               preferred_element_type=jnp.float32)     # (nh, T, C)
    update = jnp.sum(upd3, axis=0) + bo_ref[0]
    # module does update[:, :, :c]; it is a no-op here since output_dim == pixel_dim
    x = x + update

    # ---------------- per-depth MLP: LN -> Linear -> SiLU -> Linear ----------
    xm = _ln(x, gm_ref[0], bm_ref[0], eps)
    h1 = jnp.dot(xm.astype(bf), w1_ref[0],
                 preferred_element_type=jnp.float32) + b1_ref[0]
    h1 = h1 * jax.nn.sigmoid(h1)                                       # SiLU
    h2 = jnp.dot(h1.astype(bf), w2_ref[0],
                 preferred_element_type=jnp.float32) + b2_ref[0]
    x = x + h2

    x_ref[...] = x

    # ---------------- proj_output: LN -> Linear -> LN -> Linear --------------
    @pl.when(d == pl.num_programs(2) - 1)
    def _finalize():
        xo = _ln(x, g_po1_ref[...], b_po1_ref[...], eps)
        y = jnp.dot(xo.astype(bf), w_po1_ref[...],
                    preferred_element_type=jnp.float32) + c_po1_ref[...]
        yo = _ln(y, g_po2_ref[...], b_po2_ref[...], eps)
        # lane-dense output (out_dim, T): contract C of W^T with C of yo
        out = jax.lax.dot_general(w_po2t_ref[...], yo.astype(bf),
                                  (((1,), (1,)), ((), ())),
                                  preferred_element_type=jnp.float32)
        out_ref[0] = out + c_po2_ref[...]


# ----------------------------------------------------------------------------
# Wrapper
# ----------------------------------------------------------------------------
_DEPTH_PARAM_NAMES = ["gsx", "bsx", "gsp", "bsp", "gsr", "bsr",
                      "wqx", "wqp", "bq", "wk", "bk", "wv", "bv", "wo", "bo",
                      "gm", "bm", "w1", "b1", "w2", "b2"]
_CONST_PARAM_NAMES = ["g_po1", "b_po1", "w_po1", "c_po1",
                      "g_po2", "b_po2", "w_po2t", "c_po2"]


def isd_head_forward(params, cfg, feature_map, idrs, lat_range, long_range,
                     hw_block=None):
    B, C, H, W = feature_map.shape
    HW = H * W
    PE = cfg["pe_dim"]
    out_dim = cfg["output_dim"]
    depth = cfg["depth"]
    nh = cfg["num_heads"]
    hid = C                          # hidden_dim = pixel_dim in ISDHead
    dh = hid // nh
    Nq, Qd = idrs.shape[1], idrs.shape[2]
    bf16 = jnp.bfloat16
    f32 = jnp.float32

    if hw_block is None:
        hw_block = HW
    assert HW % hw_block == 0 and (hw_block == HW or hw_block % 128 == 0)
    n_t = HW // hw_block

    pe = position_embedding_sine_erp(B, H, W, lat_range, long_range, PE // 2)
    pe_seq = pe.reshape(B, HW, PE).astype(f32)
    fm_seq = jnp.transpose(feature_map, (0, 2, 3, 1)).reshape(B, HW, C).astype(f32)
    idrs = idrs.astype(f32)

    # ----- host-side (free) parameter re-layout: per-head splits, bf16 weights
    def split_heads_w(w):            # (depth, Cin, hid) -> (depth, nh, Cin, dh)
        dd, cin, _ = w.shape
        return jnp.transpose(w.reshape(dd, cin, nh, dh), (0, 2, 1, 3)).astype(bf16)

    def split_heads_b(b):            # (depth, hid) -> (depth, nh, 1, dh)
        dd = b.shape[0]
        return b.reshape(dd, nh, 1, dh).astype(f32)

    def as3d(a):                     # (depth, X) -> (depth, 1, X)
        return a[:, None, :].astype(f32)

    Wq = params["Wq"]                # (depth, C+PE, hid)
    prepared = {
        "gsx": as3d(params["g_sink"][:, :C]), "bsx": as3d(params["b_sink"][:, :C]),
        "gsp": as3d(params["g_sink"][:, C:]), "bsp": as3d(params["b_sink"][:, C:]),
        "gsr": as3d(params["g_src"]), "bsr": as3d(params["b_src"]),
        "wqx": split_heads_w(Wq[:, :C, :]), "wqp": split_heads_w(Wq[:, C:, :]),
        "bq": split_heads_b(params["bq"]),
        "wk": split_heads_w(params["Wk"]), "bk": split_heads_b(params["bk"]),
        "wv": split_heads_w(params["Wv"]), "bv": split_heads_b(params["bv"]),
        "wo": params["Wo"].reshape(depth, nh, dh, C).astype(bf16),
        "bo": as3d(params["bo"]),
        "gm": as3d(params["g_mlp"]), "bm": as3d(params["b_mlp"]),
        "w1": params["W1"].astype(bf16), "b1": as3d(params["b1"]),
        "w2": params["W2"].astype(bf16), "b2": as3d(params["b2"]),
        "g_po1": params["g_p1"].astype(f32), "b_po1": params["b_p1"].astype(f32),
        "w_po1": params["Wp1"].astype(bf16), "c_po1": params["bp1"].astype(f32),
        "g_po2": params["g_p2"].astype(f32), "b_po2": params["b_p2"].astype(f32),
        "w_po2t": params["Wp2"].T.astype(bf16),                 # (out_dim, C)
        "c_po2": params["bp2"].reshape(out_dim, 1).astype(f32),
    }
    flat = [prepared[n] for n in _DEPTH_PARAM_NAMES + _CONST_PARAM_NAMES]

    def depth_spec(arr):
        rest = arr.ndim - 1
        return pl.BlockSpec((1,) + tuple(arr.shape[1:]),
                            lambda b, t, d, _r=rest: (d,) + (0,) * _r)

    def const_spec(arr):
        nd = arr.ndim
        return pl.BlockSpec(tuple(arr.shape), lambda b, t, d, _nd=nd: (0,) * _nd)

    in_specs = [
        pl.BlockSpec((1, hw_block, C), lambda b, t, d: (b, t, 0)),
        pl.BlockSpec((1, hw_block, PE), lambda b, t, d: (b, t, 0)),
        pl.BlockSpec((1, Nq, Qd), lambda b, t, d: (b, 0, 0)),
    ]
    in_specs += [depth_spec(prepared[n]) for n in _DEPTH_PARAM_NAMES]
    in_specs += [const_spec(prepared[n]) for n in _CONST_PARAM_NAMES]

    kernel = functools.partial(isd_head_kernel, num_heads=nh, eps=EPS)

    out_seq = pl.pallas_call(
        kernel,
        out_shape=jax.ShapeDtypeStruct((B, out_dim, HW), jnp.float32),
        grid_spec=pltpu.PrefetchScalarGridSpec(
            num_scalar_prefetch=0,
            grid=(B, n_t, depth),
            in_specs=in_specs,
            out_specs=pl.BlockSpec((1, out_dim, hw_block), lambda b, t, d: (b, 0, t)),
            scratch_shapes=[pltpu.VMEM((hw_block, C), jnp.float32)],
        ),
        compiler_params=pltpu.CompilerParams(
            dimension_semantics=("parallel", "parallel", "arbitrary")),
    )(fm_seq, pe_seq, idrs, *flat)

    # lane-dense (B, out_dim, HW) -> NCHW with a pure reshape (no transpose)
    return out_seq.reshape(B, out_dim, H, W)


# ----------------------------------------------------------------------------
# Pure-JAX reference (f32, for correctness check)
# ----------------------------------------------------------------------------
def reference_forward(params, cfg, feature_map, idrs, lat_range, long_range):
    B, C, H, W = feature_map.shape
    HW = H * W
    pe_dim, nh = cfg["pe_dim"], cfg["num_heads"]
    pe = position_embedding_sine_erp(B, H, W, lat_range, long_range, pe_dim // 2)
    pe = pe.reshape(B, HW, pe_dim)
    x = jnp.transpose(feature_map, (0, 2, 3, 1)).reshape(B, HW, C)

    def ln(t, g, b):
        mu = jnp.mean(t, -1, keepdims=True)
        var = jnp.mean((t - mu) ** 2, -1, keepdims=True)
        return (t - mu) * jax.lax.rsqrt(var + EPS) * g + b

    for d in range(cfg["depth"]):
        x_ext = jnp.concatenate([x, pe], axis=-1)
        sk = ln(x_ext, params["g_sink"][d], params["b_sink"][d])
        sr = ln(idrs, params["g_src"][d], params["b_src"][d])
        q = sk @ params["Wq"][d] + params["bq"][d]
        k = sr @ params["Wk"][d] + params["bk"][d]
        v = sr @ params["Wv"][d] + params["bv"][d]
        hid = q.shape[-1]
        dh = hid // nh
        qh = q.reshape(B, HW, nh, dh)
        kh = k.reshape(B, -1, nh, dh)
        vh = v.reshape(B, -1, nh, dh)
        s = jnp.einsum("bqhd,bkhd->bhqk", qh, kh) / jnp.sqrt(dh)
        p = jax.nn.softmax(s, axis=-1)
        o = jnp.einsum("bhqk,bkhd->bqhd", p, vh).reshape(B, HW, hid)
        upd = o @ params["Wo"][d] + params["bo"][d]
        x = x + upd[..., :C]
        xm = ln(x, params["g_mlp"][d], params["b_mlp"][d])
        h1 = jax.nn.silu(xm @ params["W1"][d] + params["b1"][d])
        x = x + (h1 @ params["W2"][d] + params["b2"][d])

    xo = ln(x, params["g_p1"], params["b_p1"])
    y = xo @ params["Wp1"] + params["bp1"]
    yo = ln(y, params["g_p2"], params["b_p2"])
    out = yo @ params["Wp2"] + params["bp2"]
    return jnp.transpose(out.reshape(B, H, W, -1), (0, 3, 1, 2))


# ----------------------------------------------------------------------------
# Deterministic parameter init (PyTorch Linear / LayerNorm defaults)
# ----------------------------------------------------------------------------
def make_params(key, cfg):
    depth = cfg["depth"]
    C = cfg["pixel_dim"]
    Q = cfg["query_dim"]
    PE = cfg["pe_dim"]
    hid = C                        # hidden_dim = pixel_dim
    exp = cfg["expansion"]
    out_dim = cfg["output_dim"]

    keys = iter(jax.random.split(key, 64))

    def linear(fan_in, fan_out):
        lim = 1.0 / jnp.sqrt(fan_in)
        w = jax.random.uniform(next(keys), (fan_in, fan_out), jnp.float32, -lim, lim)
        b = jax.random.uniform(next(keys), (fan_out,), jnp.float32, -lim, lim)
        return w, b

    def stack(fn):
        ws, bs = zip(*[fn() for _ in range(depth)])
        return jnp.stack(ws), jnp.stack(bs)

    p = {}
    p["g_sink"] = jnp.ones((depth, C + PE), jnp.float32)
    p["b_sink"] = jnp.zeros((depth, C + PE), jnp.float32)
    p["g_src"] = jnp.ones((depth, Q), jnp.float32)
    p["b_src"] = jnp.zeros((depth, Q), jnp.float32)
    p["Wq"], p["bq"] = stack(lambda: linear(C + PE, hid))
    p["Wk"], p["bk"] = stack(lambda: linear(Q, hid))
    p["Wv"], p["bv"] = stack(lambda: linear(Q, hid))
    p["Wo"], p["bo"] = stack(lambda: linear(hid, C))
    p["g_mlp"] = jnp.ones((depth, C), jnp.float32)
    p["b_mlp"] = jnp.zeros((depth, C), jnp.float32)
    p["W1"], p["b1"] = stack(lambda: linear(C, exp * C))
    p["W2"], p["b2"] = stack(lambda: linear(exp * C, C))
    p["g_p1"] = jnp.ones((1, C), jnp.float32)
    p["b_p1"] = jnp.zeros((1, C), jnp.float32)
    wp1, bp1 = linear(C, C)
    p["Wp1"], p["bp1"] = wp1, bp1.reshape(1, C)
    p["g_p2"] = jnp.ones((1, C), jnp.float32)
    p["b_p2"] = jnp.zeros((1, C), jnp.float32)
    wp2, bp2 = linear(C, out_dim)
    p["Wp2"], p["bp2"] = wp2, bp2.reshape(1, out_dim)
    return p


# ----------------------------------------------------------------------------
if __name__ == "__main__":
    cfg = dict(depth=2, pixel_dim=32, query_dim=32, pe_dim=16, num_heads=4,
               output_dim=1, expansion=2)

    B, C, H, W = 2, cfg["pixel_dim"], 8, 8
    N_QUERIES = 8

    root = jax.random.PRNGKey(0)
    k_fm, k_idr, k_lat, k_lon, k_par = jax.random.split(root, 5)

    feature_map = jax.random.normal(k_fm, (B, C, H, W), jnp.float32)
    idrs = jax.random.normal(k_idr, (B, N_QUERIES, cfg["query_dim"]), jnp.float32)
    lat_range = jnp.stack(
        [jnp.full((B,), -jnp.pi / 2) + 0.1 * jax.random.uniform(k_lat, (B,)),
         jnp.full((B,), jnp.pi / 2)], axis=-1).astype(jnp.float32)
    long_range = jnp.stack(
        [jnp.full((B,), -jnp.pi) + 0.1 * jax.random.uniform(k_lon, (B,)),
         jnp.full((B,), jnp.pi)], axis=-1).astype(jnp.float32)

    params = make_params(k_par, cfg)

    out = isd_head_forward(params, cfg, feature_map, idrs, lat_range, long_range)
    out = jax.block_until_ready(out)

    ref = reference_forward(params, cfg, feature_map, idrs, lat_range, long_range)
    ref = jax.block_until_ready(ref)

    assert out.shape == (B, cfg["output_dim"], H, W), out.shape
    # Tolerance covers bf16 MXU operands + approx reciprocal vs the pure-f32 reference.
    max_diff = float(jnp.max(jnp.abs(out - ref)))
    assert max_diff < 1e-1, f"mismatch vs reference: {max_diff}"

    print("KERNEL_OK")
</pallas_src>

<mosaic_0001>
module attributes {stable_mosaic.version = 11 : i64} {
  func.func @isd_head_kernel(%arg0: i32, %arg1: i32, %arg2: i32, %arg3: memref<1x64x32xf32, #tpu.memory_space<vmem>>, %arg4: memref<1x64x16xf32, #tpu.memory_space<vmem>>, %arg5: memref<1x8x32xf32, #tpu.memory_space<vmem>>, %arg6: memref<1x1x32xf32, #tpu.memory_space<vmem>>, %arg7: memref<1x1x32xf32, #tpu.memory_space<vmem>>, %arg8: memref<1x1x16xf32, #tpu.memory_space<vmem>>, %arg9: memref<1x1x16xf32, #tpu.memory_space<vmem>>, %arg10: memref<1x1x32xf32, #tpu.memory_space<vmem>>, %arg11: memref<1x1x32xf32, #tpu.memory_space<vmem>>, %arg12: memref<1x4x32x8xbf16, #tpu.memory_space<vmem>>, %arg13: memref<1x4x16x8xbf16, #tpu.memory_space<vmem>>, %arg14: memref<1x4x1x8xf32, #tpu.memory_space<vmem>>, %arg15: memref<1x4x32x8xbf16, #tpu.memory_space<vmem>>, %arg16: memref<1x4x1x8xf32, #tpu.memory_space<vmem>>, %arg17: memref<1x4x32x8xbf16, #tpu.memory_space<vmem>>, %arg18: memref<1x4x1x8xf32, #tpu.memory_space<vmem>>, %arg19: memref<1x4x8x32xbf16, #tpu.memory_space<vmem>>, %arg20: memref<1x1x32xf32, #tpu.memory_space<vmem>>, %arg21: memref<1x1x32xf32, #tpu.memory_space<vmem>>, %arg22: memref<1x1x32xf32, #tpu.memory_space<vmem>>, %arg23: memref<1x32x64xbf16, #tpu.memory_space<vmem>>, %arg24: memref<1x1x64xf32, #tpu.memory_space<vmem>>, %arg25: memref<1x64x32xbf16, #tpu.memory_space<vmem>>, %arg26: memref<1x1x32xf32, #tpu.memory_space<vmem>>, %arg27: memref<1x32xf32, #tpu.memory_space<vmem>>, %arg28: memref<1x32xf32, #tpu.memory_space<vmem>>, %arg29: memref<32x32xbf16, #tpu.memory_space<vmem>>, %arg30: memref<1x32xf32, #tpu.memory_space<vmem>>, %arg31: memref<1x32xf32, #tpu.memory_space<vmem>>, %arg32: memref<1x32xf32, #tpu.memory_space<vmem>>, %arg33: memref<1x32xbf16, #tpu.memory_space<vmem>>, %arg34: memref<1x1xf32, #tpu.memory_space<vmem>>, %arg35: memref<1x1x64xf32, #tpu.memory_space<vmem>>, %arg36: memref<64x32xf32, #tpu.memory_space<vmem>>) attributes {dimension_semantics = [#tpu.dimension_semantics<parallel>, #tpu.dimension_semantics<parallel>, #tpu.dimension_semantics<arbitrary>], iteration_bounds = array<i64: 2, 1, 2>, scalar_prefetch = 0 : i64, scratch_operands = 1 : i64, tpu.core_type = #tpu.core_type<tc>, window_params = [{transform_indices = @transform_0, window_bounds = array<i64: 1, 64, 32>}, {transform_indices = @transform_1, window_bounds = array<i64: 1, 64, 16>}, {transform_indices = @transform_2, window_bounds = array<i64: 1, 8, 32>}, {transform_indices = @transform_3, window_bounds = array<i64: 1, 1, 32>}, {transform_indices = @transform_4, window_bounds = array<i64: 1, 1, 32>}, {transform_indices = @transform_5, window_bounds = array<i64: 1, 1, 16>}, {transform_indices = @transform_6, window_bounds = array<i64: 1, 1, 16>}, {transform_indices = @transform_7, window_bounds = array<i64: 1, 1, 32>}, {transform_indices = @transform_8, window_bounds = array<i64: 1, 1, 32>}, {transform_indices = @transform_9, window_bounds = array<i64: 1, 4, 32, 8>}, {transform_indices = @transform_10, window_bounds = array<i64: 1, 4, 16, 8>}, {transform_indices = @transform_11, window_bounds = array<i64: 1, 4, 1, 8>}, {transform_indices = @transform_12, window_bounds = array<i64: 1, 4, 32, 8>}, {transform_indices = @transform_13, window_bounds = array<i64: 1, 4, 1, 8>}, {transform_indices = @transform_14, window_bounds = array<i64: 1, 4, 32, 8>}, {transform_indices = @transform_15, window_bounds = array<i64: 1, 4, 1, 8>}, {transform_indices = @transform_16, window_bounds = array<i64: 1, 4, 8, 32>}, {transform_indices = @transform_17, window_bounds = array<i64: 1, 1, 32>}, {transform_indices = @transform_18, window_bounds = array<i64: 1, 1, 32>}, {transform_indices = @transform_19, window_bounds = array<i64: 1, 1, 32>}, {transform_indices = @transform_20, window_bounds = array<i64: 1, 32, 64>}, {transform_indices = @transform_21, window_bounds = array<i64: 1, 1, 64>}, {transform_indices = @transform_22, window_bounds = array<i64: 1, 64, 32>}, {transform_indices = @transform_23, window_bounds = array<i64: 1, 1, 32>}, {pipeline_mode = #tpu.pipeline_mode<synchronous>, transform_indices = @transform_24, window_bounds = array<i64: 1, 32>}, {pipeline_mode = #tpu.pipeline_mode<synchronous>, transform_indices = @transform_25, window_bounds = array<i64: 1, 32>}, {pipeline_mode = #tpu.pipeline_mode<synchronous>, transform_indices = @transform_26, window_bounds = array<i64: 32, 32>}, {pipeline_mode = #tpu.pipeline_mode<synchronous>, transform_indices = @transform_27, window_bounds = array<i64: 1, 32>}, {pipeline_mode = #tpu.pipeline_mode<synchronous>, transform_indices = @transform_28, window_bounds = array<i64: 1, 32>}, {pipeline_mode = #tpu.pipeline_mode<synchronous>, transform_indices = @transform_29, window_bounds = array<i64: 1, 32>}, {pipeline_mode = #tpu.pipeline_mode<synchronous>, transform_indices = @transform_30, window_bounds = array<i64: 1, 32>}, {pipeline_mode = #tpu.pipeline_mode<synchronous>, transform_indices = @transform_31, window_bounds = array<i64: 1, 1>}, {transform_indices = @transform_32, window_bounds = array<i64: 1, 1, 64>}]} {
    %c0_i32 = arith.constant 0 : i32
    %0 = arith.cmpi eq, %arg2, %c0_i32 : i32
    %1 = arith.extui %0 : i1 to i32
    %c0_i32_0 = arith.constant 0 : i32
    %2 = arith.cmpi ne, %1, %c0_i32_0 : i32
    scf.if %2 {
      %c0_112 = arith.constant 0 : index
      %c0_113 = arith.constant 0 : index
      %c0_114 = arith.constant 0 : index
      %191 = vector.load %arg3[%c0_112, %c0_113, %c0_114] : memref<1x64x32xf32, #tpu.memory_space<vmem>>, vector<1x64x32xf32>
      %192 = vector.shape_cast %191 : vector<1x64x32xf32> to vector<64x32xf32>
      %c0_115 = arith.constant 0 : index
      %c0_116 = arith.constant 0 : index
      %193 = vector.load %arg36[%c0_115, %c0_116] : memref<64x32xf32, #tpu.memory_space<vmem>>, vector<64x32xf32>
      tpu.vector_store %arg36[%c0_115, %c0_116], %192 {strides = array<i32>} : memref<64x32xf32, #tpu.memory_space<vmem>>, vector<64x32xf32>,
    } else {
    }
    %c0 = arith.constant 0 : index
    %c0_1 = arith.constant 0 : index
    %3 = vector.load %arg36[%c0, %c0_1] : memref<64x32xf32, #tpu.memory_space<vmem>>, vector<64x32xf32>
    %c0_2 = arith.constant 0 : index
    %c0_3 = arith.constant 0 : index
    %c0_4 = arith.constant 0 : index
    %4 = vector.load %arg4[%c0_2, %c0_3, %c0_4] : memref<1x64x16xf32, #tpu.memory_space<vmem>>, vector<1x64x16xf32>
    %5 = vector.shape_cast %4 : vector<1x64x16xf32> to vector<64x16xf32>
    %c0_5 = arith.constant 0 : index
    %c0_6 = arith.constant 0 : index
    %c0_7 = arith.constant 0 : index
    %6 = vector.load %arg5[%c0_5, %c0_6, %c0_7] : memref<1x8x32xf32, #tpu.memory_space<vmem>>, vector<1x8x32xf32>
    %7 = vector.shape_cast %6 : vector<1x8x32xf32> to vector<8x32xf32>
    %c0_8 = arith.constant 0 : index
    %c0_9 = arith.constant 0 : index
    %c0_10 = arith.constant 0 : index
    %8 = vector.load %arg6[%c0_8, %c0_9, %c0_10] : memref<1x1x32xf32, #tpu.memory_space<vmem>>, vector<1x1x32xf32>
    %9 = vector.shape_cast %8 : vector<1x1x32xf32> to vector<1x32xf32>
    %c0_11 = arith.constant 0 : index
    %c0_12 = arith.constant 0 : index
    %c0_13 = arith.constant 0 : index
    %10 = vector.load %arg7[%c0_11, %c0_12, %c0_13] : memref<1x1x32xf32, #tpu.memory_space<vmem>>, vector<1x1x32xf32>
    %11 = vector.shape_cast %10 : vector<1x1x32xf32> to vector<1x32xf32>
    %c0_14 = arith.constant 0 : index
    %c0_15 = arith.constant 0 : index
    %c0_16 = arith.constant 0 : index
    %12 = vector.load %arg8[%c0_14, %c0_15, %c0_16] : memref<1x1x16xf32, #tpu.memory_space<vmem>>, vector<1x1x16xf32>
    %13 = vector.shape_cast %12 : vector<1x1x16xf32> to vector<1x16xf32>
    %c0_17 = arith.constant 0 : index
    %c0_18 = arith.constant 0 : index
    %c0_19 = arith.constant 0 : index
    %14 = vector.load %arg9[%c0_17, %c0_18, %c0_19] : memref<1x1x16xf32, #tpu.memory_space<vmem>>, vector<1x1x16xf32>
    %15 = vector.shape_cast %14 : vector<1x1x16xf32> to vector<1x16xf32>
    %cst = arith.constant dense<0.000000e+00> : vector<64xf32>
    %16 = vector.multi_reduction <add>, %3, %cst [1] : vector<64x32xf32> to vector<64xf32>
    %17 = vector.shape_cast %16 : vector<64xf32> to vector<64x1xf32>
    %cst_20 = arith.constant dense<0.000000e+00> : vector<64xf32>
    %18 = vector.multi_reduction <add>, %5, %cst_20 [1] : vector<64x16xf32> to vector<64xf32>
    %19 = vector.shape_cast %18 : vector<64xf32> to vector<64x1xf32>
    %20 = arith.addf %17, %19 : vector<64x1xf32>
    %cst_21 = arith.constant 4.800000e+01 : f32
    %21 = vector.broadcast %cst_21 : f32 to vector<64x1xf32>
    %22 = arith.divf %20, %21 : vector<64x1xf32>
    %23 = vector.broadcast %22 : vector<64x1xf32> to vector<64x32xf32>
    %24 = arith.subf %3, %23 : vector<64x32xf32>
    %25 = vector.broadcast %22 : vector<64x1xf32> to vector<64x16xf32>
    %26 = arith.subf %5, %25 : vector<64x16xf32>
    %27 = arith.mulf %24, %24 : vector<64x32xf32>
    %cst_22 = arith.constant dense<0.000000e+00> : vector<64xf32>
    %28 = vector.multi_reduction <add>, %27, %cst_22 [1] : vector<64x32xf32> to vector<64xf32>
    %29 = vector.shape_cast %28 : vector<64xf32> to vector<64x1xf32>
    %30 = arith.mulf %26, %26 : vector<64x16xf32>
    %cst_23 = arith.constant dense<0.000000e+00> : vector<64xf32>
    %31 = vector.multi_reduction <add>, %30, %cst_23 [1] : vector<64x16xf32> to vector<64xf32>
    %32 = vector.shape_cast %31 : vector<64xf32> to vector<64x1xf32>
    %33 = arith.addf %29, %32 : vector<64x1xf32>
    %cst_24 = arith.constant 4.800000e+01 : f32
    %34 = vector.broadcast %cst_24 : f32 to vector<64x1xf32>
    %35 = arith.divf %33, %34 : vector<64x1xf32>
    %cst_25 = arith.constant 9.99999997E-7 : f32
    %36 = vector.broadcast %cst_25 : f32 to vector<64x1xf32>
    %37 = arith.addf %35, %36 : vector<64x1xf32>
    %38 = math.rsqrt %37 : vector<64x1xf32>
    %39 = vector.broadcast %38 : vector<64x1xf32> to vector<64x32xf32>
    %40 = arith.mulf %24, %39 : vector<64x32xf32>
    %41 = vector.broadcast %9 : vector<1x32xf32> to vector<64x32xf32>
    %42 = arith.mulf %40, %41 : vector<64x32xf32>
    %43 = vector.broadcast %11 : vector<1x32xf32> to vector<64x32xf32>
    %44 = arith.addf %42, %43 : vector<64x32xf32>
    %45 = vector.broadcast %38 : vector<64x1xf32> to vector<64x16xf32>
    %46 = arith.mulf %26, %45 : vector<64x16xf32>
    %47 = vector.broadcast %13 : vector<1x16xf32> to vector<64x16xf32>
    %48 = arith.mulf %46, %47 : vector<64x16xf32>
    %49 = vector.broadcast %15 : vector<1x16xf32> to vector<64x16xf32>
    %50 = arith.addf %48, %49 : vector<64x16xf32>
    %c0_26 = arith.constant 0 : index
    %c0_27 = arith.constant 0 : index
    %c0_28 = arith.constant 0 : index
    %51 = vector.load %arg10[%c0_26, %c0_27, %c0_28] : memref<1x1x32xf32, #tpu.memory_space<vmem>>, vector<1x1x32xf32>
    %52 = vector.shape_cast %51 : vector<1x1x32xf32> to vector<1x32xf32>
    %c0_29 = arith.constant 0 : index
    %c0_30 = arith.constant 0 : index
    %c0_31 = arith.constant 0 : index
    %53 = vector.load %arg11[%c0_29, %c0_30, %c0_31] : memref<1x1x32xf32, #tpu.memory_space<vmem>>, vector<1x1x32xf32>
    %54 = vector.shape_cast %53 : vector<1x1x32xf32> to vector<1x32xf32>
    %cst_32 = arith.constant dense<0.000000e+00> : vector<8xf32>
    %55 = vector.multi_reduction <add>, %7, %cst_32 [1] : vector<8x32xf32> to vector<8xf32>
    %56 = vector.shape_cast %55 : vector<8xf32> to vector<8x1xf32>
    %cst_33 = arith.constant 3.200000e+01 : f32
    %57 = vector.broadcast %cst_33 : f32 to vector<8x1xf32>
    %58 = arith.divf %56, %57 : vector<8x1xf32>
    %59 = vector.broadcast %58 : vector<8x1xf32> to vector<8x32xf32>
    %60 = arith.subf %7, %59 : vector<8x32xf32>
    %61 = arith.mulf %60, %60 : vector<8x32xf32>
    %cst_34 = arith.constant dense<0.000000e+00> : vector<8xf32>
    %62 = vector.multi_reduction <add>, %61, %cst_34 [1] : vector<8x32xf32> to vector<8xf32>
    %63 = vector.shape_cast %62 : vector<8xf32> to vector<8x1xf32>
    %cst_35 = arith.constant 3.200000e+01 : f32
    %64 = vector.broadcast %cst_35 : f32 to vector<8x1xf32>
    %65 = arith.divf %63, %64 : vector<8x1xf32>
    %cst_36 = arith.constant 9.99999997E-7 : f32
    %66 = vector.broadcast %cst_36 : f32 to vector<8x1xf32>
    %67 = arith.addf %65, %66 : vector<8x1xf32>
    %68 = math.rsqrt %67 : vector<8x1xf32>
    %69 = vector.broadcast %68 : vector<8x1xf32> to vector<8x32xf32>
    %70 = arith.mulf %60, %69 : vector<8x32xf32>
    %71 = vector.broadcast %52 : vector<1x32xf32> to vector<8x32xf32>
    %72 = arith.mulf %70, %71 : vector<8x32xf32>
    %73 = vector.broadcast %54 : vector<1x32xf32> to vector<8x32xf32>
    %74 = arith.addf %72, %73 : vector<8x32xf32>
    %75 = arith.truncf %44 : vector<64x32xf32> to vector<64x32xbf16>
    %76 = vector.shape_cast %75 : vector<64x32xbf16> to vector<1x64x32xbf16>
    %77 = vector.shape_cast %76 : vector<1x64x32xbf16> to vector<1x64x32xbf16>
    %78 = vector.broadcast %77 : vector<1x64x32xbf16> to vector<4x64x32xbf16>
    %79 = arith.truncf %50 : vector<64x16xf32> to vector<64x16xbf16>
    %80 = vector.shape_cast %79 : vector<64x16xbf16> to vector<1x64x16xbf16>
    %81 = vector.shape_cast %80 : vector<1x64x16xbf16> to vector<1x64x16xbf16>
    %82 = vector.broadcast %81 : vector<1x64x16xbf16> to vector<4x64x16xbf16>
    %83 = arith.truncf %74 : vector<8x32xf32> to vector<8x32xbf16>
    %84 = vector.shape_cast %83 : vector<8x32xbf16> to vector<1x8x32xbf16>
    %85 = vector.shape_cast %84 : vector<1x8x32xbf16> to vector<1x8x32xbf16>
    %86 = vector.broadcast %85 : vector<1x8x32xbf16> to vector<4x8x32xbf16>
    %c0_37 = arith.constant 0 : index
    %c0_38 = arith.constant 0 : index
    %c0_39 = arith.constant 0 : index
    %c0_40 = arith.constant 0 : index
    %87 = vector.load %arg12[%c0_37, %c0_38, %c0_39, %c0_40] : memref<1x4x32x8xbf16, #tpu.memory_space<vmem>>, vector<1x4x32x8xbf16>
    %88 = vector.shape_cast %87 : vector<1x4x32x8xbf16> to vector<4x32x8xbf16>
    %cst_41 = arith.constant dense<0.000000e+00> : vector<4x64x8xf32>
    %89 = tpu.matmul %78, %88, %cst_41 {dimension_numbers = #tpu.dot_dimension_numbers<[2], [1], [1], [2], [0, 0, 0, 1, 1, 2], [0], [0]>} : vector<4x64x32xbf16>, vector<4x32x8xbf16>, vector<4x64x8xf32> -> vector<4x64x8xf32>
    %c0_42 = arith.constant 0 : index
    %c0_43 = arith.constant 0 : index
    %c0_44 = arith.constant 0 : index
    %c0_45 = arith.constant 0 : index
    %90 = vector.load %arg13[%c0_42, %c0_43, %c0_44, %c0_45] : memref<1x4x16x8xbf16, #tpu.memory_space<vmem>>, vector<1x4x16x8xbf16>
    %91 = vector.shape_cast %90 : vector<1x4x16x8xbf16> to vector<4x16x8xbf16>
    %cst_46 = arith.constant dense<0.000000e+00> : vector<4x64x8xf32>
    %92 = tpu.matmul %82, %91, %cst_46 {dimension_numbers = #tpu.dot_dimension_numbers<[2], [1], [1], [2], [0, 0, 0, 1, 1, 2], [0], [0]>} : vector<4x64x16xbf16>, vector<4x16x8xbf16>, vector<4x64x8xf32> -> vector<4x64x8xf32>
    %93 = arith.addf %89, %92 : vector<4x64x8xf32>
    %c0_47 = arith.constant 0 : index
    %c0_48 = arith.constant 0 : index
    %c0_49 = arith.constant 0 : index
    %c0_50 = arith.constant 0 : index
    %94 = vector.load %arg14[%c0_47, %c0_48, %c0_49, %c0_50] : memref<1x4x1x8xf32, #tpu.memory_space<vmem>>, vector<1x4x1x8xf32>
    %95 = vector.shape_cast %94 : vector<1x4x1x8xf32> to vector<4x1x8xf32>
    %96 = vector.broadcast %95 : vector<4x1x8xf32> to vector<4x64x8xf32>
    %97 = arith.addf %93, %96 : vector<4x64x8xf32>
    %c0_51 = arith.constant 0 : index
    %c0_52 = arith.constant 0 : index
    %c0_53 = arith.constant 0 : index
    %c0_54 = arith.constant 0 : index
    %98 = vector.load %arg15[%c0_51, %c0_52, %c0_53, %c0_54] : memref<1x4x32x8xbf16, #tpu.memory_space<vmem>>, vector<1x4x32x8xbf16>
    %99 = vector.shape_cast %98 : vector<1x4x32x8xbf16> to vector<4x32x8xbf16>
    %cst_55 = arith.constant dense<0.000000e+00> : vector<4x8x8xf32>
    %100 = tpu.matmul %86, %99, %cst_55 {dimension_numbers = #tpu.dot_dimension_numbers<[2], [1], [1], [2], [0, 0, 0, 1, 1, 2], [0], [0]>} : vector<4x8x32xbf16>, vector<4x32x8xbf16>, vector<4x8x8xf32> -> vector<4x8x8xf32>
    %c0_56 = arith.constant 0 : index
    %c0_57 = arith.constant 0 : index
    %c0_58 = arith.constant 0 : index
    %c0_59 = arith.constant 0 : index
    %101 = vector.load %arg16[%c0_56, %c0_57, %c0_58, %c0_59] : memref<1x4x1x8xf32, #tpu.memory_space<vmem>>, vector<1x4x1x8xf32>
    %102 = vector.shape_cast %101 : vector<1x4x1x8xf32> to vector<4x1x8xf32>
    %103 = vector.broadcast %102 : vector<4x1x8xf32> to vector<4x8x8xf32>
    %104 = arith.addf %100, %103 : vector<4x8x8xf32>
    %c0_60 = arith.constant 0 : index
    %c0_61 = arith.constant 0 : index
    %c0_62 = arith.constant 0 : index
    %c0_63 = arith.constant 0 : index
    %105 = vector.load %arg17[%c0_60, %c0_61, %c0_62, %c0_63] : memref<1x4x32x8xbf16, #tpu.memory_space<vmem>>, vector<1x4x32x8xbf16>
    %106 = vector.shape_cast %105 : vector<1x4x32x8xbf16> to vector<4x32x8xbf16>
    %cst_64 = arith.constant dense<0.000000e+00> : vector<4x8x8xf32>
    %107 = tpu.matmul %86, %106, %cst_64 {dimension_numbers = #tpu.dot_dimension_numbers<[2], [1], [1], [2], [0, 0, 0, 1, 1, 2], [0], [0]>} : vector<4x8x32xbf16>, vector<4x32x8xbf16>, vector<4x8x8xf32> -> vector<4x8x8xf32>
    %c0_65 = arith.constant 0 : index
    %c0_66 = arith.constant 0 : index
    %c0_67 = arith.constant 0 : index
    %c0_68 = arith.constant 0 : index
    %108 = vector.load %arg18[%c0_65, %c0_66, %c0_67, %c0_68] : memref<1x4x1x8xf32, #tpu.memory_space<vmem>>, vector<1x4x1x8xf32>
    %109 = vector.shape_cast %108 : vector<1x4x1x8xf32> to vector<4x1x8xf32>
    %110 = vector.broadcast %109 : vector<4x1x8xf32> to vector<4x8x8xf32>
    %111 = arith.addf %107, %110 : vector<4x8x8xf32>
    %112 = arith.truncf %97 : vector<4x64x8xf32> to vector<4x64x8xbf16>
    %113 = arith.truncf %104 : vector<4x8x8xf32> to vector<4x8x8xbf16>
    %cst_69 = arith.constant dense<0.000000e+00> : vector<4x64x8xf32>
    %114 = tpu.matmul %112, %113, %cst_69 {dimension_numbers = #tpu.dot_dimension_numbers<[2], [2], [1], [1], [0, 0, 0, 1, 1, 1], [0], [0]>} : vector<4x64x8xbf16>, vector<4x8x8xbf16>, vector<4x64x8xf32> -> vector<4x64x8xf32>
    %cst_70 = arith.constant 0.353553385 : f32
    %115 = vector.broadcast %cst_70 : f32 to vector<4x64x8xf32>
    %116 = arith.mulf %114, %115 : vector<4x64x8xf32>
    %cst_71 = arith.constant dense<0xFF800000> : vector<4x64xf32>
    %117 = vector.multi_reduction <maximumf>, %116, %cst_71 [2] : vector<4x64x8xf32> to vector<4x64xf32>
    %118 = vector.shape_cast %117 : vector<4x64xf32> to vector<4x64x1xf32>
    %119 = vector.broadcast %118 : vector<4x64x1xf32> to vector<4x64x8xf32>
    %120 = arith.subf %116, %119 : vector<4x64x8xf32>
    %121 = math.exp %120 : vector<4x64x8xf32>
    %cst_72 = arith.constant dense<0.000000e+00> : vector<4x64xf32>
    %122 = vector.multi_reduction <add>, %121, %cst_72 [2] : vector<4x64x8xf32> to vector<4x64xf32>
    %123 = vector.shape_cast %122 : vector<4x64xf32> to vector<4x64x1xf32>
    %124 = tpu.reciprocal %123 {approx = true} : vector<4x64x1xf32> -> vector<4x64x1xf32>
    %125 = vector.broadcast %124 : vector<4x64x1xf32> to vector<4x64x8xf32>
    %126 = arith.mulf %121, %125 : vector<4x64x8xf32>
    %127 = arith.truncf %126 : vector<4x64x8xf32> to vector<4x64x8xbf16>
    %128 = arith.truncf %111 : vector<4x8x8xf32> to vector<4x8x8xbf16>
    %cst_73 = arith.constant dense<0.000000e+00> : vector<4x64x8xf32>
    %129 = tpu.matmul %127, %128, %cst_73 {dimension_numbers = #tpu.dot_dimension_numbers<[2], [1], [1], [2], [0, 0, 0, 1, 1, 2], [0], [0]>} : vector<4x64x8xbf16>, vector<4x8x8xbf16>, vector<4x64x8xf32> -> vector<4x64x8xf32>
    %130 = arith.truncf %129 : vector<4x64x8xf32> to vector<4x64x8xbf16>
    %c0_74 = arith.constant 0 : index
    %c0_75 = arith.constant 0 : index
    %c0_76 = arith.constant 0 : index
    %c0_77 = arith.constant 0 : index
    %131 = vector.load %arg19[%c0_74, %c0_75, %c0_76, %c0_77] : memref<1x4x8x32xbf16, #tpu.memory_space<vmem>>, vector<1x4x8x32xbf16>
    %132 = vector.shape_cast %131 : vector<1x4x8x32xbf16> to vector<4x8x32xbf16>
    %cst_78 = arith.constant dense<0.000000e+00> : vector<4x64x32xf32>
    %133 = tpu.matmul %130, %132, %cst_78 {dimension_numbers = #tpu.dot_dimension_numbers<[2], [1], [1], [2], [0, 0, 0, 1, 1, 2], [0], [0]>} : vector<4x64x8xbf16>, vector<4x8x32xbf16>, vector<4x64x32xf32> -> vector<4x64x32xf32>
    %cst_79 = arith.constant dense<0.000000e+00> : vector<64x32xf32>
    %134 = vector.multi_reduction <add>, %133, %cst_79 [0] : vector<4x64x32xf32> to vector<64x32xf32>
    %c0_80 = arith.constant 0 : index
    %c0_81 = arith.constant 0 : index
    %c0_82 = arith.constant 0 : index
    %135 = vector.load %arg20[%c0_80, %c0_81, %c0_82] : memref<1x1x32xf32, #tpu.memory_space<vmem>>, vector<1x1x32xf32>
    %136 = vector.shape_cast %135 : vector<1x1x32xf32> to vector<1x32xf32>
    %137 = vector.broadcast %136 : vector<1x32xf32> to vector<64x32xf32>
    %138 = arith.addf %134, %137 : vector<64x32xf32>
    %139 = arith.addf %3, %138 : vector<64x32xf32>
    %c0_83 = arith.constant 0 : index
    %c0_84 = arith.constant 0 : index
    %c0_85 = arith.constant 0 : index
    %140 = vector.load %arg21[%c0_83, %c0_84, %c0_85] : memref<1x1x32xf32, #tpu.memory_space<vmem>>, vector<1x1x32xf32>
    %141 = vector.shape_cast %140 : vector<1x1x32xf32> to vector<1x32xf32>
    %c0_86 = arith.constant 0 : index
    %c0_87 = arith.constant 0 : index
    %c0_88 = arith.constant 0 : index
    %142 = vector.load %arg22[%c0_86, %c0_87, %c0_88] : memref<1x1x32xf32, #tpu.memory_space<vmem>>, vector<1x1x32xf32>
    %143 = vector.shape_cast %142 : vector<1x1x32xf32> to vector<1x32xf32>
    %cst_89 = arith.constant dense<0.000000e+00> : vector<64xf32>
    %144 = vector.multi_reduction <add>, %139, %cst_89 [1] : vector<64x32xf32> to vector<64xf32>
    %145 = vector.shape_cast %144 : vector<64xf32> to vector<64x1xf32>
    %cst_90 = arith.constant 3.200000e+01 : f32
    %146 = vector.broadcast %cst_90 : f32 to vector<64x1xf32>
    %147 = arith.divf %145, %146 : vector<64x1xf32>
    %148 = vector.broadcast %147 : vector<64x1xf32> to vector<64x32xf32>
    %149 = arith.subf %139, %148 : vector<64x32xf32>
    %150 = arith.mulf %149, %149 : vector<64x32xf32>
    %cst_91 = arith.constant dense<0.000000e+00> : vector<64xf32>
    %151 = vector.multi_reduction <add>, %150, %cst_91 [1] : vector<64x32xf32> to vector<64xf32>
    %152 = vector.shape_cast %151 : vector<64xf32> to vector<64x1xf32>
    %cst_92 = arith.constant 3.200000e+01 : f32
    %153 = vector.broadcast %cst_92 : f32 to vector<64x1xf32>
    %154 = arith.divf %152, %153 : vector<64x1xf32>
    %cst_93 = arith.constant 9.99999997E-7 : f32
    %155 = vector.broadcast %cst_93 : f32 to vector<64x1xf32>
    %156 = arith.addf %154, %155 : vector<64x1xf32>
    %157 = math.rsqrt %156 : vector<64x1xf32>
    %158 = vector.broadcast %157 : vector<64x1xf32> to vector<64x32xf32>
    %159 = arith.mulf %149, %158 : vector<64x32xf32>
    %160 = vector.broadcast %141 : vector<1x32xf32> to vector<64x32xf32>
    %161 = arith.mulf %159, %160 : vector<64x32xf32>
    %162 = vector.broadcast %143 : vector<1x32xf32> to vector<64x32xf32>
    %163 = arith.addf %161, %162 : vector<64x32xf32>
    %164 = arith.truncf %163 : vector<64x32xf32> to vector<64x32xbf16>
    %c0_94 = arith.constant 0 : index
    %c0_95 = arith.constant 0 : index
    %c0_96 = arith.constant 0 : index
    %165 = vector.load %arg23[%c0_94, %c0_95, %c0_96] : memref<1x32x64xbf16, #tpu.memory_space<vmem>>, vector<1x32x64xbf16>
    %166 = vector.shape_cast %165 : vector<1x32x64xbf16> to vector<32x64xbf16>
    %cst_97 = arith.constant dense<0.000000e+00> : vector<64x64xf32>
    %167 = tpu.matmul %164, %166, %cst_97 {dimension_numbers = #tpu.dot_dimension_numbers<[1], [0], [0], [1], [0, 0, 1, 1], [], []>} : vector<64x32xbf16>, vector<32x64xbf16>, vector<64x64xf32> -> vector<64x64xf32>
    %c0_98 = arith.constant 0 : index
    %c0_99 = arith.constant 0 : index
    %c0_100 = arith.constant 0 : index
    %168 = vector.load %arg24[%c0_98, %c0_99, %c0_100] : memref<1x1x64xf32, #tpu.memory_space<vmem>>, vector<1x1x64xf32>
    %169 = vector.shape_cast %168 : vector<1x1x64xf32> to vector<1x64xf32>
    %170 = vector.broadcast %169 : vector<1x64xf32> to vector<64x64xf32>
    %171 = arith.addf %167, %170 : vector<64x64xf32>
    %172 = arith.negf %171 : vector<64x64xf32>
    %173 = math.exp %172 : vector<64x64xf32>
    %cst_101 = arith.constant 1.000000e+00 : f32
    %174 = vector.broadcast %cst_101 : f32 to vector<64x64xf32>
    %175 = arith.addf %174, %173 : vector<64x64xf32>
    %176 = arith.divf %174, %175 : vector<64x64xf32>
    %177 = arith.mulf %171, %176 : vector<64x64xf32>
    %178 = arith.truncf %177 : vector<64x64xf32> to vector<64x64xbf16>
    %c0_102 = arith.constant 0 : index
    %c0_103 = arith.constant 0 : index
    %c0_104 = arith.constant 0 : index
    %179 = vector.load %arg25[%c0_102, %c0_103, %c0_104] : memref<1x64x32xbf16, #tpu.memory_space<vmem>>, vector<1x64x32xbf16>
    %180 = vector.shape_cast %179 : vector<1x64x32xbf16> to vector<64x32xbf16>
    %cst_105 = arith.constant dense<0.000000e+00> : vector<64x32xf32>
    %181 = tpu.matmul %178, %180, %cst_105 {dimension_numbers = #tpu.dot_dimension_numbers<[1], [0], [0], [1], [0, 0, 1, 1], [], []>} : vector<64x64xbf16>, vector<64x32xbf16>, vector<64x32xf32> -> vector<64x32xf32>
    %c0_106 = arith.constant 0 : index
    %c0_107 = arith.constant 0 : index
    %c0_108 = arith.constant 0 : index
    %182 = vector.load %arg26[%c0_106, %c0_107, %c0_108] : memref<1x1x32xf32, #tpu.memory_space<vmem>>, vector<1x1x32xf32>
    %183 = vector.shape_cast %182 : vector<1x1x32xf32> to vector<1x32xf32>
    %184 = vector.broadcast %183 : vector<1x32xf32> to vector<64x32xf32>
    %185 = arith.addf %181, %184 : vector<64x32xf32>
    %186 = arith.addf %139, %185 : vector<64x32xf32>
    %c0_109 = arith.constant 0 : index
    %c0_110 = arith.constant 0 : index
    %187 = vector.load %arg36[%c0_109, %c0_110] : memref<64x32xf32, #tpu.memory_space<vmem>>, vector<64x32xf32>
    tpu.vector_store %arg36[%c0_109, %c0_110], %186 {strides = array<i32>} : memref<64x32xf32, #tpu.memory_space<vmem>>, vector<64x32xf32>,
    %c1_i32 = arith.constant 1 : i32
    %188 = arith.cmpi eq, %arg2, %c1_i32 : i32
    %189 = arith.extui %188 : i1 to i32
    %c0_i32_111 = arith.constant 0 : i32
    %190 = arith.cmpi ne, %189, %c0_i32_111 : i32
    scf.if %190 {
      %c0_112 = arith.constant 0 : index
      %c0_113 = arith.constant 0 : index
      %191 = vector.load %arg27[%c0_112, %c0_113] : memref<1x32xf32, #tpu.memory_space<vmem>>, vector<1x32xf32>
      %c0_114 = arith.constant 0 : index
      %c0_115 = arith.constant 0 : index
      %192 = vector.load %arg28[%c0_114, %c0_115] : memref<1x32xf32, #tpu.memory_space<vmem>>, vector<1x32xf32>
      %cst_116 = arith.constant dense<0.000000e+00> : vector<64xf32>
      %193 = vector.multi_reduction <add>, %186, %cst_116 [1] : vector<64x32xf32> to vector<64xf32>
      %194 = vector.shape_cast %193 : vector<64xf32> to vector<64x1xf32>
      %cst_117 = arith.constant 3.200000e+01 : f32
      %195 = vector.broadcast %cst_117 : f32 to vector<64x1xf32>
      %196 = arith.divf %194, %195 : vector<64x1xf32>
      %197 = vector.broadcast %196 : vector<64x1xf32> to vector<64x32xf32>
      %198 = arith.subf %186, %197 : vector<64x32xf32>
      %199 = arith.mulf %198, %198 : vector<64x32xf32>
      %cst_118 = arith.constant dense<0.000000e+00> : vector<64xf32>
      %200 = vector.multi_reduction <add>, %199, %cst_118 [1] : vector<64x32xf32> to vector<64xf32>
      %201 = vector.shape_cast %200 : vector<64xf32> to vector<64x1xf32>
      %cst_119 = arith.constant 3.200000e+01 : f32
      %202 = vector.broadcast %cst_119 : f32 to vector<64x1xf32>
      %203 = arith.divf %201, %202 : vector<64x1xf32>
      %cst_120 = arith.constant 9.99999997E-7 : f32
      %204 = vector.broadcast %cst_120 : f32 to vector<64x1xf32>
      %205 = arith.addf %203, %204 : vector<64x1xf32>
      %206 = math.rsqrt %205 : vector<64x1xf32>
      %207 = vector.broadcast %206 : vector<64x1xf32> to vector<64x32xf32>
      %208 = arith.mulf %198, %207 : vector<64x32xf32>
      %209 = vector.broadcast %191 : vector<1x32xf32> to vector<64x32xf32>
      %210 = arith.mulf %208, %209 : vector<64x32xf32>
      %211 = vector.broadcast %192 : vector<1x32xf32> to vector<64x32xf32>
      %212 = arith.addf %210, %211 : vector<64x32xf32>
      %213 = arith.truncf %212 : vector<64x32xf32> to vector<64x32xbf16>
      %c0_121 = arith.constant 0 : index
      %c0_122 = arith.constant 0 : index
      %214 = vector.load %arg29[%c0_121, %c0_122] : memref<32x32xbf16, #tpu.memory_space<vmem>>, vector<32x32xbf16>
      %cst_123 = arith.constant dense<0.000000e+00> : vector<64x32xf32>
      %215 = tpu.matmul %213, %214, %cst_123 {dimension_numbers = #tpu.dot_dimension_numbers<[1], [0], [0], [1], [0, 0, 1, 1], [], []>} : vector<64x32xbf16>, vector<32x32xbf16>, vector<64x32xf32> -> vector<64x32xf32>
      %c0_124 = arith.constant 0 : index
      %c0_125 = arith.constant 0 : index
      %216 = vector.load %arg30[%c0_124, %c0_125] : memref<1x32xf32, #tpu.memory_space<vmem>>, vector<1x32xf32>
      %217 = vector.broadcast %216 : vector<1x32xf32> to vector<64x32xf32>
      %218 = arith.addf %215, %217 : vector<64x32xf32>
      %c0_126 = arith.constant 0 : index
      %c0_127 = arith.constant 0 : index
      %219 = vector.load %arg31[%c0_126, %c0_127] : memref<1x32xf32, #tpu.memory_space<vmem>>, vector<1x32xf32>
      %c0_128 = arith.constant 0 : index
      %c0_129 = arith.constant 0 : index
      %220 = vector.load %arg32[%c0_128, %c0_129] : memref<1x32xf32, #tpu.memory_space<vmem>>, vector<1x32xf32>
      %cst_130 = arith.constant dense<0.000000e+00> : vector<64xf32>
      %221 = vector.multi_reduction <add>, %218, %cst_130 [1] : vector<64x32xf32> to vector<64xf32>
      %222 = vector.shape_cast %221 : vector<64xf32> to vector<64x1xf32>
      %cst_131 = arith.constant 3.200000e+01 : f32
      %223 = vector.broadcast %cst_131 : f32 to vector<64x1xf32>
      %224 = arith.divf %222, %223 : vector<64x1xf32>
      %225 = vector.broadcast %224 : vector<64x1xf32> to vector<64x32xf32>
      %226 = arith.subf %218, %225 : vector<64x32xf32>
      %227 = arith.mulf %226, %226 : vector<64x32xf32>
      %cst_132 = arith.constant dense<0.000000e+00> : vector<64xf32>
      %228 = vector.multi_reduction <add>, %227, %cst_132 [1] : vector<64x32xf32> to vector<64xf32>
      %229 = vector.shape_cast %228 : vector<64xf32> to vector<64x1xf32>
      %cst_133 = arith.constant 3.200000e+01 : f32
      %230 = vector.broadcast %cst_133 : f32 to vector<64x1xf32>
      %231 = arith.divf %229, %230 : vector<64x1xf32>
      %cst_134 = arith.constant 9.99999997E-7 : f32
      %232 = vector.broadcast %cst_134 : f32 to vector<64x1xf32>
      %233 = arith.addf %231, %232 : vector<64x1xf32>
      %234 = math.rsqrt %233 : vector<64x1xf32>
      %235 = vector.broadcast %234 : vector<64x1xf32> to vector<64x32xf32>
      %236 = arith.mulf %226, %235 : vector<64x32xf32>
      %237 = vector.broadcast %219 : vector<1x32xf32> to vector<64x32xf32>
      %238 = arith.mulf %236, %237 : vector<64x32xf32>
      %239 = vector.broadcast %220 : vector<1x32xf32> to vector<64x32xf32>
      %240 = arith.addf %238, %239 : vector<64x32xf32>
      %c0_135 = arith.constant 0 : index
      %c0_136 = arith.constant 0 : index
      %241 = vector.load %arg33[%c0_135, %c0_136] : memref<1x32xbf16, #tpu.memory_space<vmem>>, vector<1x32xbf16>
      %242 = arith.truncf %240 : vector<64x32xf32> to vector<64x32xbf16>
      %cst_137 = arith.constant dense<0.000000e+00> : vector<1x64xf32>
      %243 = tpu.matmul %241, %242, %cst_137 {dimension_numbers = #tpu.dot_dimension_numbers<[1], [1], [0], [0], [0, 0, 1, 0], [], []>} : vector<1x32xbf16>, vector<64x32xbf16>, vector<1x64xf32> -> vector<1x64xf32>
      %c0_138 = arith.constant 0 : index
      %c0_139 = arith.constant 0 : index
      %244 = vector.load %arg34[%c0_138, %c0_139] : memref<1x1xf32, #tpu.memory_space<vmem>>, vector<1x1xf32>
      %245 = vector.broadcast %244 : vector<1x1xf32> to vector<1x64xf32>
      %246 = arith.addf %243, %245 : vector<1x64xf32>
      %c0_140 = arith.constant 0 : index
      %c0_141 = arith.constant 0 : index
      %c0_142 = arith.constant 0 : index
      %247 = vector.load %arg35[%c0_140, %c0_141, %c0_142] : memref<1x1x64xf32, #tpu.memory_space<vmem>>, vector<1x1x64xf32>
      %248 = vector.shape_cast %247 : vector<1x1x64xf32> to vector<1x64xf32>
      %249 = vector.shape_cast %246 : vector<1x64xf32> to vector<1x1x64xf32>
      tpu.vector_store %arg35[%c0_140, %c0_141, %c0_142], %249 {strides = array<i32>} : memref<1x1x64xf32, #tpu.memory_space<vmem>>, vector<1x1x64xf32>,
    } else {
    }
    return
  }
  func.func @transform_0(%arg0: i32, %arg1: i32, %arg2: i32) -> (i32, i32, i32) {
    %c0_i32 = arith.constant 0 : i32
    %c0_i32_0 = arith.constant 0 : i32
    return %arg0, %arg1, %c0_i32 : i32, i32, i32
  }
  func.func @transform_1(%arg0: i32, %arg1: i32, %arg2: i32) -> (i32, i32, i32) {
    %c0_i32 = arith.constant 0 : i32
    %c0_i32_0 = arith.constant 0 : i32
    return %arg0, %arg1, %c0_i32 : i32, i32, i32
  }
  func.func @transform_2(%arg0: i32, %arg1: i32, %arg2: i32) -> (i32, i32, i32) {
    %c0_i32 = arith.constant 0 : i32
    %c0_i32_0 = arith.constant 0 : i32
    %c0_i32_1 = arith.constant 0 : i32
    return %arg0, %c0_i32, %c0_i32_0 : i32, i32, i32
  }
  func.func @transform_3(%arg0: i32, %arg1: i32, %arg2: i32) -> (i32, i32, i32) {
    %c0_i32 = arith.constant 0 : i32
    %c0_i32_0 = arith.constant 0 : i32
    %c0_i32_1 = arith.constant 0 : i32
    return %arg2, %c0_i32, %c0_i32_0 : i32, i32, i32
  }
  func.func @transform_4(%arg0: i32, %arg1: i32, %arg2: i32) -> (i32, i32, i32) {
    %c0_i32 = arith.constant 0 : i32
    %c0_i32_0 = arith.constant 0 : i32
    %c0_i32_1 = arith.constant 0 : i32
    return %arg2, %c0_i32, %c0_i32_0 : i32, i32, i32
  }
  func.func @transform_5(%arg0: i32, %arg1: i32, %arg2: i32) -> (i32, i32, i32) {
    %c0_i32 = arith.constant 0 : i32
    %c0_i32_0 = arith.constant 0 : i32
    %c0_i32_1 = arith.constant 0 : i32
    return %arg2, %c0_i32, %c0_i32_0 : i32, i32, i32
  }
  func.func @transform_6(%arg0: i32, %arg1: i32, %arg2: i32) -> (i32, i32, i32) {
    %c0_i32 = arith.constant 0 : i32
    %c0_i32_0 = arith.constant 0 : i32
    %c0_i32_1 = arith.constant 0 : i32
    return %arg2, %c0_i32, %c0_i32_0 : i32, i32, i32
  }
  func.func @transform_7(%arg0: i32, %arg1: i32, %arg2: i32) -> (i32, i32, i32) {
    %c0_i32 = arith.constant 0 : i32
    %c0_i32_0 = arith.constant 0 : i32
    %c0_i32_1 = arith.constant 0 : i32
    return %arg2, %c0_i32, %c0_i32_0 : i32, i32, i32
  }
  func.func @transform_8(%arg0: i32, %arg1: i32, %arg2: i32) -> (i32, i32, i32) {
    %c0_i32 = arith.constant 0 : i32
    %c0_i32_0 = arith.constant 0 : i32
    %c0_i32_1 = arith.constant 0 : i32
    return %arg2, %c0_i32, %c0_i32_0 : i32, i32, i32
  }
  func.func @transform_9(%arg0: i32, %arg1: i32, %arg2: i32) -> (i32, i32, i32, i32) {
    %c0_i32 = arith.constant 0 : i32
    %c0_i32_0 = arith.constant 0 : i32
    %c0_i32_1 = arith.constant 0 : i32
    %c0_i32_2 = arith.constant 0 : i32
    return %arg2, %c0_i32, %c0_i32_0, %c0_i32_1 : i32, i32, i32, i32
  }
  func.func @transform_10(%arg0: i32, %arg1: i32, %arg2: i32) -> (i32, i32, i32, i32) {
    %c0_i32 = arith.constant 0 : i32
    %c0_i32_0 = arith.constant 0 : i32
    %c0_i32_1 = arith.constant 0 : i32
    %c0_i32_2 = arith.constant 0 : i32
    return %arg2, %c0_i32, %c0_i32_0, %c0_i32_1 : i32, i32, i32, i32
  }
  func.func @transform_11(%arg0: i32, %arg1: i32, %arg2: i32) -> (i32, i32, i32, i32) {
    %c0_i32 = arith.constant 0 : i32
    %c0_i32_0 = arith.constant 0 : i32
    %c0_i32_1 = arith.constant 0 : i32
    %c0_i32_2 = arith.constant 0 : i32
    return %arg2, %c0_i32, %c0_i32_0, %c0_i32_1 : i32, i32, i32, i32
  }
  func.func @transform_12(%arg0: i32, %arg1: i32, %arg2: i32) -> (i32, i32, i32, i32) {
    %c0_i32 = arith.constant 0 : i32
    %c0_i32_0 = arith.constant 0 : i32
    %c0_i32_1 = arith.constant 0 : i32
    %c0_i32_2 = arith.constant 0 : i32
    return %arg2, %c0_i32, %c0_i32_0, %c0_i32_1 : i32, i32, i32, i32
  }
  func.func @transform_13(%arg0: i32, %arg1: i32, %arg2: i32) -> (i32, i32, i32, i32) {
    %c0_i32 = arith.constant 0 : i32
    %c0_i32_0 = arith.constant 0 : i32
    %c0_i32_1 = arith.constant 0 : i32
    %c0_i32_2 = arith.constant 0 : i32
    return %arg2, %c0_i32, %c0_i32_0, %c0_i32_1 : i32, i32, i32, i32
  }
  func.func @transform_14(%arg0: i32, %arg1: i32, %arg2: i32) -> (i32, i32, i32, i32) {
    %c0_i32 = arith.constant 0 : i32
    %c0_i32_0 = arith.constant 0 : i32
    %c0_i32_1 = arith.constant 0 : i32
    %c0_i32_2 = arith.constant 0 : i32
    return %arg2, %c0_i32, %c0_i32_0, %c0_i32_1 : i32, i32, i32, i32
  }
  func.func @transform_15(%arg0: i32, %arg1: i32, %arg2: i32) -> (i32, i32, i32, i32) {
    %c0_i32 = arith.constant 0 : i32
    %c0_i32_0 = arith.constant 0 : i32
    %c0_i32_1 = arith.constant 0 : i32
    %c0_i32_2 = arith.constant 0 : i32
    return %arg2, %c0_i32, %c0_i32_0, %c0_i32_1 : i32, i32, i32, i32
  }
  func.func @transform_16(%arg0: i32, %arg1: i32, %arg2: i32) -> (i32, i32, i32, i32) {
    %c0_i32 = arith.constant 0 : i32
    %c0_i32_0 = arith.constant 0 : i32
    %c0_i32_1 = arith.constant 0 : i32
    %c0_i32_2 = arith.constant 0 : i32
    return %arg2, %c0_i32, %c0_i32_0, %c0_i32_1 : i32, i32, i32, i32
  }
  func.func @transform_17(%arg0: i32, %arg1: i32, %arg2: i32) -> (i32, i32, i32) {
    %c0_i32 = arith.constant 0 : i32
    %c0_i32_0 = arith.constant 0 : i32
    %c0_i32_1 = arith.constant 0 : i32
    return %arg2, %c0_i32, %c0_i32_0 : i32, i32, i32
  }
  func.func @transform_18(%arg0: i32, %arg1: i32, %arg2: i32) -> (i32, i32, i32) {
    %c0_i32 = arith.constant 0 : i32
    %c0_i32_0 = arith.constant 0 : i32
    %c0_i32_1 = arith.constant 0 : i32
    return %arg2, %c0_i32, %c0_i32_0 : i32, i32, i32
  }
  func.func @transform_19(%arg0: i32, %arg1: i32, %arg2: i32) -> (i32, i32, i32) {
    %c0_i32 = arith.constant 0 : i32
    %c0_i32_0 = arith.constant 0 : i32
    %c0_i32_1 = arith.constant 0 : i32
    return %arg2, %c0_i32, %c0_i32_0 : i32, i32, i32
  }
  func.func @transform_20(%arg0: i32, %arg1: i32, %arg2: i32) -> (i32, i32, i32) {
    %c0_i32 = arith.constant 0 : i32
    %c0_i32_0 = arith.constant 0 : i32
    %c0_i32_1 = arith.constant 0 : i32
    return %arg2, %c0_i32, %c0_i32_0 : i32, i32, i32
  }
  func.func @transform_21(%arg0: i32, %arg1: i32, %arg2: i32) -> (i32, i32, i32) {
    %c0_i32 = arith.constant 0 : i32
    %c0_i32_0 = arith.constant 0 : i32
    %c0_i32_1 = arith.constant 0 : i32
    return %arg2, %c0_i32, %c0_i32_0 : i32, i32, i32
  }
  func.func @transform_22(%arg0: i32, %arg1: i32, %arg2: i32) -> (i32, i32, i32) {
    %c0_i32 = arith.constant 0 : i32
    %c0_i32_0 = arith.constant 0 : i32
    %c0_i32_1 = arith.constant 0 : i32
    return %arg2, %c0_i32, %c0_i32_0 : i32, i32, i32
  }
  func.func @transform_23(%arg0: i32, %arg1: i32, %arg2: i32) -> (i32, i32, i32) {
    %c0_i32 = arith.constant 0 : i32
    %c0_i32_0 = arith.constant 0 : i32
    %c0_i32_1 = arith.constant 0 : i32
    return %arg2, %c0_i32, %c0_i32_0 : i32, i32, i32
  }
  func.func @transform_24(%arg0: i32, %arg1: i32, %arg2: i32) -> (i32, i32) {
    %c0_i32 = arith.constant 0 : i32
    %c0_i32_0 = arith.constant 0 : i32
    %c0_i32_1 = arith.constant 0 : i32
    return %c0_i32, %c0_i32_0 : i32, i32
  }
  func.func @transform_25(%arg0: i32, %arg1: i32, %arg2: i32) -> (i32, i32) {
    %c0_i32 = arith.constant 0 : i32
    %c0_i32_0 = arith.constant 0 : i32
    %c0_i32_1 = arith.constant 0 : i32
    return %c0_i32, %c0_i32_0 : i32, i32
  }
  func.func @transform_26(%arg0: i32, %arg1: i32, %arg2: i32) -> (i32, i32) {
    %c0_i32 = arith.constant 0 : i32
    %c0_i32_0 = arith.constant 0 : i32
    %c0_i32_1 = arith.constant 0 : i32
    return %c0_i32, %c0_i32_0 : i32, i32
  }
  func.func @transform_27(%arg0: i32, %arg1: i32, %arg2: i32) -> (i32, i32) {
    %c0_i32 = arith.constant 0 : i32
    %c0_i32_0 = arith.constant 0 : i32
    %c0_i32_1 = arith.constant 0 : i32
    return %c0_i32, %c0_i32_0 : i32, i32
  }
  func.func @transform_28(%arg0: i32, %arg1: i32, %arg2: i32) -> (i32, i32) {
    %c0_i32 = arith.constant 0 : i32
    %c0_i32_0 = arith.constant 0 : i32
    %c0_i32_1 = arith.constant 0 : i32
    return %c0_i32, %c0_i32_0 : i32, i32
  }
  func.func @transform_29(%arg0: i32, %arg1: i32, %arg2: i32) -> (i32, i32) {
    %c0_i32 = arith.constant 0 : i32
    %c0_i32_0 = arith.constant 0 : i32
    %c0_i32_1 = arith.constant 0 : i32
    return %c0_i32, %c0_i32_0 : i32, i32
  }
  func.func @transform_30(%arg0: i32, %arg1: i32, %arg2: i32) -> (i32, i32) {
    %c0_i32 = arith.constant 0 : i32
    %c0_i32_0 = arith.constant 0 : i32
    %c0_i32_1 = arith.constant 0 : i32
    return %c0_i32, %c0_i32_0 : i32, i32
  }
  func.func @transform_31(%arg0: i32, %arg1: i32, %arg2: i32) -> (i32, i32) {
    %c0_i32 = arith.constant 0 : i32
    %c0_i32_0 = arith.constant 0 : i32
    %c0_i32_1 = arith.constant 0 : i32
    return %c0_i32, %c0_i32_0 : i32, i32
  }
  func.func @transform_32(%arg0: i32, %arg1: i32, %arg2: i32) -> (i32, i32, i32) {
    %c0_i32 = arith.constant 0 : i32
    %c0_i32_0 = arith.constant 0 : i32
    return %arg0, %c0_i32, %arg1 : i32, i32, i32
  }
}

</mosaic_0001>

<llo_original>
// kernel: tpu_custom_call.1
$region0: #{tpu_custom_call.1}
  #allocation0 [shape = 'u32[]', space=smem, size = 0x4, offset = 0x4, fixed_abs, tag = 'smem constant byte address 0x4 - core index']
  #allocation1 [shape = 'u32[72,128]{1,0:T(1,128)}', space=vmem, size = 0x9000, scoped, tag = 'internal scratch']
  #allocation2 [shape = 'f32[64,32]{1,0:T(8,128)}', space=vmem, size = 0x8000, scoped, tag = 'scratch operand']
  #allocation3 [shape = 'f32[1,1]{1,0:T(1,128)S(1)}', space=vmem, size = 0x200, scoped, tag = 'scoped memory for tpu_custom_call.1']
  %s0 = inlined_call_operand.smem [shape: u32[33], index: -1, kind: input, shape index: {}]
  %s1 = sld [smem:[%s0]]
  %s2 = scalar_lea.smem %s0, 1
  %s3 = sld [smem:[%s2]]
  %s4 = scalar_lea.smem %s0, 2
  %s5 = sld [smem:[%s4]]
  %s6 = scalar_lea.smem %s0, 3
  %s7 = sld [smem:[%s6]]
  %s8 = scalar_lea.smem %s0, 4
  %s9 = sld [smem:[%s8]]
  %s10 = scalar_lea.smem %s0, 5
  %s11 = sld [smem:[%s10]]
  %s12 = scalar_lea.smem %s0, 6
  %s13 = sld [smem:[%s12]]
  %s14 = scalar_lea.smem %s0, 7
  %s15 = sld [smem:[%s14]]
  %s16 = scalar_lea.smem %s0, 8
  %s17 = sld [smem:[%s16]]
  %s18 = scalar_lea.smem %s0, 9
  %s19 = sld [smem:[%s18]]
  %s20 = scalar_lea.smem %s0, 10
  %s21 = sld [smem:[%s20]]
  %s22 = scalar_lea.smem %s0, 11
  %s23 = sld [smem:[%s22]]
  %s24 = scalar_lea.smem %s0, 12
  %s25 = sld [smem:[%s24]]
  %s26 = scalar_lea.smem %s0, 13
  %s27 = sld [smem:[%s26]]
  %s28 = scalar_lea.smem %s0, 14
  %s29 = sld [smem:[%s28]]
  %s30 = scalar_lea.smem %s0, 15
  %s31 = sld [smem:[%s30]]
  %s32 = scalar_lea.smem %s0, 16
  %s33 = sld [smem:[%s32]]
  %s34 = scalar_lea.smem %s0, 17
  %s35 = sld [smem:[%s34]]
  %s36 = scalar_lea.smem %s0, 18
  %s37 = sld [smem:[%s36]]
  %s38 = scalar_lea.smem %s0, 19
  %s39 = sld [smem:[%s38]]
  %s40 = scalar_lea.smem %s0, 20
  %s41 = sld [smem:[%s40]]
  %s42 = scalar_lea.smem %s0, 21
  %s43 = sld [smem:[%s42]]
  %s44 = scalar_lea.smem %s0, 22
  %s45 = sld [smem:[%s44]]
  %s46 = scalar_lea.smem %s0, 23
  %s47 = sld [smem:[%s46]]
  %s48 = scalar_lea.smem %s0, 24
  %s49 = sld [smem:[%s48]]
  %s50 = scalar_lea.smem %s0, 25
  %s51 = sld [smem:[%s50]]
  %s52 = scalar_lea.smem %s0, 26
  %s53 = sld [smem:[%s52]]
  %s54 = scalar_lea.smem %s0, 27
  %s55 = sld [smem:[%s54]]
  %s56 = scalar_lea.smem %s0, 28
  %s57 = sld [smem:[%s56]]
  %s58 = scalar_lea.smem %s0, 29
  %s59 = sld [smem:[%s58]]
  %s60 = scalar_lea.smem %s0, 30
  %s61 = sld [smem:[%s60]]
  %s62 = scalar_lea.smem %s0, 31
  %s63 = sld [smem:[%s62]]
  %s64 = scalar_lea.smem %s0, 32
  %s65 = sld [smem:[%s64]]
  %s66 = sld [smem:[#allocation0]]
  $region169: #{tpu_custom_call.1} parent=0
    _
  %s68 = ssub.s32 1, %s66
  %s69 = scalar_select 0, %s68, %s66
  %v70 = vstv %s63
  %71 = vst [vmem:[#allocation3] sm:$0x1] %v70
  $region1: #{tpu_custom_call.1} parent=0
    #allocation4 [shape = 'u8[1024]{0}', space=vmem, size = 0x400, scoped, tag = 'output window, operand 0']
    #allocation5 [shape = 's32[2]{0}', space=sflag, size = 0x8, scoped, tag = 'scoped memory for tpu_custom_call.1']
    %72 = vsyncpa [#allocation5], 0
    %s73 = scalar_lea.sflag [#allocation5], 1
    %74 = vsyncpa %s73, 0
    loop: start=0, step=1, limit=6
    $region2: #{tpu_custom_call.1} parent=1 // loop_pre_header
      _
    $region3: #{tpu_custom_call.1} parent=1 // loop_header
      %s76 = sphi 0, %s80
      %p77 = scmp.ge.s32.totalorder %s76, 6
      %s83 = sphi 0, %s102
      %s84 = sphi 0, %s98
      %s85 = sphi 0, %s94
      %s86 = sphi 0, %s83
      %s87 = sphi 0, %s84
      %s88 = sphi 0, %s85
      %s89 = sphi 0, %s86
      %s90 = sphi 0, %s87
      %s91 = sphi 0, %s88
      %s107 = sphi 0, %s109
      %s110 = sphi 0, %s107
      %s111 = sphi 0, %s110
      %s127 = sphi 0, %s111
      %s135 = sphi 0, %s137
      %s138 = sphi 0, %s135
      %s139 = sphi 0, %s138
      %s155 = sphi 0, %s139
      %s161 = sphi 0, %s163
      %s164 = sphi 0, %s161
      %s165 = sphi 0, %s164
      %s181 = sphi 0, %s165
      %s187 = sphi 0, %s189
      %s190 = sphi 0, %s187
      %s191 = sphi 0, %s190
      %s207 = sphi 0, %s191
      %s213 = sphi 0, %s215
      %s216 = sphi 0, %s213
      %s217 = sphi 0, %s216
      %s233 = sphi 0, %s217
      %s239 = sphi 0, %s241
      %s242 = sphi 0, %s239
      %s243 = sphi 0, %s242
      %s259 = sphi 0, %s243
      %s265 = sphi 0, %s267
      %s268 = sphi 0, %s265
      %s269 = sphi 0, %s268
      %s285 = sphi 0, %s269
      %s291 = sphi 0, %s293
      %s294 = sphi 0, %s291
      %s295 = sphi 0, %s294
      %s311 = sphi 0, %s295
      %s317 = sphi 0, %s319
      %s320 = sphi 0, %s317
      %s321 = sphi 0, %s320
      %s337 = sphi 0, %s321
      %s343 = sphi 0, %s345
      %s346 = sphi 0, %s343
      %s347 = sphi 0, %s346
      %s363 = sphi 0, %s347
      %s369 = sphi 0, %s371
      %s372 = sphi 0, %s369
      %s373 = sphi 0, %s372
      %s389 = sphi 0, %s373
      %s395 = sphi 0, %s397
      %s398 = sphi 0, %s395
      %s399 = sphi 0, %s398
      %s415 = sphi 0, %s399
      %s421 = sphi 0, %s423
      %s424 = sphi 0, %s421
      %s425 = sphi 0, %s424
      %s441 = sphi 0, %s425
      %s447 = sphi 0, %s449
      %s450 = sphi 0, %s447
      %s451 = sphi 0, %s450
      %s467 = sphi 0, %s451
      %s473 = sphi 0, %s475
      %s476 = sphi 0, %s473
      %s477 = sphi 0, %s476
      %s493 = sphi 0, %s477
      %s499 = sphi 0, %s501
      %s502 = sphi 0, %s499
      %s503 = sphi 0, %s502
      %s519 = sphi 0, %s503
      %s525 = sphi 0, %s527
      %s528 = sphi 0, %s525
      %s529 = sphi 0, %s528
      %s545 = sphi 0, %s529
      %s551 = sphi 0, %s553
      %s554 = sphi 0, %s551
      %s555 = sphi 0, %s554
      %s571 = sphi 0, %s555
      %s577 = sphi 0, %s579
      %s580 = sphi 0, %s577
      %s581 = sphi 0, %s580
      %s597 = sphi 0, %s581
      %s603 = sphi 0, %s605
      %s606 = sphi 0, %s603
      %s607 = sphi 0, %s606
      %s623 = sphi 0, %s607
      %s629 = sphi 0, %s631
      %s632 = sphi 0, %s629
      %s633 = sphi 0, %s632
      %s649 = sphi 0, %s633
      %s655 = sphi 0, %s657
      %s658 = sphi 0, %s655
      %s659 = sphi 0, %s658
      %s675 = sphi 0, %s659
      %s681 = sphi 0, %s683
      %s684 = sphi 0, %s681
      %s685 = sphi 0, %s684
      %s701 = sphi 0, %s685
      %s707 = sphi 0, %s709
      %s710 = sphi 0, %s707
      %s711 = sphi 0, %s710
      %s727 = sphi 0, %s711
      %s731 = sphi 0, %s731
      %s733 = sphi 0, %s731
      %s734 = sphi 0, %s733
      %s748 = sphi 0, %s734
      %s752 = sphi 0, %s752
      %s754 = sphi 0, %s752
      %s755 = sphi 0, %s754
      %s769 = sphi 0, %s755
      %s773 = sphi 0, %s773
      %s775 = sphi 0, %s773
      %s776 = sphi 0, %s775
      %s790 = sphi 0, %s776
      %s794 = sphi 0, %s794
      %s796 = sphi 0, %s794
      %s797 = sphi 0, %s796
      %s811 = sphi 0, %s797
      %s815 = sphi 0, %s815
      %s817 = sphi 0, %s815
      %s818 = sphi 0, %s817
      %s832 = sphi 0, %s818
      %s836 = sphi 0, %s836
      %s838 = sphi 0, %s836
      %s839 = sphi 0, %s838
      %s853 = sphi 0, %s839
      %s857 = sphi 0, %s857
      %s859 = sphi 0, %s857
      %s860 = sphi 0, %s859
      %s874 = sphi 0, %s860
      %s878 = sphi 0, %s878
      %s880 = sphi 0, %s878
      %s881 = sphi 0, %s880
      %s895 = sphi 0, %s881
      %s903 = sphi 0, %s905
      %s906 = sphi 0, %s903
      %s907 = sphi 0, %s906
      %s923 = sphi 0, %s907
    $region4: #{tpu_custom_call.1} parent=1 // loop_header_branch
      %79 = sbr.rel (%p77) target = $region8
    $region5: #{tpu_custom_call.1} parent=1 // loop_body
      %s81 = ssub.s32 %s76, 1
      %s82 = ssub.s32 %s76, 2
      %s92 = sadd.s32 1, %s85
      %p93 = scmp.ge.s32.totalorder %s92, 2
      %s94 = scalar_select %p93, 0, %s92
      %s95 = sadd.s32 1, %s84
      %s96 = scalar_select %p93, %s95, %s84
      %p97 = scmp.ge.s32.totalorder %s96, 1
      %s98 = scalar_select %p97, 0, %s96
      %s99 = sadd.s32 1, %s83
      %s100 = scalar_select %p97, %s99, %s83
      %p101 = scmp.ge.s32.totalorder %s100, 2
      %s102 = scalar_select %p101, 0, %s100
      %s103 = ssub.s32 %s83, %s102
      %s104 = ssub.s32 %s84, %s98
      %s105 = sor.u32 %s103, %s104
      %p106 = scmp.eq.s32.totalorder %s105, 0
      %s108 = sadd.s32 %s107, 1
      %s109 = scalar_select %p106, %s107, %s108
      %p112 = pneg %p106
      %p113 = scmp.eq.s32.totalorder %s76, 3
      %p114 = por %p112, %p113
      %p115 = scmp.ne.s32.totalorder %s107, %s110
      %p116 = scmp.eq.s32.totalorder %s76, 0
      %p117 = por %p115, %p116
      %p118 = scmp.ne.s32.totalorder %s107, %s110
      %p119 = scmp.eq.s32.totalorder %s81, 3
      %p120 = por %p118, %p119
      %p121 = scmp.ne.s32.totalorder %s110, %s111
      %p122 = scmp.eq.s32.totalorder %s81, 0
      %p123 = por %p121, %p122
      %p124 = scmp.ne.s32.totalorder %s110, %s111
      %p125 = scmp.eq.s32.totalorder %s82, 3
      %p126 = por %p124, %p125
      %p128 = scmp.ne.s32.totalorder %s111, %s127
      %p129 = scmp.eq.s32.totalorder %s82, 0
      %p130 = por %p128, %p129
      %s131 = ssub.s32 %s83, %s102
      %s132 = ssub.s32 %s84, %s98
      %s133 = sor.u32 %s131, %s132
      %p134 = scmp.eq.s32.totalorder %s133, 0
      %s136 = sadd.s32 %s135, 1
      %s137 = scalar_select %p134, %s135, %s136
      %p140 = pneg %p134
      %p141 = scmp.eq.s32.totalorder %s76, 3
      %p142 = por %p140, %p141
      %p143 = scmp.ne.s32.totalorder %s135, %s138
      %p144 = scmp.eq.s32.totalorder %s76, 0
      %p145 = por %p143, %p144
      %p146 = scmp.ne.s32.totalorder %s135, %s138
      %p147 = scmp.eq.s32.totalorder %s81, 3
      %p148 = por %p146, %p147
      %p149 = scmp.ne.s32.totalorder %s138, %s139
      %p150 = scmp.eq.s32.totalorder %s81, 0
      %p151 = por %p149, %p150
      %p152 = scmp.ne.s32.totalorder %s138, %s139
      %p153 = scmp.eq.s32.totalorder %s82, 3
      %p154 = por %p152, %p153
      %p156 = scmp.ne.s32.totalorder %s139, %s155
      %p157 = scmp.eq.s32.totalorder %s82, 0
      %p158 = por %p156, %p157
      %s159 = ssub.s32 %s83, %s102
      %p160 = scmp.eq.s32.totalorder %s159, 0
      %s162 = sadd.s32 %s161, 1
      %s163 = scalar_select %p160, %s161, %s162
      %p166 = pneg %p160
      %p167 = scmp.eq.s32.totalorder %s76, 3
      %p168 = por %p166, %p167
      %p169 = scmp.ne.s32.totalorder %s161, %s164
      %p170 = scmp.eq.s32.totalorder %s76, 0
      %p171 = por %p169, %p170
      %p172 = scmp.ne.s32.totalorder %s161, %s164
      %p173 = scmp.eq.s32.totalorder %s81, 3
      %p174 = por %p172, %p173
      %p175 = scmp.ne.s32.totalorder %s164, %s165
      %p176 = scmp.eq.s32.totalorder %s81, 0
      %p177 = por %p175, %p176
      %p178 = scmp.ne.s32.totalorder %s164, %s165
      %p179 = scmp.eq.s32.totalorder %s82, 3
      %p180 = por %p178, %p179
      %p182 = scmp.ne.s32.totalorder %s165, %s181
      %p183 = scmp.eq.s32.totalorder %s82, 0
      %p184 = por %p182, %p183
      %s185 = ssub.s32 %s85, %s94
      %p186 = scmp.eq.s32.totalorder %s185, 0
      %s188 = sadd.s32 %s187, 1
      %s189 = scalar_select %p186, %s187, %s188
      %p192 = pneg %p186
      %p193 = scmp.eq.s32.totalorder %s76, 3
      %p194 = por %p192, %p193
      %p195 = scmp.ne.s32.totalorder %s187, %s190
      %p196 = scmp.eq.s32.totalorder %s76, 0
      %p197 = por %p195, %p196
      %p198 = scmp.ne.s32.totalorder %s187, %s190
      %p199 = scmp.eq.s32.totalorder %s81, 3
      %p200 = por %p198, %p199
      %p201 = scmp.ne.s32.totalorder %s190, %s191
      %p202 = scmp.eq.s32.totalorder %s81, 0
      %p203 = por %p201, %p202
      %p204 = scmp.ne.s32.totalorder %s190, %s191
      %p205 = scmp.eq.s32.totalorder %s82, 3
      %p206 = por %p204, %p205
      %p208 = scmp.ne.s32.totalorder %s191, %s207
      %p209 = scmp.eq.s32.totalorder %s82, 0
      %p210 = por %p208, %p209
      %s211 = ssub.s32 %s85, %s94
      %p212 = scmp.eq.s32.totalorder %s211, 0
      %s214 = sadd.s32 %s213, 1
      %s215 = scalar_select %p212, %s213, %s214
      %p218 = pneg %p212
      %p219 = scmp.eq.s32.totalorder %s76, 3
      %p220 = por %p218, %p219
      %p221 = scmp.ne.s32.totalorder %s213, %s216
      %p222 = scmp.eq.s32.totalorder %s76, 0
      %p223 = por %p221, %p222
      %p224 = scmp.ne.s32.totalorder %s213, %s216
      %p225 = scmp.eq.s32.totalorder %s81, 3
      %p226 = por %p224, %p225
      %p227 = scmp.ne.s32.totalorder %s216, %s217
      %p228 = scmp.eq.s32.totalorder %s81, 0
      %p229 = por %p227, %p228
      %p230 = scmp.ne.s32.totalorder %s216, %s217
      %p231 = scmp.eq.s32.totalorder %s82, 3
      %p232 = por %p230, %p231
      %p234 = scmp.ne.s32.totalorder %s217, %s233
      %p235 = scmp.eq.s32.totalorder %s82, 0
      %p236 = por %p234, %p235
      %s237 = ssub.s32 %s85, %s94
      %p238 = scmp.eq.s32.totalorder %s237, 0
      %s240 = sadd.s32 %s239, 1
      %s241 = scalar_select %p238, %s239, %s240
      %p244 = pneg %p238
      %p245 = scmp.eq.s32.totalorder %s76, 3
      %p246 = por %p244, %p245
      %p247 = scmp.ne.s32.totalorder %s239, %s242
      %p248 = scmp.eq.s32.totalorder %s76, 0
      %p249 = por %p247, %p248
      %p250 = scmp.ne.s32.totalorder %s239, %s242
      %p251 = scmp.eq.s32.totalorder %s81, 3
      %p252 = por %p250, %p251
      %p253 = scmp.ne.s32.totalorder %s242, %s243
      %p254 = scmp.eq.s32.totalorder %s81, 0
      %p255 = por %p253, %p254
      %p256 = scmp.ne.s32.totalorder %s242, %s243
      %p257 = scmp.eq.s32.totalorder %s82, 3
      %p258 = por %p256, %p257
      %p260 = scmp.ne.s32.totalorder %s243, %s259
      %p261 = scmp.eq.s32.totalorder %s82, 0
      %p262 = por %p260, %p261
      %s263 = ssub.s32 %s85, %s94
      %p264 = scmp.eq.s32.totalorder %s263, 0
      %s266 = sadd.s32 %s265, 1
      %s267 = scalar_select %p264, %s265, %s266
      %p270 = pneg %p264
      %p271 = scmp.eq.s32.totalorder %s76, 3
      %p272 = por %p270, %p271
      %p273 = scmp.ne.s32.totalorder %s265, %s268
      %p274 = scmp.eq.s32.totalorder %s76, 0
      %p275 = por %p273, %p274
      %p276 = scmp.ne.s32.totalorder %s265, %s268
      %p277 = scmp.eq.s32.totalorder %s81, 3
      %p278 = por %p276, %p277
      %p279 = scmp.ne.s32.totalorder %s268, %s269
      %p280 = scmp.eq.s32.totalorder %s81, 0
      %p281 = por %p279, %p280
      %p282 = scmp.ne.s32.totalorder %s268, %s269
      %p283 = scmp.eq.s32.totalorder %s82, 3
      %p284 = por %p282, %p283
      %p286 = scmp.ne.s32.totalorder %s269, %s285
      %p287 = scmp.eq.s32.totalorder %s82, 0
      %p288 = por %p286, %p287
      %s289 = ssub.s32 %s85, %s94
      %p290 = scmp.eq.s32.totalorder %s289, 0
      %s292 = sadd.s32 %s291, 1
      %s293 = scalar_select %p290, %s291, %s292
      %p296 = pneg %p290
      %p297 = scmp.eq.s32.totalorder %s76, 3
      %p298 = por %p296, %p297
      %p299 = scmp.ne.s32.totalorder %s291, %s294
      %p300 = scmp.eq.s32.totalorder %s76, 0
      %p301 = por %p299, %p300
      %p302 = scmp.ne.s32.totalorder %s291, %s294
      %p303 = scmp.eq.s32.totalorder %s81, 3
      %p304 = por %p302, %p303
      %p305 = scmp.ne.s32.totalorder %s294, %s295
      %p306 = scmp.eq.s32.totalorder %s81, 0
      %p307 = por %p305, %p306
      %p308 = scmp.ne.s32.totalorder %s294, %s295
      %p309 = scmp.eq.s32.totalorder %s82, 3
      %p310 = por %p308, %p309
      %p312 = scmp.ne.s32.totalorder %s295, %s311
      %p313 = scmp.eq.s32.totalorder %s82, 0
      %p314 = por %p312, %p313
      %s315 = ssub.s32 %s85, %s94
      %p316 = scmp.eq.s32.totalorder %s315, 0
      %s318 = sadd.s32 %s317, 1
      %s319 = scalar_select %p316, %s317, %s318
      %p322 = pneg %p316
      %p323 = scmp.eq.s32.totalorder %s76, 3
      %p324 = por %p322, %p323
      %p325 = scmp.ne.s32.totalorder %s317, %s320
      %p326 = scmp.eq.s32.totalorder %s76, 0
      %p327 = por %p325, %p326
      %p328 = scmp.ne.s32.totalorder %s317, %s320
      %p329 = scmp.eq.s32.totalorder %s81, 3
      %p330 = por %p328, %p329
      %p331 = scmp.ne.s32.totalorder %s320, %s321
      %p332 = scmp.eq.s32.totalorder %s81, 0
      %p333 = por %p331, %p332
      %p334 = scmp.ne.s32.totalorder %s320, %s321
      %p335 = scmp.eq.s32.totalorder %s82, 3
      %p336 = por %p334, %p335
      %p338 = scmp.ne.s32.totalorder %s321, %s337
      %p339 = scmp.eq.s32.totalorder %s82, 0
      %p340 = por %p338, %p339
      %s341 = ssub.s32 %s85, %s94
      %p342 = scmp.eq.s32.totalorder %s341, 0
      %s344 = sadd.s32 %s343, 1
      %s345 = scalar_select %p342, %s343, %s344
      %p348 = pneg %p342
      %p349 = scmp.eq.s32.totalorder %s76, 3
      %p350 = por %p348, %p349
      %p351 = scmp.ne.s32.totalorder %s343, %s346
      %p352 = scmp.eq.s32.totalorder %s76, 0
      %p353 = por %p351, %p352
      %p354 = scmp.ne.s32.totalorder %s343, %s346
      %p355 = scmp.eq.s32.totalorder %s81, 3
      %p356 = por %p354, %p355
      %p357 = scmp.ne.s32.totalorder %s346, %s347
      %p358 = scmp.eq.s32.totalorder %s81, 0
      %p359 = por %p357, %p358
      %p360 = scmp.ne.s32.totalorder %s346, %s347
      %p361 = scmp.eq.s32.totalorder %s82, 3
      %p362 = por %p360, %p361
      %p364 = scmp.ne.s32.totalorder %s347, %s363
      %p365 = scmp.eq.s32.totalorder %s82, 0
      %p366 = por %p364, %p365
      %s367 = ssub.s32 %s85, %s94
      %p368 = scmp.eq.s32.totalorder %s367, 0
      %s370 = sadd.s32 %s369, 1
      %s371 = scalar_select %p368, %s369, %s370
      %p374 = pneg %p368
      %p375 = scmp.eq.s32.totalorder %s76, 3
      %p376 = por %p374, %p375
      %p377 = scmp.ne.s32.totalorder %s369, %s372
      %p378 = scmp.eq.s32.totalorder %s76, 0
      %p379 = por %p377, %p378
      %p380 = scmp.ne.s32.totalorder %s369, %s372
      %p381 = scmp.eq.s32.totalorder %s81, 3
      %p382 = por %p380, %p381
      %p383 = scmp.ne.s32.totalorder %s372, %s373
      %p384 = scmp.eq.s32.totalorder %s81, 0
      %p385 = por %p383, %p384
      %p386 = scmp.ne.s32.totalorder %s372, %s373
      %p387 = scmp.eq.s32.totalorder %s82, 3
      %p388 = por %p386, %p387
      %p390 = scmp.ne.s32.totalorder %s373, %s389
      %p391 = scmp.eq.s32.totalorder %s82, 0
      %p392 = por %p390, %p391
      %s393 = ssub.s32 %s85, %s94
      %p394 = scmp.eq.s32.totalorder %s393, 0
      %s396 = sadd.s32 %s395, 1
      %s397 = scalar_select %p394, %s395, %s396
      %p400 = pneg %p394
      %p401 = scmp.eq.s32.totalorder %s76, 3
      %p402 = por %p400, %p401
      %p403 = scmp.ne.s32.totalorder %s395, %s398
      %p404 = scmp.eq.s32.totalorder %s76, 0
      %p405 = por %p403, %p404
      %p406 = scmp.ne.s32.totalorder %s395, %s398
      %p407 = scmp.eq.s32.totalorder %s81, 3
      %p408 = por %p406, %p407
      %p409 = scmp.ne.s32.totalorder %s398, %s399
      %p410 = scmp.eq.s32.totalorder %s81, 0
      %p411 = por %p409, %p410
      %p412 = scmp.ne.s32.totalorder %s398, %s399
      %p413 = scmp.eq.s32.totalorder %s82, 3
      %p414 = por %p412, %p413
      %p416 = scmp.ne.s32.totalorder %s399, %s415
      %p417 = scmp.eq.s32.totalorder %s82, 0
      %p418 = por %p416, %p417
      %s419 = ssub.s32 %s85, %s94
      %p420 = scmp.eq.s32.totalorder %s419, 0
      %s422 = sadd.s32 %s421, 1
      %s423 = scalar_select %p420, %s421, %s422
      %p426 = pneg %p420
      %p427 = scmp.eq.s32.totalorder %s76, 3
      %p428 = por %p426, %p427
      %p429 = scmp.ne.s32.totalorder %s421, %s424
      %p430 = scmp.eq.s32.totalorder %s76, 0
      %p431 = por %p429, %p430
      %p432 = scmp.ne.s32.totalorder %s421, %s424
      %p433 = scmp.eq.s32.totalorder %s81, 3
      %p434 = por %p432, %p433
      %p435 = scmp.ne.s32.totalorder %s424, %s425
      %p436 = scmp.eq.s32.totalorder %s81, 0
      %p437 = por %p435, %p436
      %p438 = scmp.ne.s32.totalorder %s424, %s425
      %p439 = scmp.eq.s32.totalorder %s82, 3
      %p440 = por %p438, %p439
      %p442 = scmp.ne.s32.totalorder %s425, %s441
      %p443 = scmp.eq.s32.totalorder %s82, 0
      %p444 = por %p442, %p443
      %s445 = ssub.s32 %s85, %s94
      %p446 = scmp.eq.s32.totalorder %s445, 0
      %s448 = sadd.s32 %s447, 1
      %s449 = scalar_select %p446, %s447, %s448
      %p452 = pneg %p446
      %p453 = scmp.eq.s32.totalorder %s76, 3
      %p454 = por %p452, %p453
      %p455 = scmp.ne.s32.totalorder %s447, %s450
      %p456 = scmp.eq.s32.totalorder %s76, 0
      %p457 = por %p455, %p456
      %p458 = scmp.ne.s32.totalorder %s447, %s450
      %p459 = scmp.eq.s32.totalorder %s81, 3
      %p460 = por %p458, %p459
      %p461 = scmp.ne.s32.totalorder %s450, %s451
      %p462 = scmp.eq.s32.totalorder %s81, 0
      %p463 = por %p461, %p462
      %p464 = scmp.ne.s32.totalorder %s450, %s451
      %p465 = scmp.eq.s32.totalorder %s82, 3
      %p466 = por %p464, %p465
      %p468 = scmp.ne.s32.totalorder %s451, %s467
      %p469 = scmp.eq.s32.totalorder %s82, 0
      %p470 = por %p468, %p469
      %s471 = ssub.s32 %s85, %s94
      %p472 = scmp.eq.s32.totalorder %s471, 0
      %s474 = sadd.s32 %s473, 1
      %s475 = scalar_select %p472, %s473, %s474
      %p478 = pneg %p472
      %p479 = scmp.eq.s32.totalorder %s76, 3
      %p480 = por %p478, %p479
      %p481 = scmp.ne.s32.totalorder %s473, %s476
      %p482 = scmp.eq.s32.totalorder %s76, 0
      %p483 = por %p481, %p482
      %p484 = scmp.ne.s32.totalorder %s473, %s476
      %p485 = scmp.eq.s32.totalorder %s81, 3
      %p486 = por %p484, %p485
      %p487 = scmp.ne.s32.totalorder %s476, %s477
      %p488 = scmp.eq.s32.totalorder %s81, 0
      %p489 = por %p487, %p488
      %p490 = scmp.ne.s32.totalorder %s476, %s477
      %p491 = scmp.eq.s32.totalorder %s82, 3
      %p492 = por %p490, %p491
      %p494 = scmp.ne.s32.totalorder %s477, %s493
      %p495 = scmp.eq.s32.totalorder %s82, 0
      %p496 = por %p494, %p495
      %s497 = ssub.s32 %s85, %s94
      %p498 = scmp.eq.s32.totalorder %s497, 0
      %s500 = sadd.s32 %s499, 1
      %s501 = scalar_select %p498, %s499, %s500
      %p504 = pneg %p498
      %p505 = scmp.eq.s32.totalorder %s76, 3
      %p506 = por %p504, %p505
      %p507 = scmp.ne.s32.totalorder %s499, %s502
      %p508 = scmp.eq.s32.totalorder %s76, 0
      %p509 = por %p507, %p508
      %p510 = scmp.ne.s32.totalorder %s499, %s502
      %p511 = scmp.eq.s32.totalorder %s81, 3
      %p512 = por %p510, %p511
      %p513 = scmp.ne.s32.totalorder %s502, %s503
      %p514 = scmp.eq.s32.totalorder %s81, 0
      %p515 = por %p513, %p514
      %p516 = scmp.ne.s32.totalorder %s502, %s503
      %p517 = scmp.eq.s32.totalorder %s82, 3
      %p518 = por %p516, %p517
      %p520 = scmp.ne.s32.totalorder %s503, %s519
      %p521 = scmp.eq.s32.totalorder %s82, 0
      %p522 = por %p520, %p521
      %s523 = ssub.s32 %s85, %s94
      %p524 = scmp.eq.s32.totalorder %s523, 0
      %s526 = sadd.s32 %s525, 1
      %s527 = scalar_select %p524, %s525, %s526
      %p530 = pneg %p524
      %p531 = scmp.eq.s32.totalorder %s76, 3
      %p532 = por %p530, %p531
      %p533 = scmp.ne.s32.totalorder %s525, %s528
      %p534 = scmp.eq.s32.totalorder %s76, 0
      %p535 = por %p533, %p534
      %p536 = scmp.ne.s32.totalorder %s525, %s528
      %p537 = scmp.eq.s32.totalorder %s81, 3
      %p538 = por %p536, %p537
      %p539 = scmp.ne.s32.totalorder %s528, %s529
      %p540 = scmp.eq.s32.totalorder %s81, 0
      %p541 = por %p539, %p540
      %p542 = scmp.ne.s32.totalorder %s528, %s529
      %p543 = scmp.eq.s32.totalorder %s82, 3
      %p544 = por %p542, %p543
      %p546 = scmp.ne.s32.totalorder %s529, %s545
      %p547 = scmp.eq.s32.totalorder %s82, 0
      %p548 = por %p546, %p547
      %s549 = ssub.s32 %s85, %s94
      %p550 = scmp.eq.s32.totalorder %s549, 0
      %s552 = sadd.s32 %s551, 1
      %s553 = scalar_select %p550, %s551, %s552
      %p556 = pneg %p550
      %p557 = scmp.eq.s32.totalorder %s76, 3
      %p558 = por %p556, %p557
      %p559 = scmp.ne.s32.totalorder %s551, %s554
      %p560 = scmp.eq.s32.totalorder %s76, 0
      %p561 = por %p559, %p560
      %p562 = scmp.ne.s32.totalorder %s551, %s554
      %p563 = scmp.eq.s32.totalorder %s81, 3
      %p564 = por %p562, %p563
      %p565 = scmp.ne.s32.totalorder %s554, %s555
      %p566 = scmp.eq.s32.totalorder %s81, 0
      %p567 = por %p565, %p566
      %p568 = scmp.ne.s32.totalorder %s554, %s555
      %p569 = scmp.eq.s32.totalorder %s82, 3
      %p570 = por %p568, %p569
      %p572 = scmp.ne.s32.totalorder %s555, %s571
      %p573 = scmp.eq.s32.totalorder %s82, 0
      %p574 = por %p572, %p573
      %s575 = ssub.s32 %s85, %s94
      %p576 = scmp.eq.s32.totalorder %s575, 0
      %s578 = sadd.s32 %s577, 1
      %s579 = scalar_select %p576, %s577, %s578
      %p582 = pneg %p576
      %p583 = scmp.eq.s32.totalorder %s76, 3
      %p584 = por %p582, %p583
      %p585 = scmp.ne.s32.totalorder %s577, %s580
      %p586 = scmp.eq.s32.totalorder %s76, 0
      %p587 = por %p585, %p586
      %p588 = scmp.ne.s32.totalorder %s577, %s580
      %p589 = scmp.eq.s32.totalorder %s81, 3
      %p590 = por %p588, %p589
      %p591 = scmp.ne.s32.totalorder %s580, %s581
      %p592 = scmp.eq.s32.totalorder %s81, 0
      %p593 = por %p591, %p592
      %p594 = scmp.ne.s32.totalorder %s580, %s581
      %p595 = scmp.eq.s32.totalorder %s82, 3
      %p596 = por %p594, %p595
      %p598 = scmp.ne.s32.totalorder %s581, %s597
      %p599 = scmp.eq.s32.totalorder %s82, 0
      %p600 = por %p598, %p599
      %s601 = ssub.s32 %s85, %s94
      %p602 = scmp.eq.s32.totalorder %s601, 0
      %s604 = sadd.s32 %s603, 1
      %s605 = scalar_select %p602, %s603, %s604
      %p608 = pneg %p602
      %p609 = scmp.eq.s32.totalorder %s76, 3
      %p610 = por %p608, %p609
      %p611 = scmp.ne.s32.totalorder %s603, %s606
      %p612 = scmp.eq.s32.totalorder %s76, 0
      %p613 = por %p611, %p612
      %p614 = scmp.ne.s32.totalorder %s603, %s606
      %p615 = scmp.eq.s32.totalorder %s81, 3
      %p616 = por %p614, %p615
      %p617 = scmp.ne.s32.totalorder %s606, %s607
      %p618 = scmp.eq.s32.totalorder %s81, 0
      %p619 = por %p617, %p618
      %p620 = scmp.ne.s32.totalorder %s606, %s607
      %p621 = scmp.eq.s32.totalorder %s82, 3
      %p622 = por %p620, %p621
      %p624 = scmp.ne.s32.totalorder %s607, %s623
      %p625 = scmp.eq.s32.totalorder %s82, 0
      %p626 = por %p624, %p625
      %s627 = ssub.s32 %s85, %s94
      %p628 = scmp.eq.s32.totalorder %s627, 0
      %s630 = sadd.s32 %s629, 1
      %s631 = scalar_select %p628, %s629, %s630
      %p634 = pneg %p628
      %p635 = scmp.eq.s32.totalorder %s76, 3
      %p636 = por %p634, %p635
      %p637 = scmp.ne.s32.totalorder %s629, %s632
      %p638 = scmp.eq.s32.totalorder %s76, 0
      %p639 = por %p637, %p638
      %p640 = scmp.ne.s32.totalorder %s629, %s632
      %p641 = scmp.eq.s32.totalorder %s81, 3
      %p642 = por %p640, %p641
      %p643 = scmp.ne.s32.totalorder %s632, %s633
      %p644 = scmp.eq.s32.totalorder %s81, 0
      %p645 = por %p643, %p644
      %p646 = scmp.ne.s32.totalorder %s632, %s633
      %p647 = scmp.eq.s32.totalorder %s82, 3
      %p648 = por %p646, %p647
      %p650 = scmp.ne.s32.totalorder %s633, %s649
      %p651 = scmp.eq.s32.totalorder %s82, 0
      %p652 = por %p650, %p651
      %s653 = ssub.s32 %s85, %s94
      %p654 = scmp.eq.s32.totalorder %s653, 0
      %s656 = sadd.s32 %s655, 1
      %s657 = scalar_select %p654, %s655, %s656
      %p660 = pneg %p654
      %p661 = scmp.eq.s32.totalorder %s76, 3
      %p662 = por %p660, %p661
      %p663 = scmp.ne.s32.totalorder %s655, %s658
      %p664 = scmp.eq.s32.totalorder %s76, 0
      %p665 = por %p663, %p664
      %p666 = scmp.ne.s32.totalorder %s655, %s658
      %p667 = scmp.eq.s32.totalorder %s81, 3
      %p668 = por %p666, %p667
      %p669 = scmp.ne.s32.totalorder %s658, %s659
      %p670 = scmp.eq.s32.totalorder %s81, 0
      %p671 = por %p669, %p670
      %p672 = scmp.ne.s32.totalorder %s658, %s659
      %p673 = scmp.eq.s32.totalorder %s82, 3
      %p674 = por %p672, %p673
      %p676 = scmp.ne.s32.totalorder %s659, %s675
      %p677 = scmp.eq.s32.totalorder %s82, 0
      %p678 = por %p676, %p677
      %s679 = ssub.s32 %s85, %s94
      %p680 = scmp.eq.s32.totalorder %s679, 0
      %s682 = sadd.s32 %s681, 1
      %s683 = scalar_select %p680, %s681, %s682
      %p686 = pneg %p680
      %p687 = scmp.eq.s32.totalorder %s76, 3
      %p688 = por %p686, %p687
      %p689 = scmp.ne.s32.totalorder %s681, %s684
      %p690 = scmp.eq.s32.totalorder %s76, 0
      %p691 = por %p689, %p690
      %p692 = scmp.ne.s32.totalorder %s681, %s684
      %p693 = scmp.eq.s32.totalorder %s81, 3
      %p694 = por %p692, %p693
      %p695 = scmp.ne.s32.totalorder %s684, %s685
      %p696 = scmp.eq.s32.totalorder %s81, 0
      %p697 = por %p695, %p696
      %p698 = scmp.ne.s32.totalorder %s684, %s685
      %p699 = scmp.eq.s32.totalorder %s82, 3
      %p700 = por %p698, %p699
      %p702 = scmp.ne.s32.totalorder %s685, %s701
      %p703 = scmp.eq.s32.totalorder %s82, 0
      %p704 = por %p702, %p703
      %s705 = ssub.s32 %s85, %s94
      %p706 = scmp.eq.s32.totalorder %s705, 0
      %s708 = sadd.s32 %s707, 1
      %s709 = scalar_select %p706, %s707, %s708
      %p712 = pneg %p706
      %p713 = scmp.eq.s32.totalorder %s76, 3
      %p714 = por %p712, %p713
      %p715 = scmp.ne.s32.totalorder %s707, %s710
      %p716 = scmp.eq.s32.totalorder %s76, 0
      %p717 = por %p715, %p716
      %p718 = scmp.ne.s32.totalorder %s707, %s710
      %p719 = scmp.eq.s32.totalorder %s81, 3
      %p720 = por %p718, %p719
      %p721 = scmp.ne.s32.totalorder %s710, %s711
      %p722 = scmp.eq.s32.totalorder %s81, 0
      %p723 = por %p721, %p722
      %p724 = scmp.ne.s32.totalorder %s710, %s711
      %p725 = scmp.eq.s32.totalorder %s82, 3
      %p726 = por %p724, %p725
      %p728 = scmp.ne.s32.totalorder %s711, %s727
      %p729 = scmp.eq.s32.totalorder %s82, 0
      %p730 = por %p728, %p729
      %s732 = sadd.s32 %s731, 1
      %p735 = scmp.eq.s32.totalorder %s76, 3
      %p736 = scmp.ne.s32.totalorder %s731, %s733
      %p737 = scmp.eq.s32.totalorder %s76, 0
      %p738 = por %p736, %p737
      %p739 = scmp.ne.s32.totalorder %s731, %s733
      %p740 = scmp.eq.s32.totalorder %s81, 3
      %p741 = por %p739, %p740
      %p742 = scmp.ne.s32.totalorder %s733, %s734
      %p743 = scmp.eq.s32.totalorder %s81, 0
      %p744 = por %p742, %p743
      %p745 = scmp.ne.s32.totalorder %s733, %s734
      %p746 = scmp.eq.s32.totalorder %s82, 3
      %p747 = por %p745, %p746
      %p749 = scmp.ne.s32.totalorder %s734, %s748
      %p750 = scmp.eq.s32.totalorder %s82, 0
      %p751 = por %p749, %p750
      %s753 = sadd.s32 %s752, 1
      %p756 = scmp.eq.s32.totalorder %s76, 3
      %p757 = scmp.ne.s32.totalorder %s752, %s754
      %p758 = scmp.eq.s32.totalorder %s76, 0
      %p759 = por %p757, %p758
      %p760 = scmp.ne.s32.totalorder %s752, %s754
      %p761 = scmp.eq.s32.totalorder %s81, 3
      %p762 = por %p760, %p761
      %p763 = scmp.ne.s32.totalorder %s754, %s755
      %p764 = scmp.eq.s32.totalorder %s81, 0
      %p765 = por %p763, %p764
      %p766 = scmp.ne.s32.totalorder %s754, %s755
      %p767 = scmp.eq.s32.totalorder %s82, 3
      %p768 = por %p766, %p767
      %p770 = scmp.ne.s32.totalorder %s755, %s769
      %p771 = scmp.eq.s32.totalorder %s82, 0
      %p772 = por %p770, %p771
      %s774 = sadd.s32 %s773, 1
      %p777 = scmp.eq.s32.totalorder %s76, 3
      %p778 = scmp.ne.s32.totalorder %s773, %s775
      %p779 = scmp.eq.s32.totalorder %s76, 0
      %p780 = por %p778, %p779
      %p781 = scmp.ne.s32.totalorder %s773, %s775
      %p782 = scmp.eq.s32.totalorder %s81, 3
      %p783 = por %p781, %p782
      %p784 = scmp.ne.s32.totalorder %s775, %s776
      %p785 = scmp.eq.s32.totalorder %s81, 0
      %p786 = por %p784, %p785
      %p787 = scmp.ne.s32.totalorder %s775, %s776
      %p788 = scmp.eq.s32.totalorder %s82, 3
      %p789 = por %p787, %p788
      %p791 = scmp.ne.s32.totalorder %s776, %s790
      %p792 = scmp.eq.s32.totalorder %s82, 0
      %p793 = por %p791, %p792
      %s795 = sadd.s32 %s794, 1
      %p798 = scmp.eq.s32.totalorder %s76, 3
      %p799 = scmp.ne.s32.totalorder %s794, %s796
      %p800 = scmp.eq.s32.totalorder %s76, 0
      %p801 = por %p799, %p800
      %p802 = scmp.ne.s32.totalorder %s794, %s796
      %p803 = scmp.eq.s32.totalorder %s81, 3
      %p804 = por %p802, %p803
      %p805 = scmp.ne.s32.totalorder %s796, %s797
      %p806 = scmp.eq.s32.totalorder %s81, 0
      %p807 = por %p805, %p806
      %p808 = scmp.ne.s32.totalorder %s796, %s797
      %p809 = scmp.eq.s32.totalorder %s82, 3
      %p810 = por %p808, %p809
      %p812 = scmp.ne.s32.totalorder %s797, %s811
      %p813 = scmp.eq.s32.totalorder %s82, 0
      %p814 = por %p812, %p813
      %s816 = sadd.s32 %s815, 1
      %p819 = scmp.eq.s32.totalorder %s76, 3
      %p820 = scmp.ne.s32.totalorder %s815, %s817
      %p821 = scmp.eq.s32.totalorder %s76, 0
      %p822 = por %p820, %p821
      %p823 = scmp.ne.s32.totalorder %s815, %s817
      %p824 = scmp.eq.s32.totalorder %s81, 3
      %p825 = por %p823, %p824
      %p826 = scmp.ne.s32.totalorder %s817, %s818
      %p827 = scmp.eq.s32.totalorder %s81, 0
      %p828 = por %p826, %p827
      %p829 = scmp.ne.s32.totalorder %s817, %s818
      %p830 = scmp.eq.s32.totalorder %s82, 3
      %p831 = por %p829, %p830
      %p833 = scmp.ne.s32.totalorder %s818, %s832
      %p834 = scmp.eq.s32.totalorder %s82, 0
      %p835 = por %p833, %p834
      %s837 = sadd.s32 %s836, 1
      %p840 = scmp.eq.s32.totalorder %s76, 3
      %p841 = scmp.ne.s32.totalorder %s836, %s838
      %p842 = scmp.eq.s32.totalorder %s76, 0
      %p843 = por %p841, %p842
      %p844 = scmp.ne.s32.totalorder %s836, %s838
      %p845 = scmp.eq.s32.totalorder %s81, 3
      %p846 = por %p844, %p845
      %p847 = scmp.ne.s32.totalorder %s838, %s839
      %p848 = scmp.eq.s32.totalorder %s81, 0
      %p849 = por %p847, %p848
      %p850 = scmp.ne.s32.totalorder %s838, %s839
      %p851 = scmp.eq.s32.totalorder %s82, 3
      %p852 = por %p850, %p851
      %p854 = scmp.ne.s32.totalorder %s839, %s853
      %p855 = scmp.eq.s32.totalorder %s82, 0
      %p856 = por %p854, %p855
      %s858 = sadd.s32 %s857, 1
      %p861 = scmp.eq.s32.totalorder %s76, 3
      %p862 = scmp.ne.s32.totalorder %s857, %s859
      %p863 = scmp.eq.s32.totalorder %s76, 0
      %p864 = por %p862, %p863
      %p865 = scmp.ne.s32.totalorder %s857, %s859
      %p866 = scmp.eq.s32.totalorder %s81, 3
      %p867 = por %p865, %p866
      %p868 = scmp.ne.s32.totalorder %s859, %s860
      %p869 = scmp.eq.s32.totalorder %s81, 0
      %p870 = por %p868, %p869
      %p871 = scmp.ne.s32.totalorder %s859, %s860
      %p872 = scmp.eq.s32.totalorder %s82, 3
      %p873 = por %p871, %p872
      %p875 = scmp.ne.s32.totalorder %s860, %s874
      %p876 = scmp.eq.s32.totalorder %s82, 0
      %p877 = por %p875, %p876
      %s879 = sadd.s32 %s878, 1
      %p882 = scmp.eq.s32.totalorder %s76, 3
      %p883 = scmp.ne.s32.totalorder %s878, %s880
      %p884 = scmp.eq.s32.totalorder %s76, 0
      %p885 = por %p883, %p884
      %p886 = scmp.ne.s32.totalorder %s878, %s880
      %p887 = scmp.eq.s32.totalorder %s81, 3
      %p888 = por %p886, %p887
      %p889 = scmp.ne.s32.totalorder %s880, %s881
      %p890 = scmp.eq.s32.totalorder %s81, 0
      %p891 = por %p889, %p890
      %p892 = scmp.ne.s32.totalorder %s880, %s881
      %p893 = scmp.eq.s32.totalorder %s82, 3
      %p894 = por %p892, %p893
      %p896 = scmp.ne.s32.totalorder %s881, %s895
      %p897 = scmp.eq.s32.totalorder %s82, 0
      %p898 = por %p896, %p897
      %s899 = ssub.s32 %s83, %s102
      %s900 = ssub.s32 %s84, %s98
      %s901 = sor.u32 %s899, %s900
      %p902 = scmp.eq.s32.totalorder %s901, 0
      %s904 = sadd.s32 %s903, 1
      %s905 = scalar_select %p902, %s903, %s904
      %p908 = pneg %p902
      %p909 = scmp.eq.s32.totalorder %s76, 3
      %p910 = por %p908, %p909
      %p911 = scmp.ne.s32.totalorder %s903, %s906
      %p912 = scmp.eq.s32.totalorder %s76, 0
      %p913 = por %p911, %p912
      %p914 = scmp.ne.s32.totalorder %s903, %s906
      %p915 = scmp.eq.s32.totalorder %s81, 3
      %p916 = por %p914, %p915
      %p917 = scmp.ne.s32.totalorder %s906, %s907
      %p918 = scmp.eq.s32.totalorder %s81, 0
      %p919 = por %p917, %p918
      %p920 = scmp.ne.s32.totalorder %s906, %s907
      %p921 = scmp.eq.s32.totalorder %s82, 3
      %p922 = por %p920, %p921
      %p924 = scmp.ne.s32.totalorder %s907, %s923
      %p925 = scmp.eq.s32.totalorder %s82, 0
      %p926 = por %p924, %p925
      %p927 = scmp.le.s32.totalorder 1, %s76
      %p928 = scmp.lt.s32.totalorder %s76, 5
      %p929 = pnand %p927, %p928
      %p930 = pneg %p929
      // Predicated region
      $region9: #{tpu_custom_call.1} parent=5 // pred_check
        _
      $region10: #{tpu_custom_call.1} parent=5 // pred_check_branch
        %932 = sbr.rel (%p929) target = $region12
      $region11: #{tpu_custom_call.1} parent=5 // pred_region
        %s933 = ssub.s32 %s76, 1
        // Predicated region
        $region13: #{tpu_custom_call.1} parent=11 // pred_check
          %p934 = pneg %p744
        $region14: #{tpu_custom_call.1} parent=11 // pred_check_branch
          %936 = sbr.rel (%p934) target = $region16
        $region15: #{tpu_custom_call.1} parent=11 // pred_region
          _
        $region16: #{tpu_custom_call.1} parent=11 // pred_fallthru
          _
        // Predicated region
        $region17: #{tpu_custom_call.1} parent=11 // pred_check
          %p937 = pneg %p765
        $region18: #{tpu_custom_call.1} parent=11 // pred_check_branch
          %939 = sbr.rel (%p937) target = $region20
        $region19: #{tpu_custom_call.1} parent=11 // pred_region
          _
        $region20: #{tpu_custom_call.1} parent=11 // pred_fallthru
          _
        // Predicated region
        $region21: #{tpu_custom_call.1} parent=11 // pred_check
          %p940 = pneg %p786
        $region22: #{tpu_custom_call.1} parent=11 // pred_check_branch
          %942 = sbr.rel (%p940) target = $region24
        $region23: #{tpu_custom_call.1} parent=11 // pred_region
          _
        $region24: #{tpu_custom_call.1} parent=11 // pred_fallthru
          _
        // Predicated region
        $region25: #{tpu_custom_call.1} parent=11 // pred_check
          %p943 = pneg %p807
        $region26: #{tpu_custom_call.1} parent=11 // pred_check_branch
          %945 = sbr.rel (%p943) target = $region28
        $region27: #{tpu_custom_call.1} parent=11 // pred_region
          _
        $region28: #{tpu_custom_call.1} parent=11 // pred_fallthru
          _
        // Predicated region
        $region29: #{tpu_custom_call.1} parent=11 // pred_check
          %p946 = pneg %p828
        $region30: #{tpu_custom_call.1} parent=11 // pred_check_branch
          %948 = sbr.rel (%p946) target = $region32
        $region31: #{tpu_custom_call.1} parent=11 // pred_region
          _
        $region32: #{tpu_custom_call.1} parent=11 // pred_fallthru
          _
        // Predicated region
        $region33: #{tpu_custom_call.1} parent=11 // pred_check
          %p949 = pneg %p849
        $region34: #{tpu_custom_call.1} parent=11 // pred_check_branch
          %951 = sbr.rel (%p949) target = $region36
        $region35: #{tpu_custom_call.1} parent=11 // pred_region
          _
        $region36: #{tpu_custom_call.1} parent=11 // pred_fallthru
          _
        // Predicated region
        $region37: #{tpu_custom_call.1} parent=11 // pred_check
          %p952 = pneg %p870
        $region38: #{tpu_custom_call.1} parent=11 // pred_check_branch
          %954 = sbr.rel (%p952) target = $region40
        $region39: #{tpu_custom_call.1} parent=11 // pred_region
          _
        $region40: #{tpu_custom_call.1} parent=11 // pred_fallthru
          _
        // Predicated region
        $region41: #{tpu_custom_call.1} parent=11 // pred_check
          %p955 = pneg %p891
        $region42: #{tpu_custom_call.1} parent=11 // pred_check_branch
          %957 = sbr.rel (%p955) target = $region44
        $region43: #{tpu_custom_call.1} parent=11 // pred_region
          _
        $region44: #{tpu_custom_call.1} parent=11 // pred_fallthru
          _
      $region12: #{tpu_custom_call.1} parent=5 // pred_fallthru
        _
      %p958 = scmp.lt.s32.totalorder %s76, 4
      // Predicated region
      $region45: #{tpu_custom_call.1} parent=5 // pred_check
        %p959 = pneg %p958
      $region46: #{tpu_custom_call.1} parent=5 // pred_check_branch
        %961 = sbr.rel (%p959) target = $region48
      $region47: #{tpu_custom_call.1} parent=5 // pred_region
        // Predicated region
        $region49: #{tpu_custom_call.1} parent=47 // pred_check
          %p962 = pneg %p117
        $region50: #{tpu_custom_call.1} parent=47 // pred_check_branch
          %964 = sbr.rel (%p962) target = $region52
        $region51: #{tpu_custom_call.1} parent=47 // pred_region
          %s965 = smul.u32 8, %s84
          %p966 = scmp.lt.s32.totalorder %s83, 1
          %s967 = scalar_select %p966, %s83, 1
          %p968 = scmp.lt.s32.totalorder %s965, 7
          %s969 = scalar_select %p968, %s965, 7
          %s970 = smul.addr %s967, 8
          %s971 = sadd.s32 %s969, %s970
          %s972 = smul.addr %s971, 8
          %s973 = scalar_lea.vmem %s1, %s972
          %s974 = smul.u32 8, %s84
        $region52: #{tpu_custom_call.1} parent=47 // pred_fallthru
          _
        // Predicated region
        $region53: #{tpu_custom_call.1} parent=47 // pred_check
          %p975 = pneg %p145
        $region54: #{tpu_custom_call.1} parent=47 // pred_check_branch
          %977 = sbr.rel (%p975) target = $region56
        $region55: #{tpu_custom_call.1} parent=47 // pred_region
          %s978 = smul.u32 8, %s84
          %p979 = scmp.lt.s32.totalorder %s83, 1
          %s980 = scalar_select %p979, %s83, 1
          %p981 = scmp.lt.s32.totalorder %s978, 7
          %s982 = scalar_select %p981, %s978, 7
          %s983 = smul.addr %s980, 8
          %s984 = sadd.s32 %s982, %s983
          %s985 = smul.addr %s984, 8
          %s986 = scalar_lea.vmem %s3, %s985
          %s987 = smul.u32 8, %s84
        $region56: #{tpu_custom_call.1} parent=47 // pred_fallthru
          _
        // Predicated region
        $region57: #{tpu_custom_call.1} parent=47 // pred_check
          %p988 = pneg %p171
        $region58: #{tpu_custom_call.1} parent=47 // pred_check_branch
          %990 = sbr.rel (%p988) target = $region60
        $region59: #{tpu_custom_call.1} parent=47 // pred_region
          %p991 = scmp.lt.s32.totalorder %s83, 1
          %s992 = scalar_select %p991, %s83, 1
          %s993 = smul.addr %s992, 8
          %s994 = scalar_lea.vmem %s5, %s993
        $region60: #{tpu_custom_call.1} parent=47 // pred_fallthru
          _
        // Predicated region
        $region61: #{tpu_custom_call.1} parent=47 // pred_check
          %p995 = pneg %p197
        $region62: #{tpu_custom_call.1} parent=47 // pred_check_branch
          %997 = sbr.rel (%p995) target = $region64
        $region63: #{tpu_custom_call.1} parent=47 // pred_region
          %p998 = scmp.lt.s32.totalorder %s85, 1
          %s999 = scalar_select %p998, %s85, 1
          %s1000 = scalar_lea.vmem %s7, %s999
        $region64: #{tpu_custom_call.1} parent=47 // pred_fallthru
          _
        // Predicated region
        $region65: #{tpu_custom_call.1} parent=47 // pred_check
          %p1001 = pneg %p223
        $region66: #{tpu_custom_call.1} parent=47 // pred_check_branch
          %1003 = sbr.rel (%p1001) target = $region68
        $region67: #{tpu_custom_call.1} parent=47 // pred_region
          %p1004 = scmp.lt.s32.totalorder %s85, 1
          %s1005 = scalar_select %p1004, %s85, 1
          %s1006 = scalar_lea.vmem %s9, %s1005
        $region68: #{tpu_custom_call.1} parent=47 // pred_fallthru
          _
        // Predicated region
        $region69: #{tpu_custom_call.1} parent=47 // pred_check
          %p1007 = pneg %p249
        $region70: #{tpu_custom_call.1} parent=47 // pred_check_branch
          %1009 = sbr.rel (%p1007) target = $region72
        $region71: #{tpu_custom_call.1} parent=47 // pred_region
          %p1010 = scmp.lt.s32.totalorder %s85, 1
          %s1011 = scalar_select %p1010, %s85, 1
          %s1012 = scalar_lea.vmem %s11, %s1011
        $region72: #{tpu_custom_call.1} parent=47 // pred_fallthru
          _
        // Predicated region
        $region73: #{tpu_custom_call.1} parent=47 // pred_check
          %p1013 = pneg %p275
        $region74: #{tpu_custom_call.1} parent=47 // pred_check_branch
          %1015 = sbr.rel (%p1013) target = $region76
        $region75: #{tpu_custom_call.1} parent=47 // pred_region
          %p1016 = scmp.lt.s32.totalorder %s85, 1
          %s1017 = scalar_select %p1016, %s85, 1
          %s1018 = scalar_lea.vmem %s13, %s1017
        $region76: #{tpu_custom_call.1} parent=47 // pred_fallthru
          _
        // Predicated region
        $region77: #{tpu_custom_call.1} parent=47 // pred_check
          %p1019 = pneg %p301
        $region78: #{tpu_custom_call.1} parent=47 // pred_check_branch
          %1021 = sbr.rel (%p1019) target = $region80
        $region79: #{tpu_custom_call.1} parent=47 // pred_region
          %p1022 = scmp.lt.s32.totalorder %s85, 1
          %s1023 = scalar_select %p1022, %s85, 1
          %s1024 = scalar_lea.vmem %s15, %s1023
        $region80: #{tpu_custom_call.1} parent=47 // pred_fallthru
          _
        // Predicated region
        $region81: #{tpu_custom_call.1} parent=47 // pred_check
          %p1025 = pneg %p327
        $region82: #{tpu_custom_call.1} parent=47 // pred_check_branch
          %1027 = sbr.rel (%p1025) target = $region84
        $region83: #{tpu_custom_call.1} parent=47 // pred_region
          %p1028 = scmp.lt.s32.totalorder %s85, 1
          %s1029 = scalar_select %p1028, %s85, 1
          %s1030 = scalar_lea.vmem %s17, %s1029
        $region84: #{tpu_custom_call.1} parent=47 // pred_fallthru
          _
        // Predicated region
        $region85: #{tpu_custom_call.1} parent=47 // pred_check
          %p1031 = pneg %p353
        $region86: #{tpu_custom_call.1} parent=47 // pred_check_branch
          %1033 = sbr.rel (%p1031) target = $region88
        $region87: #{tpu_custom_call.1} parent=47 // pred_region
          %p1034 = scmp.lt.s32.totalorder %s85, 1
          %s1035 = scalar_select %p1034, %s85, 1
          %s1036 = smul.addr %s1035, 16
          %s1037 = smul.addr %s1036, 4
          %s1038 = scalar_lea.vmem %s19, %s1037
        $region88: #{tpu_custom_call.1} parent=47 // pred_fallthru
          _
        // Predicated region
        $region89: #{tpu_custom_call.1} parent=47 // pred_check
          %p1039 = pneg %p379
        $region90: #{tpu_custom_call.1} parent=47 // pred_check_branch
          %1041 = sbr.rel (%p1039) target = $region92
        $region91: #{tpu_custom_call.1} parent=47 // pred_region
          %p1042 = scmp.lt.s32.totalorder %s85, 1
          %s1043 = scalar_select %p1042, %s85, 1
          %s1044 = smul.addr %s1043, 8
          %s1045 = smul.addr %s1044, 4
          %s1046 = scalar_lea.vmem %s21, %s1045
        $region92: #{tpu_custom_call.1} parent=47 // pred_fallthru
          _
        // Predicated region
        $region93: #{tpu_custom_call.1} parent=47 // pred_check
          %p1047 = pneg %p405
        $region94: #{tpu_custom_call.1} parent=47 // pred_check_branch
          %1049 = sbr.rel (%p1047) target = $region96
        $region95: #{tpu_custom_call.1} parent=47 // pred_region
          %p1050 = scmp.lt.s32.totalorder %s85, 1
          %s1051 = scalar_select %p1050, %s85, 1
          %s1052 = smul.addr %s1051, 4
          %s1053 = scalar_lea.vmem %s23, %s1052
        $region96: #{tpu_custom_call.1} parent=47 // pred_fallthru
          _
        // Predicated region
        $region97: #{tpu_custom_call.1} parent=47 // pred_check
          %p1054 = pneg %p431
        $region98: #{tpu_custom_call.1} parent=47 // pred_check_branch
          %1056 = sbr.rel (%p1054) target = $region100
        $region99: #{tpu_custom_call.1} parent=47 // pred_region
          %p1057 = scmp.lt.s32.totalorder %s85, 1
          %s1058 = scalar_select %p1057, %s85, 1
          %s1059 = smul.addr %s1058, 16
          %s1060 = smul.addr %s1059, 4
          %s1061 = scalar_lea.vmem %s25, %s1060
        $region100: #{tpu_custom_call.1} parent=47 // pred_fallthru
          _
        // Predicated region
        $region101: #{tpu_custom_call.1} parent=47 // pred_check
          %p1062 = pneg %p457
        $region102: #{tpu_custom_call.1} parent=47 // pred_check_branch
          %1064 = sbr.rel (%p1062) target = $region104
        $region103: #{tpu_custom_call.1} parent=47 // pred_region
          %p1065 = scmp.lt.s32.totalorder %s85, 1
          %s1066 = scalar_select %p1065, %s85, 1
          %s1067 = smul.addr %s1066, 4
          %s1068 = scalar_lea.vmem %s27, %s1067
        $region104: #{tpu_custom_call.1} parent=47 // pred_fallthru
          _
        // Predicated region
        $region105: #{tpu_custom_call.1} parent=47 // pred_check
          %p1069 = pneg %p483
        $region106: #{tpu_custom_call.1} parent=47 // pred_check_branch
          %1071 = sbr.rel (%p1069) target = $region108
        $region107: #{tpu_custom_call.1} parent=47 // pred_region
          %p1072 = scmp.lt.s32.totalorder %s85, 1
          %s1073 = scalar_select %p1072, %s85, 1
          %s1074 = smul.addr %s1073, 16
          %s1075 = smul.addr %s1074, 4
          %s1076 = scalar_lea.vmem %s29, %s1075
        $region108: #{tpu_custom_call.1} parent=47 // pred_fallthru
          _
        // Predicated region
        $region109: #{tpu_custom_call.1} parent=47 // pred_check
          %p1077 = pneg %p509
        $region110: #{tpu_custom_call.1} parent=47 // pred_check_branch
          %1079 = sbr.rel (%p1077) target = $region112
        $region111: #{tpu_custom_call.1} parent=47 // pred_region
          %p1080 = scmp.lt.s32.totalorder %s85, 1
          %s1081 = scalar_select %p1080, %s85, 1
          %s1082 = smul.addr %s1081, 4
          %s1083 = scalar_lea.vmem %s31, %s1082
        $region112: #{tpu_custom_call.1} parent=47 // pred_fallthru
          _
        // Predicated region
        $region113: #{tpu_custom_call.1} parent=47 // pred_check
          %p1084 = pneg %p535
        $region114: #{tpu_custom_call.1} parent=47 // pred_check_branch
          %1086 = sbr.rel (%p1084) target = $region116
        $region115: #{tpu_custom_call.1} parent=47 // pred_region
          %p1087 = scmp.lt.s32.totalorder %s85, 1
          %s1088 = scalar_select %p1087, %s85, 1
          %s1089 = smul.addr %s1088, 4
          %s1090 = smul.addr %s1089, 4
          %s1091 = scalar_lea.vmem %s33, %s1090
        $region116: #{tpu_custom_call.1} parent=47 // pred_fallthru
          _
        // Predicated region
        $region117: #{tpu_custom_call.1} parent=47 // pred_check
          %p1092 = pneg %p561
        $region118: #{tpu_custom_call.1} parent=47 // pred_check_branch
          %1094 = sbr.rel (%p1092) target = $region120
        $region119: #{tpu_custom_call.1} parent=47 // pred_region
          %p1095 = scmp.lt.s32.totalorder %s85, 1
          %s1096 = scalar_select %p1095, %s85, 1
          %s1097 = scalar_lea.vmem %s35, %s1096
        $region120: #{tpu_custom_call.1} parent=47 // pred_fallthru
          _
        // Predicated region
        $region121: #{tpu_custom_call.1} parent=47 // pred_check
          %p1098 = pneg %p587
        $region122: #{tpu_custom_call.1} parent=47 // pred_check_branch
          %1100 = sbr.rel (%p1098) target = $region124
        $region123: #{tpu_custom_call.1} parent=47 // pred_region
          %p1101 = scmp.lt.s32.totalorder %s85, 1
          %s1102 = scalar_select %p1101, %s85, 1
          %s1103 = scalar_lea.vmem %s37, %s1102
        $region124: #{tpu_custom_call.1} parent=47 // pred_fallthru
          _
        // Predicated region
        $region125: #{tpu_custom_call.1} parent=47 // pred_check
          %p1104 = pneg %p613
        $region126: #{tpu_custom_call.1} parent=47 // pred_check_branch
          %1106 = sbr.rel (%p1104) target = $region128
        $region127: #{tpu_custom_call.1} parent=47 // pred_region
          %p1107 = scmp.lt.s32.totalorder %s85, 1
          %s1108 = scalar_select %p1107, %s85, 1
          %s1109 = scalar_lea.vmem %s39, %s1108
        $region128: #{tpu_custom_call.1} parent=47 // pred_fallthru
          _
        // Predicated region
        $region129: #{tpu_custom_call.1} parent=47 // pred_check
          %p1110 = pneg %p639
        $region130: #{tpu_custom_call.1} parent=47 // pred_check_branch
          %1112 = sbr.rel (%p1110) target = $region132
        $region131: #{tpu_custom_call.1} parent=47 // pred_region
          %p1113 = scmp.lt.s32.totalorder %s85, 1
          %s1114 = scalar_select %p1113, %s85, 1
          %s1115 = smul.addr %s1114, 4
          %s1116 = smul.addr %s1115, 4
          %s1117 = scalar_lea.vmem %s41, %s1116
        $region132: #{tpu_custom_call.1} parent=47 // pred_fallthru
          _
        // Predicated region
        $region133: #{tpu_custom_call.1} parent=47 // pred_check
          %p1118 = pneg %p665
        $region134: #{tpu_custom_call.1} parent=47 // pred_check_branch
          %1120 = sbr.rel (%p1118) target = $region136
        $region135: #{tpu_custom_call.1} parent=47 // pred_region
          %p1121 = scmp.lt.s32.totalorder %s85, 1
          %s1122 = scalar_select %p1121, %s85, 1
          %s1123 = scalar_lea.vmem %s43, %s1122
        $region136: #{tpu_custom_call.1} parent=47 // pred_fallthru
          _
        // Predicated region
        $region137: #{tpu_custom_call.1} parent=47 // pred_check
          %p1124 = pneg %p691
        $region138: #{tpu_custom_call.1} parent=47 // pred_check_branch
          %1126 = sbr.rel (%p1124) target = $region140
        $region139: #{tpu_custom_call.1} parent=47 // pred_region
          %p1127 = scmp.lt.s32.totalorder %s85, 1
          %s1128 = scalar_select %p1127, %s85, 1
          %s1129 = smul.addr %s1128, 8
          %s1130 = smul.addr %s1129, 4
          %s1131 = scalar_lea.vmem %s45, %s1130
        $region140: #{tpu_custom_call.1} parent=47 // pred_fallthru
          _
        // Predicated region
        $region141: #{tpu_custom_call.1} parent=47 // pred_check
          %p1132 = pneg %p717
        $region142: #{tpu_custom_call.1} parent=47 // pred_check_branch
          %1134 = sbr.rel (%p1132) target = $region144
        $region143: #{tpu_custom_call.1} parent=47 // pred_region
          %p1135 = scmp.lt.s32.totalorder %s85, 1
          %s1136 = scalar_select %p1135, %s85, 1
          %s1137 = scalar_lea.vmem %s47, %s1136
        $region144: #{tpu_custom_call.1} parent=47 // pred_fallthru
          _
      $region48: #{tpu_custom_call.1} parent=5 // pred_fallthru
        _
      %p1138 = scmp.le.s32.totalorder 1, %s76
      %p1139 = scmp.lt.s32.totalorder %s76, 5
      %p1140 = pnand %p1138, %p1139
      %p1141 = pneg %p1140
      // Predicated region
      $region145: #{tpu_custom_call.1} parent=5 // pred_check
        _
      $region146: #{tpu_custom_call.1} parent=5 // pred_check_branch
        %1143 = sbr.rel (%p1140) target = $region148
      $region147: #{tpu_custom_call.1} parent=5 // pred_region
        %s1144 = ssub.s32 %s76, 1
        %s1145 = smul.u32 8, %s87
        %p1146 = scmp.lt.s32.totalorder %s86, 1
        %s1147 = scalar_select %p1146, %s86, 1
        %p1148 = scmp.lt.s32.totalorder %s1145, 7
        %s1149 = scalar_select %p1148, %s1145, 7
        %s1150 = smul.addr %s1147, 8
        %s1151 = sadd.s32 %s1149, %s1150
        %s1152 = smul.addr %s1151, 8
        %s1153 = scalar_lea.vmem %s1, %s1152
        %p1154 = pneg %p123
        %p1155 = pneg %p120
        %s1156 = smul.u32 8, %s87
        %p1157 = scmp.lt.s32.totalorder %s86, 1
        %s1158 = scalar_select %p1157, %s86, 1
        %p1159 = scmp.lt.s32.totalorder %s1156, 7
        %s1160 = scalar_select %p1159, %s1156, 7
        %s1161 = smul.addr %s1158, 8
        %s1162 = sadd.s32 %s1160, %s1161
        %s1163 = smul.addr %s1162, 8
        %s1164 = scalar_lea.vmem %s3, %s1163
        %p1165 = pneg %p151
        %p1166 = pneg %p148
        %p1167 = scmp.lt.s32.totalorder %s86, 1
        %s1168 = scalar_select %p1167, %s86, 1
        %s1169 = smul.addr %s1168, 8
        %s1170 = scalar_lea.vmem %s5, %s1169
        %p1171 = pneg %p177
        %p1172 = pneg %p174
        %p1173 = scmp.lt.s32.totalorder %s88, 1
        %s1174 = scalar_select %p1173, %s88, 1
        %s1175 = scalar_lea.vmem %s7, %s1174
        %p1176 = pneg %p203
        %p1177 = pneg %p200
        %p1178 = scmp.lt.s32.totalorder %s88, 1
        %s1179 = scalar_select %p1178, %s88, 1
        %s1180 = scalar_lea.vmem %s9, %s1179
        %p1181 = pneg %p229
        %p1182 = pneg %p226
        %p1183 = scmp.lt.s32.totalorder %s88, 1
        %s1184 = scalar_select %p1183, %s88, 1
        %s1185 = scalar_lea.vmem %s11, %s1184
        %p1186 = pneg %p255
        %p1187 = pneg %p252
        %p1188 = scmp.lt.s32.totalorder %s88, 1
        %s1189 = scalar_select %p1188, %s88, 1
        %s1190 = scalar_lea.vmem %s13, %s1189
        %p1191 = pneg %p281
        %p1192 = pneg %p278
        %p1193 = scmp.lt.s32.totalorder %s88, 1
        %s1194 = scalar_select %p1193, %s88, 1
        %s1195 = scalar_lea.vmem %s15, %s1194
        %p1196 = pneg %p307
        %p1197 = pneg %p304
        %p1198 = scmp.lt.s32.totalorder %s88, 1
        %s1199 = scalar_select %p1198, %s88, 1
        %s1200 = scalar_lea.vmem %s17, %s1199
        %p1201 = pneg %p333
        %p1202 = pneg %p330
        %p1203 = scmp.lt.s32.totalorder %s88, 1
        %s1204 = scalar_select %p1203, %s88, 1
        %s1205 = smul.addr %s1204, 16
        %s1206 = smul.addr %s1205, 4
        %s1207 = scalar_lea.vmem %s19, %s1206
        %p1208 = pneg %p359
        %p1209 = pneg %p356
        %p1210 = scmp.lt.s32.totalorder %s88, 1
        %s1211 = scalar_select %p1210, %s88, 1
        %s1212 = smul.addr %s1211, 8
        %s1213 = smul.addr %s1212, 4
        %s1214 = scalar_lea.vmem %s21, %s1213
        %p1215 = pneg %p385
        %p1216 = pneg %p382
        %p1217 = scmp.lt.s32.totalorder %s88, 1
        %s1218 = scalar_select %p1217, %s88, 1
        %s1219 = smul.addr %s1218, 4
        %s1220 = scalar_lea.vmem %s23, %s1219
        %p1221 = pneg %p411
        %p1222 = pneg %p408
        %p1223 = scmp.lt.s32.totalorder %s88, 1
        %s1224 = scalar_select %p1223, %s88, 1
        %s1225 = smul.addr %s1224, 16
        %s1226 = smul.addr %s1225, 4
        %s1227 = scalar_lea.vmem %s25, %s1226
        %p1228 = pneg %p437
        %p1229 = pneg %p434
        %p1230 = scmp.lt.s32.totalorder %s88, 1
        %s1231 = scalar_select %p1230, %s88, 1
        %s1232 = smul.addr %s1231, 4
        %s1233 = scalar_lea.vmem %s27, %s1232
        %p1234 = pneg %p463
        %p1235 = pneg %p460
        %p1236 = scmp.lt.s32.totalorder %s88, 1
        %s1237 = scalar_select %p1236, %s88, 1
        %s1238 = smul.addr %s1237, 16
        %s1239 = smul.addr %s1238, 4
        %s1240 = scalar_lea.vmem %s29, %s1239
        %p1241 = pneg %p489
        %p1242 = pneg %p486
        %p1243 = scmp.lt.s32.totalorder %s88, 1
        %s1244 = scalar_select %p1243, %s88, 1
        %s1245 = smul.addr %s1244, 4
        %s1246 = scalar_lea.vmem %s31, %s1245
        %p1247 = pneg %p515
        %p1248 = pneg %p512
        %p1249 = scmp.lt.s32.totalorder %s88, 1
        %s1250 = scalar_select %p1249, %s88, 1
        %s1251 = smul.addr %s1250, 4
        %s1252 = smul.addr %s1251, 4
        %s1253 = scalar_lea.vmem %s33, %s1252
        %p1254 = pneg %p541
        %p1255 = pneg %p538
        %p1256 = scmp.lt.s32.totalorder %s88, 1
        %s1257 = scalar_select %p1256, %s88, 1
        %s1258 = scalar_lea.vmem %s35, %s1257
        %p1259 = pneg %p567
        %p1260 = pneg %p564
        %p1261 = scmp.lt.s32.totalorder %s88, 1
        %s1262 = scalar_select %p1261, %s88, 1
        %s1263 = scalar_lea.vmem %s37, %s1262
        %p1264 = pneg %p593
        %p1265 = pneg %p590
        %p1266 = scmp.lt.s32.totalorder %s88, 1
        %s1267 = scalar_select %p1266, %s88, 1
        %s1268 = scalar_lea.vmem %s39, %s1267
        %p1269 = pneg %p619
        %p1270 = pneg %p616
        %p1271 = scmp.lt.s32.totalorder %s88, 1
        %s1272 = scalar_select %p1271, %s88, 1
        %s1273 = smul.addr %s1272, 4
        %s1274 = smul.addr %s1273, 4
        %s1275 = scalar_lea.vmem %s41, %s1274
        %p1276 = pneg %p645
        %p1277 = pneg %p642
        %p1278 = scmp.lt.s32.totalorder %s88, 1
        %s1279 = scalar_select %p1278, %s88, 1
        %s1280 = scalar_lea.vmem %s43, %s1279
        %p1281 = pneg %p671
        %p1282 = pneg %p668
        %p1283 = scmp.lt.s32.totalorder %s88, 1
        %s1284 = scalar_select %p1283, %s88, 1
        %s1285 = smul.addr %s1284, 8
        %s1286 = smul.addr %s1285, 4
        %s1287 = scalar_lea.vmem %s45, %s1286
        %p1288 = pneg %p697
        %p1289 = pneg %p694
        %p1290 = scmp.lt.s32.totalorder %s88, 1
        %s1291 = scalar_select %p1290, %s88, 1
        %s1292 = scalar_lea.vmem %s47, %s1291
        %p1293 = pneg %p723
        %p1294 = pneg %p720
        %p1295 = pneg %p744
        %p1296 = pneg %p741
        %p1297 = pneg %p765
        %p1298 = pneg %p762
        %p1299 = pneg %p786
        %p1300 = pneg %p783
        %p1301 = pneg %p807
        %p1302 = pneg %p804
        %p1303 = pneg %p828
        %p1304 = pneg %p825
        %p1305 = pneg %p849
        %p1306 = pneg %p846
        %p1307 = pneg %p870
        %p1308 = pneg %p867
        %p1309 = pneg %p891
        %p1310 = pneg %p888
        %p1311 = pneg %p919
        %p1312 = pneg %p916
        %s1313 = sand.u32 %s906, 1
        %s1314 = scalar_lea.sflag [#allocation5], %s1313
        %s1315 = sand.u32 %s906, 1
        %s1316 = scalar_lea.vmem [#allocation4], %s1315
        %s1317 = smul.u32 8, %s87
        %p1318 = scmp.lt.s32.totalorder %s86, 1
        %s1319 = scalar_select %p1318, %s86, 1
        %p1320 = scmp.lt.s32.totalorder %s1317, 7
        %s1321 = scalar_select %p1320, %s1317, 7
        %s1322 = smul.addr %s1319, 8
        %s1323 = sadd.s32 %s1321, %s1322
        %s1324 = smul.addr %s1323, 8
        %s1325 = scalar_lea.vmem %s1, %s1324
        %s1326 = smul.u32 8, %s87
        %s1327 = smul.u32 8, %s87
        %p1328 = scmp.lt.s32.totalorder %s86, 1
        %s1329 = scalar_select %p1328, %s86, 1
        %p1330 = scmp.lt.s32.totalorder %s1327, 7
        %s1331 = scalar_select %p1330, %s1327, 7
        %s1332 = smul.addr %s1329, 8
        %s1333 = sadd.s32 %s1331, %s1332
        %s1334 = smul.addr %s1333, 8
        %s1335 = scalar_lea.vmem %s3, %s1334
        %s1336 = smul.u32 8, %s87
        %p1337 = scmp.lt.s32.totalorder %s86, 1
        %s1338 = scalar_select %p1337, %s86, 1
        %s1339 = smul.addr %s1338, 8
        %s1340 = scalar_lea.vmem %s5, %s1339
        %p1341 = scmp.lt.s32.totalorder %s88, 1
        %s1342 = scalar_select %p1341, %s88, 1
        %s1343 = scalar_lea.vmem %s7, %s1342
        %p1344 = scmp.lt.s32.totalorder %s88, 1
        %s1345 = scalar_select %p1344, %s88, 1
        %s1346 = scalar_lea.vmem %s9, %s1345
        %p1347 = scmp.lt.s32.totalorder %s88, 1
        %s1348 = scalar_select %p1347, %s88, 1
        %s1349 = scalar_lea.vmem %s11, %s1348
        %p1350 = scmp.lt.s32.totalorder %s88, 1
        %s1351 = scalar_select %p1350, %s88, 1
        %s1352 = scalar_lea.vmem %s13, %s1351
        %p1353 = scmp.lt.s32.totalorder %s88, 1
        %s1354 = scalar_select %p1353, %s88, 1
        %s1355 = scalar_lea.vmem %s15, %s1354
        %p1356 = scmp.lt.s32.totalorder %s88, 1
        %s1357 = scalar_select %p1356, %s88, 1
        %s1358 = scalar_lea.vmem %s17, %s1357
        %p1359 = scmp.lt.s32.totalorder %s88, 1
        %s1360 = scalar_select %p1359, %s88, 1
        %s1361 = smul.addr %s1360, 16
        %s1362 = smul.addr %s1361, 4
        %s1363 = scalar_lea.vmem %s19, %s1362
        %p1364 = scmp.lt.s32.totalorder %s88, 1
        %s1365 = scalar_select %p1364, %s88, 1
        %s1366 = smul.addr %s1365, 8
        %s1367 = smul.addr %s1366, 4
        %s1368 = scalar_lea.vmem %s21, %s1367
        %p1369 = scmp.lt.s32.totalorder %s88, 1
        %s1370 = scalar_select %p1369, %s88, 1
        %s1371 = smul.addr %s1370, 4
        %s1372 = scalar_lea.vmem %s23, %s1371
        %p1373 = scmp.lt.s32.totalorder %s88, 1
        %s1374 = scalar_select %p1373, %s88, 1
        %s1375 = smul.addr %s1374, 16
        %s1376 = smul.addr %s1375, 4
        %s1377 = scalar_lea.vmem %s25, %s1376
        %p1378 = scmp.lt.s32.totalorder %s88, 1
        %s1379 = scalar_select %p1378, %s88, 1
        %s1380 = smul.addr %s1379, 4
        %s1381 = scalar_lea.vmem %s27, %s1380
        %p1382 = scmp.lt.s32.totalorder %s88, 1
        %s1383 = scalar_select %p1382, %s88, 1
        %s1384 = smul.addr %s1383, 16
        %s1385 = smul.addr %s1384, 4
        %s1386 = scalar_lea.vmem %s29, %s1385
        %p1387 = scmp.lt.s32.totalorder %s88, 1
        %s1388 = scalar_select %p1387, %s88, 1
        %s1389 = smul.addr %s1388, 4
        %s1390 = scalar_lea.vmem %s31, %s1389
        %p1391 = scmp.lt.s32.totalorder %s88, 1
        %s1392 = scalar_select %p1391, %s88, 1
        %s1393 = smul.addr %s1392, 4
        %s1394 = smul.addr %s1393, 4
        %s1395 = scalar_lea.vmem %s33, %s1394
        %p1396 = scmp.lt.s32.totalorder %s88, 1
        %s1397 = scalar_select %p1396, %s88, 1
        %s1398 = scalar_lea.vmem %s35, %s1397
        %p1399 = scmp.lt.s32.totalorder %s88, 1
        %s1400 = scalar_select %p1399, %s88, 1
        %s1401 = scalar_lea.vmem %s37, %s1400
        %p1402 = scmp.lt.s32.totalorder %s88, 1
        %s1403 = scalar_select %p1402, %s88, 1
        %s1404 = scalar_lea.vmem %s39, %s1403
        %p1405 = scmp.lt.s32.totalorder %s88, 1
        %s1406 = scalar_select %p1405, %s88, 1
        %s1407 = smul.addr %s1406, 4
        %s1408 = smul.addr %s1407, 4
        %s1409 = scalar_lea.vmem %s41, %s1408
        %p1410 = scmp.lt.s32.totalorder %s88, 1
        %s1411 = scalar_select %p1410, %s88, 1
        %s1412 = scalar_lea.vmem %s43, %s1411
        %p1413 = scmp.lt.s32.totalorder %s88, 1
        %s1414 = scalar_select %p1413, %s88, 1
        %s1415 = smul.addr %s1414, 8
        %s1416 = smul.addr %s1415, 4
        %s1417 = scalar_lea.vmem %s45, %s1416
        %p1418 = scmp.lt.s32.totalorder %s88, 1
        %s1419 = scalar_select %p1418, %s88, 1
        %s1420 = scalar_lea.vmem %s47, %s1419
        %p1422 = scmp.eq.s32.totalorder %s88, 0
        // Predicated region
        $region149: #{tpu_custom_call.1} parent=147 // pred_check
          %p1423 = pneg %p1422
        $region150: #{tpu_custom_call.1} parent=147 // pred_check_branch
          %1425 = sbr.rel (%p1423) target = $region152
        $region151: #{tpu_custom_call.1} parent=147 // pred_region
          %v1426 = vld [vmem:[%s1325] sm:$0xff]
          %v1427 = vld [vmem:[%s1325 + $0x8] sm:$0xff]
          %v1428 = vld [vmem:[%s1325 + $0x10] sm:$0xff]
          %v1429 = vld [vmem:[%s1325 + $0x18] sm:$0xff]
          %v1430 = vld [vmem:[%s1325 + $0x20] sm:$0xff]
          %v1431 = vld [vmem:[%s1325 + $0x28] sm:$0xff]
          %v1432 = vld [vmem:[%s1325 + $0x30] sm:$0xff]
          %v1433 = vld [vmem:[%s1325 + $0x38] sm:$0xff]
          %vm1434 = vcmask 261120
          %1435 = vst.msk [vmem:[#allocation2] sm:$0xff] %vm1434, %v1426
          %1436 = vst.msk [vmem:[#allocation2 + $0x8] sm:$0xff] %vm1434, %v1427
          %1437 = vst.msk [vmem:[#allocation2 + $0x10] sm:$0xff] %vm1434, %v1428
          %1438 = vst.msk [vmem:[#allocation2 + $0x18] sm:$0xff] %vm1434, %v1429
          %1439 = vst.msk [vmem:[#allocation2 + $0x20] sm:$0xff] %vm1434, %v1430
          %1440 = vst.msk [vmem:[#allocation2 + $0x28] sm:$0xff] %vm1434, %v1431
          %1441 = vst.msk [vmem:[#allocation2 + $0x30] sm:$0xff] %vm1434, %v1432
          %1442 = vst.msk [vmem:[#allocation2 + $0x38] sm:$0xff] %vm1434, %v1433
        $region152: #{tpu_custom_call.1} parent=147 // pred_fallthru
          _
        %v1443 = vld [vmem:[#allocation2] sm:$0xff]
        %v1444 = vld [vmem:[#allocation2 + $0x8] sm:$0xff]
        %v1445 = vld [vmem:[#allocation2 + $0x10] sm:$0xff]
        %v1446 = vld [vmem:[#allocation2 + $0x18] sm:$0xff]
        %v1447 = vld [vmem:[#allocation2 + $0x20] sm:$0xff]
        %v1448 = vld [vmem:[#allocation2 + $0x28] sm:$0xff]
        %v1449 = vld [vmem:[#allocation2 + $0x30] sm:$0xff]
        %v1450 = vld [vmem:[#allocation2 + $0x38] sm:$0xff]
        %v1451 = vld [vmem:[%s1335] sm:$0xff]
        %v1452 = vld [vmem:[%s1335 + $0x8] sm:$0xff]
        %v1453 = vld [vmem:[%s1335 + $0x10] sm:$0xff]
        %v1454 = vld [vmem:[%s1335 + $0x18] sm:$0xff]
        %v1455 = vld [vmem:[%s1335 + $0x20] sm:$0xff]
        %v1456 = vld [vmem:[%s1335 + $0x28] sm:$0xff]
        %v1457 = vld [vmem:[%s1335 + $0x30] sm:$0xff]
        %v1458 = vld [vmem:[%s1335 + $0x38] sm:$0xff]
        %v1459 = vld [vmem:[%s1340] sm:$0xff]
        %v1460 = vld [vmem:[%s1343] sm:$0x1]
        %v1461 = vld [vmem:[%s1346] sm:$0x1]
        %v1462 = vld [vmem:[%s1349] sm:$0x1]
        %v1463 = vld [vmem:[%s1352] sm:$0x1]
        %vm1464 = vcmask 261120
        %v1465 = vsel %vm1464, %v1443, 0.0
        %1466 = vadd.xlane.f32.xlu0 %v1465
        %v1467 = vpop.xlane.xlu0 %1466
        %v1468 = vsel %vm1464, %v1444, 0.0
        %1469 = vadd.xlane.f32.xlu0 %v1468
        %v1470 = vpop.xlane.xlu0 %1469
        %v1471 = vsel %vm1464, %v1445, 0.0
        %1472 = vadd.xlane.f32.xlu0 %v1471
        %v1473 = vpop.xlane.xlu0 %1472
        %v1474 = vsel %vm1464, %v1446, 0.0
        %1475 = vadd.xlane.f32.xlu0 %v1474
        %v1476 = vpop.xlane.xlu0 %1475
        %v1477 = vsel %vm1464, %v1447, 0.0
        %1478 = vadd.xlane.f32.xlu0 %v1477
        %v1479 = vpop.xlane.xlu0 %1478
        %v1480 = vsel %vm1464, %v1448, 0.0
        %1481 = vadd.xlane.f32.xlu0 %v1480
        %v1482 = vpop.xlane.xlu0 %1481
        %v1483 = vsel %vm1464, %v1449, 0.0
        %1484 = vadd.xlane.f32.xlu0 %v1483
        %v1485 = vpop.xlane.xlu0 %1484
        %v1486 = vsel %vm1464, %v1450, 0.0
        %1487 = vadd.xlane.f32.xlu0 %v1486
        %v1488 = vpop.xlane.xlu0 %1487
        %vm1489 = vcmask 130048
        %v1490 = vsel %vm1489, %v1451, 0.0
        %1491 = vadd.xlane.f32.xlu0 %v1490
        %v1492 = vpop.xlane.xlu0 %1491
        %v1493 = vsel %vm1489, %v1452, 0.0
        %1494 = vadd.xlane.f32.xlu0 %v1493
        %v1495 = vpop.xlane.xlu0 %1494
        %v1496 = vsel %vm1489, %v1453, 0.0
        %1497 = vadd.xlane.f32.xlu0 %v1496
        %v1498 = vpop.xlane.xlu0 %1497
        %v1499 = vsel %vm1489, %v1454, 0.0
        %1500 = vadd.xlane.f32.xlu0 %v1499
        %v1501 = vpop.xlane.xlu0 %1500
        %v1502 = vsel %vm1489, %v1455, 0.0
        %1503 = vadd.xlane.f32.xlu0 %v1502
        %v1504 = vpop.xlane.xlu0 %1503
        %v1505 = vsel %vm1489, %v1456, 0.0
        %1506 = vadd.xlane.f32.xlu0 %v1505
        %v1507 = vpop.xlane.xlu0 %1506
        %v1508 = vsel %vm1489, %v1457, 0.0
        %1509 = vadd.xlane.f32.xlu0 %v1508
        %v1510 = vpop.xlane.xlu0 %1509
        %v1511 = vsel %vm1489, %v1458, 0.0
        %1512 = vadd.xlane.f32.xlu0 %v1511
        %v1513 = vpop.xlane.xlu0 %1512
        %v1514 = vadd.f32 %v1467, %v1492
        %v1515 = vadd.f32 %v1470, %v1495
        %v1516 = vadd.f32 %v1473, %v1498
        %v1517 = vadd.f32 %v1476, %v1501
        %v1518 = vadd.f32 %v1479, %v1504
        %v1519 = vadd.f32 %v1482, %v1507
        %v1520 = vadd.f32 %v1485, %v1510
        %v1521 = vadd.f32 %v1488, %v1513
        %v1522 = vrcp.pop 48.0
        %v1523 = vmul.f32 48.0, %v1522
        %v1524 = vsub.f32 1.0, %v1523
        %v1525 = vmul.f32 %v1522, %v1524
        %v1526 = vadd.f32 %v1522, %v1525
        %vm1527 = vweird.f32 %v1522
        %v1528 = vsel %vm1527, %v1522, %v1526
        %v1529 = vmul.f32 %v1514, %v1528
        %v1530 = vmul.f32 %v1515, %v1528
        %v1531 = vmul.f32 %v1516, %v1528
        %v1532 = vmul.f32 %v1517, %v1528
        %v1533 = vmul.f32 %v1518, %v1528
        %v1534 = vmul.f32 %v1519, %v1528
        %v1535 = vmul.f32 %v1520, %v1528
        %v1536 = vmul.f32 %v1521, %v1528
        %v1537 = vsub.f32 %v1443, %v1529
        %v1538 = vsub.f32 %v1444, %v1530
        %v1539 = vsub.f32 %v1445, %v1531
        %v1540 = vsub.f32 %v1446, %v1532
        %v1541 = vsub.f32 %v1447, %v1533
        %v1542 = vsub.f32 %v1448, %v1534
        %v1543 = vsub.f32 %v1449, %v1535
        %v1544 = vsub.f32 %v1450, %v1536
        %v1545 = vsub.f32 %v1451, %v1529
        %v1546 = vsub.f32 %v1452, %v1530
        %v1547 = vsub.f32 %v1453, %v1531
        %v1548 = vsub.f32 %v1454, %v1532
        %v1549 = vsub.f32 %v1455, %v1533
        %v1550 = vsub.f32 %v1456, %v1534
        %v1551 = vsub.f32 %v1457, %v1535
        %v1552 = vsub.f32 %v1458, %v1536
        %v1553 = vmul.f32 %v1537, %v1537
        %v1554 = vmul.f32 %v1538, %v1538
        %v1555 = vmul.f32 %v1539, %v1539
        %v1556 = vmul.f32 %v1540, %v1540
        %v1557 = vmul.f32 %v1541, %v1541
        %v1558 = vmul.f32 %v1542, %v1542
        %v1559 = vmul.f32 %v1543, %v1543
        %v1560 = vmul.f32 %v1544, %v1544
        %v1561 = vsel %vm1464, %v1553, 0.0
        %1562 = vadd.xlane.f32.xlu0 %v1561
        %v1563 = vpop.xlane.xlu0 %1562
        %v1564 = vsel %vm1464, %v1554, 0.0
        %1565 = vadd.xlane.f32.xlu0 %v1564
        %v1566 = vpop.xlane.xlu0 %1565
        %v1567 = vsel %vm1464, %v1555, 0.0
        %1568 = vadd.xlane.f32.xlu0 %v1567
        %v1569 = vpop.xlane.xlu0 %1568
        %v1570 = vsel %vm1464, %v1556, 0.0
        %1571 = vadd.xlane.f32.xlu0 %v1570
        %v1572 = vpop.xlane.xlu0 %1571
        %v1573 = vsel %vm1464, %v1557, 0.0
        %1574 = vadd.xlane.f32.xlu0 %v1573
        %v1575 = vpop.xlane.xlu0 %1574
        %v1576 = vsel %vm1464, %v1558, 0.0
        %1577 = vadd.xlane.f32.xlu0 %v1576
        %v1578 = vpop.xlane.xlu0 %1577
        %v1579 = vsel %vm1464, %v1559, 0.0
        %1580 = vadd.xlane.f32.xlu0 %v1579
        %v1581 = vpop.xlane.xlu0 %1580
        %v1582 = vsel %vm1464, %v1560, 0.0
        %1583 = vadd.xlane.f32.xlu0 %v1582
        %v1584 = vpop.xlane.xlu0 %1583
        %v1585 = vmul.f32 %v1545, %v1545
        %v1586 = vmul.f32 %v1546, %v1546
        %v1587 = vmul.f32 %v1547, %v1547
        %v1588 = vmul.f32 %v1548, %v1548
        %v1589 = vmul.f32 %v1549, %v1549
        %v1590 = vmul.f32 %v1550, %v1550
        %v1591 = vmul.f32 %v1551, %v1551
        %v1592 = vmul.f32 %v1552, %v1552
        %v1593 = vsel %vm1489, %v1585, 0.0
        %1594 = vadd.xlane.f32.xlu0 %v1593
        %v1595 = vpop.xlane.xlu0 %1594
        %v1596 = vsel %vm1489, %v1586, 0.0
        %1597 = vadd.xlane.f32.xlu0 %v1596
        %v1598 = vpop.xlane.xlu0 %1597
        %v1599 = vsel %vm1489, %v1587, 0.0
        %1600 = vadd.xlane.f32.xlu0 %v1599
        %v1601 = vpop.xlane.xlu0 %1600
        %v1602 = vsel %vm1489, %v1588, 0.0
        %1603 = vadd.xlane.f32.xlu0 %v1602
        %v1604 = vpop.xlane.xlu0 %1603
        %v1605 = vsel %vm1489, %v1589, 0.0
        %1606 = vadd.xlane.f32.xlu0 %v1605
        %v1607 = vpop.xlane.xlu0 %1606
        %v1608 = vsel %vm1489, %v1590, 0.0
        %1609 = vadd.xlane.f32.xlu0 %v1608
        %v1610 = vpop.xlane.xlu0 %1609
        %v1611 = vsel %vm1489, %v1591, 0.0
        %1612 = vadd.xlane.f32.xlu0 %v1611
        %v1613 = vpop.xlane.xlu0 %1612
        %v1614 = vsel %vm1489, %v1592, 0.0
        %1615 = vadd.xlane.f32.xlu0 %v1614
        %v1616 = vpop.xlane.xlu0 %1615
        %v1617 = vadd.f32 %v1563, %v1595
        %v1618 = vadd.f32 %v1566, %v1598
        %v1619 = vadd.f32 %v1569, %v1601
        %v1620 = vadd.f32 %v1572, %v1604
        %v1621 = vadd.f32 %v1575, %v1607
        %v1622 = vadd.f32 %v1578, %v1610
        %v1623 = vadd.f32 %v1581, %v1613
        %v1624 = vadd.f32 %v1584, %v1616
        %v1625 = vmul.f32 %v1617, %v1528
        %v1626 = vmul.f32 %v1618, %v1528
        %v1627 = vmul.f32 %v1619, %v1528
        %v1628 = vmul.f32 %v1620, %v1528
        %v1629 = vmul.f32 %v1621, %v1528
        %v1630 = vmul.f32 %v1622, %v1528
        %v1631 = vmul.f32 %v1623, %v1528
        %v1632 = vmul.f32 %v1624, %v1528
        %v1633 = vadd.f32 %v1625, 1e-06
        %v1634 = vadd.f32 %v1626, 1e-06
        %v1635 = vadd.f32 %v1627, 1e-06
        %v1636 = vadd.f32 %v1628, 1e-06
        %v1637 = vadd.f32 %v1629, 1e-06
        %v1638 = vadd.f32 %v1630, 1e-06
        %v1639 = vadd.f32 %v1631, 1e-06
        %v1640 = vadd.f32 %v1632, 1e-06
        %v1641 = vrsqrt.pop %v1633
        %v1642 = vmul.f32 %v1641, %v1633
        %v1643 = vmul.f32 %v1642, %v1641
        %v1644 = vmul.f32 0.5, %v1643
        %v1645 = vsub.f32 1.5, %v1644
        %v1646 = vmul.f32 %v1641, %v1645
        %vm1647 = vweird.f32 %v1633
        %vm1648 = vweird.f32 %v1641
        %vm1649 = vmor %vm1647, %vm1648
        %v1650 = vsel %vm1649, %v1641, %v1646
        %v1651 = vrsqrt.pop %v1634
        %v1652 = vmul.f32 %v1651, %v1634
        %v1653 = vmul.f32 %v1652, %v1651
        %v1654 = vmul.f32 0.5, %v1653
        %v1655 = vsub.f32 1.5, %v1654
        %v1656 = vmul.f32 %v1651, %v1655
        %vm1657 = vweird.f32 %v1634
        %vm1658 = vweird.f32 %v1651
        %vm1659 = vmor %vm1657, %vm1658
        %v1660 = vsel %vm1659, %v1651, %v1656
        %v1661 = vrsqrt.pop %v1635
        %v1662 = vmul.f32 %v1661, %v1635
        %v1663 = vmul.f32 %v1662, %v1661
        %v1664 = vmul.f32 0.5, %v1663
        %v1665 = vsub.f32 1.5, %v1664
        %v1666 = vmul.f32 %v1661, %v1665
        %vm1667 = vweird.f32 %v1635
        %vm1668 = vweird.f32 %v1661
        %vm1669 = vmor %vm1667, %vm1668
        %v1670 = vsel %vm1669, %v1661, %v1666
        %v1671 = vrsqrt.pop %v1636
        %v1672 = vmul.f32 %v1671, %v1636
        %v1673 = vmul.f32 %v1672, %v1671
        %v1674 = vmul.f32 0.5, %v1673
        %v1675 = vsub.f32 1.5, %v1674
        %v1676 = vmul.f32 %v1671, %v1675
        %vm1677 = vweird.f32 %v1636
        %vm1678 = vweird.f32 %v1671
        %vm1679 = vmor %vm1677, %vm1678
        %v1680 = vsel %vm1679, %v1671, %v1676
        %v1681 = vrsqrt.pop %v1637
        %v1682 = vmul.f32 %v1681, %v1637
        %v1683 = vmul.f32 %v1682, %v1681
        %v1684 = vmul.f32 0.5, %v1683
        %v1685 = vsub.f32 1.5, %v1684
        %v1686 = vmul.f32 %v1681, %v1685
        %vm1687 = vweird.f32 %v1637
        %vm1688 = vweird.f32 %v1681
        %vm1689 = vmor %vm1687, %vm1688
        %v1690 = vsel %vm1689, %v1681, %v1686
        %v1691 = vrsqrt.pop %v1638
        %v1692 = vmul.f32 %v1691, %v1638
        %v1693 = vmul.f32 %v1692, %v1691
        %v1694 = vmul.f32 0.5, %v1693
        %v1695 = vsub.f32 1.5, %v1694
        %v1696 = vmul.f32 %v1691, %v1695
        %vm1697 = vweird.f32 %v1638
        %vm1698 = vweird.f32 %v1691
        %vm1699 = vmor %vm1697, %vm1698
        %v1700 = vsel %vm1699, %v1691, %v1696
        %v1701 = vrsqrt.pop %v1639
        %v1702 = vmul.f32 %v1701, %v1639
        %v1703 = vmul.f32 %v1702, %v1701
        %v1704 = vmul.f32 0.5, %v1703
        %v1705 = vsub.f32 1.5, %v1704
        %v1706 = vmul.f32 %v1701, %v1705
        %vm1707 = vweird.f32 %v1639
        %vm1708 = vweird.f32 %v1701
        %vm1709 = vmor %vm1707, %vm1708
        %v1710 = vsel %vm1709, %v1701, %v1706
        %v1711 = vrsqrt.pop %v1640
        %v1712 = vmul.f32 %v1711, %v1640
        %v1713 = vmul.f32 %v1712, %v1711
        %v1714 = vmul.f32 0.5, %v1713
        %v1715 = vsub.f32 1.5, %v1714
        %v1716 = vmul.f32 %v1711, %v1715
        %vm1717 = vweird.f32 %v1640
        %vm1718 = vweird.f32 %v1711
        %vm1719 = vmor %vm1717, %vm1718
        %v1720 = vsel %vm1719, %v1711, %v1716
        %v1721 = vmul.f32 %v1537, %v1650
        %v1722 = vmul.f32 %v1538, %v1660
        %v1723 = vmul.f32 %v1539, %v1670
        %v1724 = vmul.f32 %v1540, %v1680
        %v1725 = vmul.f32 %v1541, %v1690
        %v1726 = vmul.f32 %v1542, %v1700
        %v1727 = vmul.f32 %v1543, %v1710
        %v1728 = vmul.f32 %v1544, %v1720
        %v1730 = vperm.slane %v1460, 0
        %v1732 = vmul.f32 %v1721, %v1730
        %v1733 = vmul.f32 %v1722, %v1730
        %v1734 = vmul.f32 %v1723, %v1730
        %v1735 = vmul.f32 %v1724, %v1730
        %v1736 = vmul.f32 %v1725, %v1730
        %v1737 = vmul.f32 %v1726, %v1730
        %v1738 = vmul.f32 %v1727, %v1730
        %v1739 = vmul.f32 %v1728, %v1730
        %v1741 = vperm.slane %v1461, 0
        %v1743 = vadd.f32 %v1732, %v1741
        %v1744 = vadd.f32 %v1733, %v1741
        %v1745 = vadd.f32 %v1734, %v1741
        %v1746 = vadd.f32 %v1735, %v1741
        %v1747 = vadd.f32 %v1736, %v1741
        %v1748 = vadd.f32 %v1737, %v1741
        %v1749 = vadd.f32 %v1738, %v1741
        %v1750 = vadd.f32 %v1739, %v1741
        %v1751 = vmul.f32 %v1545, %v1650
        %v1752 = vmul.f32 %v1546, %v1660
        %v1753 = vmul.f32 %v1547, %v1670
        %v1754 = vmul.f32 %v1548, %v1680
        %v1755 = vmul.f32 %v1549, %v1690
        %v1756 = vmul.f32 %v1550, %v1700
        %v1757 = vmul.f32 %v1551, %v1710
        %v1758 = vmul.f32 %v1552, %v1720
        %v1760 = vperm.slane %v1462, 0
        %v1762 = vmul.f32 %v1751, %v1760
        %v1763 = vmul.f32 %v1752, %v1760
        %v1764 = vmul.f32 %v1753, %v1760
        %v1765 = vmul.f32 %v1754, %v1760
        %v1766 = vmul.f32 %v1755, %v1760
        %v1767 = vmul.f32 %v1756, %v1760
        %v1768 = vmul.f32 %v1757, %v1760
        %v1769 = vmul.f32 %v1758, %v1760
        %v1771 = vperm.slane %v1463, 0
        %v1773 = vadd.f32 %v1762, %v1771
        %v1774 = vadd.f32 %v1763, %v1771
        %v1775 = vadd.f32 %v1764, %v1771
        %v1776 = vadd.f32 %v1765, %v1771
        %v1777 = vadd.f32 %v1766, %v1771
        %v1778 = vadd.f32 %v1767, %v1771
        %v1779 = vadd.f32 %v1768, %v1771
        %v1780 = vadd.f32 %v1769, %v1771
        %v1781 = vld [vmem:[%s1355] sm:$0x1]
        %v1782 = vld [vmem:[%s1358] sm:$0x1]
        %v1783 = vsel %vm1464, %v1459, 0.0
        %1784 = vadd.xlane.f32.xlu0 %v1783
        %v1785 = vpop.xlane.xlu0 %1784
        %v1786 = vrcp.pop 32.0
        %v1787 = vmul.f32 32.0, %v1786
        %v1788 = vsub.f32 1.0, %v1787
        %v1789 = vmul.f32 %v1786, %v1788
        %v1790 = vadd.f32 %v1786, %v1789
        %vm1791 = vweird.f32 %v1786
        %v1792 = vsel %vm1791, %v1786, %v1790
        %v1793 = vmul.f32 %v1785, %v1792
        %v1794 = vsub.f32 %v1459, %v1793
        %v1795 = vmul.f32 %v1794, %v1794
        %v1796 = vsel %vm1464, %v1795, 0.0
        %1797 = vadd.xlane.f32.xlu0 %v1796
        %v1798 = vpop.xlane.xlu0 %1797
        %v1799 = vmul.f32 %v1798, %v1792
        %v1800 = vadd.f32 %v1799, 1e-06
        %v1801 = vrsqrt.pop %v1800
        %v1802 = vmul.f32 %v1801, %v1800
        %v1803 = vmul.f32 %v1802, %v1801
        %v1804 = vmul.f32 0.5, %v1803
        %v1805 = vsub.f32 1.5, %v1804
        %v1806 = vmul.f32 %v1801, %v1805
        %vm1807 = vweird.f32 %v1800
        %vm1808 = vweird.f32 %v1801
        %vm1809 = vmor %vm1807, %vm1808
        %v1810 = vsel %vm1809, %v1801, %v1806
        %v1811 = vmul.f32 %v1794, %v1810
        %v1813 = vperm.slane %v1781, 0
        %v1815 = vmul.f32 %v1811, %v1813
        %v1817 = vperm.slane %v1782, 0
        %v1819 = vadd.f32 %v1815, %v1817
        %v1820 = vpack.c.bf16 %v1743, %v1743
        %v1821 = vpack.c.bf16 %v1744, %v1744
        %v1822 = vpack.c.bf16 %v1745, %v1745
        %v1823 = vpack.c.bf16 %v1746, %v1746
        %v1824 = vpack.c.bf16 %v1747, %v1747
        %v1825 = vpack.c.bf16 %v1748, %v1748
        %v1826 = vpack.c.bf16 %v1749, %v1749
        %v1827 = vpack.c.bf16 %v1750, %v1750
        %v1828 = vpack.c.bf16 %v1773, %v1773
        %v1829 = vpack.c.bf16 %v1774, %v1774
        %v1830 = vpack.c.bf16 %v1775, %v1775
        %v1831 = vpack.c.bf16 %v1776, %v1776
        %v1832 = vpack.c.bf16 %v1777, %v1777
        %v1833 = vpack.c.bf16 %v1778, %v1778
        %v1834 = vpack.c.bf16 %v1779, %v1779
        %v1835 = vpack.c.bf16 %v1780, %v1780
        %v1836 = vpack.c.bf16 %v1819, %v1819
        %v1837 = vld [vmem:[%s1363] sm:$0xf]
        %v1838 = vld [vmem:[%s1363 + $0x4] sm:$0xf]
        %v1839 = vld [vmem:[%s1363 + $0x8] sm:$0xf]
        %v1840 = vld [vmem:[%s1363 + $0xc] sm:$0xf]
        %v1841 = vld [vmem:[%s1363 + $0x10] sm:$0xf]
        %v1842 = vld [vmem:[%s1363 + $0x14] sm:$0xf]
        %v1843 = vld [vmem:[%s1363 + $0x18] sm:$0xf]
        %v1844 = vld [vmem:[%s1363 + $0x1c] sm:$0xf]
        %v1845 = vld [vmem:[%s1363 + $0x20] sm:$0xf]
        %v1846 = vld [vmem:[%s1363 + $0x24] sm:$0xf]
        %v1847 = vld [vmem:[%s1363 + $0x28] sm:$0xf]
        %v1848 = vld [vmem:[%s1363 + $0x2c] sm:$0xf]
        %v1849 = vld [vmem:[%s1363 + $0x30] sm:$0xf]
        %v1850 = vld [vmem:[%s1363 + $0x34] sm:$0xf]
        %v1851 = vld [vmem:[%s1363 + $0x38] sm:$0xf]
        %v1852 = vld [vmem:[%s1363 + $0x3c] sm:$0xf]
        %v1853 = vld [vmem:[%s1368] sm:$0xf]
        %v1854 = vld [vmem:[%s1368 + $0x4] sm:$0xf]
        %v1855 = vld [vmem:[%s1368 + $0x8] sm:$0xf]
        %v1856 = vld [vmem:[%s1368 + $0xc] sm:$0xf]
        %v1857 = vld [vmem:[%s1368 + $0x10] sm:$0xf]
        %v1858 = vld [vmem:[%s1368 + $0x14] sm:$0xf]
        %v1859 = vld [vmem:[%s1368 + $0x18] sm:$0xf]
        %v1860 = vld [vmem:[%s1368 + $0x1c] sm:$0xf]
        %v1869 = vunpack.c.l.b16 %v1828
        %v1870 = vunpack.c.l.b16 %v1829
        %v1871 = vunpack.c.l.b16 %v1830
        %v1872 = vunpack.c.l.b16 %v1831
        %v1873 = vunpack.c.l.b16 %v1832
        %v1874 = vunpack.c.l.b16 %v1833
        %v1875 = vunpack.c.l.b16 %v1834
        %v1876 = vunpack.c.l.b16 %v1835
        %v1877 = vpack.c.b16 %v1870, %v1869
        %v1878 = vpack.c.b16 %v1872, %v1871
        %v1879 = vpack.c.b16 %v1874, %v1873
        %v1880 = vpack.c.b16 %v1876, %v1875
        %v1883 = vunpack.c.l.b16 %v1853
        %v1884 = vunpack.c.l.b16 %v1854
        %v1885 = vpack.c.b16 %v1884, %v1883
        %v1888 = vsel %vm1489, %v1877, 0
        %v1891 = vsel %vm1489, %v1878, 0
        %v1894 = vsel %vm1489, %v1879, 0
        %v1897 = vsel %vm1489, %v1880, 0
        %1899 = vmatpush.bf16.msra.mxu0 0
        %1900 = vmatpush.bf16.msra.mxu0 0
        %1901 = vmatpush.bf16.msra.mxu0 0
        %1902 = vmatpush.bf16.msra.mxu0 0
        %1903 = vmatpush.bf16.msra.mxu0 0
        %1904 = vmatpush.bf16.msra.mxu0 0
        %1905 = vmatpush.bf16.msra.mxu0 0
        %1906 = vmatpush.bf16.msra.mxu0 %v1885
        %1907 = vmatmul.bf16.gmra.mxu0 %v1888
        %v1908 = vpop.f32.mrf.mxu0
        %v1909 = vadd.f32 0.0, %v1908
        %v1910 = vpop.f32.mrf.mxu0
        %v1911 = vadd.f32 0.0, %v1910
        %1912 = vmatmul.bf16.gmra.mxu0 %v1891
        %v1913 = vpop.f32.mrf.mxu0
        %v1914 = vadd.f32 0.0, %v1913
        %v1915 = vpop.f32.mrf.mxu0
        %v1916 = vadd.f32 0.0, %v1915
        %1917 = vmatmul.bf16.gmra.mxu0 %v1894
        %v1918 = vpop.f32.mrf.mxu0
        %v1919 = vadd.f32 0.0, %v1918
        %v1920 = vpop.f32.mrf.mxu0
        %v1921 = vadd.f32 0.0, %v1920
        %1922 = vmatmul.bf16.gmra.mxu0 %v1897
        %v1923 = vpop.f32.mrf.mxu0
        %v1924 = vadd.f32 0.0, %v1923
        %v1925 = vpop.f32.mrf.mxu0
        %v1926 = vadd.f32 0.0, %v1925
        %1927 = vdwg.mxu0
        %v1930 = vunpack.c.l.b16 %v1855
        %v1931 = vunpack.c.l.b16 %v1856
        %v1932 = vpack.c.b16 %v1931, %v1930
        %1934 = vmatpush.bf16.msra.mxu0 0
        %1935 = vmatpush.bf16.msra.mxu0 0
        %1936 = vmatpush.bf16.msra.mxu0 0
        %1937 = vmatpush.bf16.msra.mxu0 0
        %1938 = vmatpush.bf16.msra.mxu0 0
        %1939 = vmatpush.bf16.msra.mxu0 0
        %1940 = vmatpush.bf16.msra.mxu0 0
        %1941 = vmatpush.bf16.msra.mxu0 %v1932
        %1942 = vmatmul.bf16.gmra.mxu0 %v1888
        %v1943 = vpop.f32.mrf.mxu0
        %v1944 = vadd.f32 0.0, %v1943
        %v1945 = vpop.f32.mrf.mxu0
        %v1946 = vadd.f32 0.0, %v1945
        %1947 = vmatmul.bf16.gmra.mxu0 %v1891
        %v1948 = vpop.f32.mrf.mxu0
        %v1949 = vadd.f32 0.0, %v1948
        %v1950 = vpop.f32.mrf.mxu0
        %v1951 = vadd.f32 0.0, %v1950
        %1952 = vmatmul.bf16.gmra.mxu0 %v1894
        %v1953 = vpop.f32.mrf.mxu0
        %v1954 = vadd.f32 0.0, %v1953
        %v1955 = vpop.f32.mrf.mxu0
        %v1956 = vadd.f32 0.0, %v1955
        %1957 = vmatmul.bf16.gmra.mxu0 %v1897
        %v1958 = vpop.f32.mrf.mxu0
        %v1959 = vadd.f32 0.0, %v1958
        %v1960 = vpop.f32.mrf.mxu0
        %v1961 = vadd.f32 0.0, %v1960
        %1962 = vdwg.mxu0
        %v1965 = vunpack.c.l.b16 %v1857
        %v1966 = vunpack.c.l.b16 %v1858
        %v1967 = vpack.c.b16 %v1966, %v1965
        %1969 = vmatpush.bf16.msra.mxu0 0
        %1970 = vmatpush.bf16.msra.mxu0 0
        %1971 = vmatpush.bf16.msra.mxu0 0
        %1972 = vmatpush.bf16.msra.mxu0 0
        %1973 = vmatpush.bf16.msra.mxu0 0
        %1974 = vmatpush.bf16.msra.mxu0 0
        %1975 = vmatpush.bf16.msra.mxu0 0
        %1976 = vmatpush.bf16.msra.mxu0 %v1967
        %1977 = vmatmul.bf16.gmra.mxu0 %v1888
        %v1978 = vpop.f32.mrf.mxu0
        %v1979 = vadd.f32 0.0, %v1978
        %v1980 = vpop.f32.mrf.mxu0
        %v1981 = vadd.f32 0.0, %v1980
        %1982 = vmatmul.bf16.gmra.mxu0 %v1891
        %v1983 = vpop.f32.mrf.mxu0
        %v1984 = vadd.f32 0.0, %v1983
        %v1985 = vpop.f32.mrf.mxu0
        %v1986 = vadd.f32 0.0, %v1985
        %1987 = vmatmul.bf16.gmra.mxu0 %v1894
        %v1988 = vpop.f32.mrf.mxu0
        %v1989 = vadd.f32 0.0, %v1988
        %v1990 = vpop.f32.mrf.mxu0
        %v1991 = vadd.f32 0.0, %v1990
        %1992 = vmatmul.bf16.gmra.mxu0 %v1897
        %v1993 = vpop.f32.mrf.mxu0
        %v1994 = vadd.f32 0.0, %v1993
        %v1995 = vpop.f32.mrf.mxu0
        %v1996 = vadd.f32 0.0, %v1995
        %1997 = vdwg.mxu0
        %v2000 = vunpack.c.l.b16 %v1859
        %v2001 = vunpack.c.l.b16 %v1860
        %v2002 = vpack.c.b16 %v2001, %v2000
        %2004 = vmatpush.bf16.msra.mxu0 0
        %2005 = vmatpush.bf16.msra.mxu0 0
        %2006 = vmatpush.bf16.msra.mxu0 0
        %2007 = vmatpush.bf16.msra.mxu0 0
        %2008 = vmatpush.bf16.msra.mxu0 0
        %2009 = vmatpush.bf16.msra.mxu0 0
        %2010 = vmatpush.bf16.msra.mxu0 0
        %2011 = vmatpush.bf16.msra.mxu0 %v2002
        %2012 = vmatmul.bf16.gmra.mxu0 %v1888
        %v2013 = vpop.f32.mrf.mxu0
        %v2014 = vadd.f32 0.0, %v2013
        %v2015 = vpop.f32.mrf.mxu0
        %v2016 = vadd.f32 0.0, %v2015
        %2017 = vmatmul.bf16.gmra.mxu0 %v1891
        %v2018 = vpop.f32.mrf.mxu0
        %v2019 = vadd.f32 0.0, %v2018
        %v2020 = vpop.f32.mrf.mxu0
        %v2021 = vadd.f32 0.0, %v2020
        %2022 = vmatmul.bf16.gmra.mxu0 %v1894
        %v2023 = vpop.f32.mrf.mxu0
        %v2024 = vadd.f32 0.0, %v2023
        %v2025 = vpop.f32.mrf.mxu0
        %v2026 = vadd.f32 0.0, %v2025
        %2027 = vmatmul.bf16.gmra.mxu0 %v1897
        %v2028 = vpop.f32.mrf.mxu0
        %v2029 = vadd.f32 0.0, %v2028
        %v2030 = vpop.f32.mrf.mxu0
        %v2031 = vadd.f32 0.0, %v2030
        %2032 = vdwg.mxu0
        %v2041 = vunpack.c.l.b16 %v1820
        %v2042 = vunpack.c.l.b16 %v1821
        %v2043 = vunpack.c.l.b16 %v1822
        %v2044 = vunpack.c.l.b16 %v1823
        %v2045 = vunpack.c.l.b16 %v1824
        %v2046 = vunpack.c.l.b16 %v1825
        %v2047 = vunpack.c.l.b16 %v1826
        %v2048 = vunpack.c.l.b16 %v1827
        %v2049 = vpack.c.b16 %v2042, %v2041
        %v2050 = vpack.c.b16 %v2044, %v2043
        %v2051 = vpack.c.b16 %v2046, %v2045
        %v2052 = vpack.c.b16 %v2048, %v2047
        %v2057 = vunpack.c.l.b16 %v1837
        %v2058 = vunpack.c.l.b16 %v1838
        %v2059 = vunpack.c.l.b16 %v1839
        %v2060 = vunpack.c.l.b16 %v1840
        %v2061 = vpack.c.b16 %v2058, %v2057
        %v2062 = vpack.c.b16 %v2060, %v2059
        %v2066 = vsel %vm1464, %v2049, 0
        %v2069 = vsel %vm1464, %v2050, 0
        %v2072 = vsel %vm1464, %v2051, 0
        %v2075 = vsel %vm1464, %v2052, 0
        %2077 = vmatpush.bf16.msra.mxu0 0
        %2078 = vmatpush.bf16.msra.mxu0 0
        %2079 = vmatpush.bf16.msra.mxu0 0
        %2080 = vmatpush.bf16.msra.mxu0 0
        %2081 = vmatpush.bf16.msra.mxu0 0
        %2082 = vmatpush.bf16.msra.mxu0 0
        %2083 = vmatpush.bf16.msra.mxu0 %v2062
        %2084 = vmatpush.bf16.msra.mxu0 %v2061
        %2085 = vmatmul.bf16.gmra.mxu0 %v2066
        %v2086 = vpop.f32.mrf.mxu0
        %v2087 = vadd.f32 %v1909, %v2086
        %v2088 = vpop.f32.mrf.mxu0
        %v2089 = vadd.f32 %v1911, %v2088
        %2090 = vmatmul.bf16.gmra.mxu0 %v2069
        %v2091 = vpop.f32.mrf.mxu0
        %v2092 = vadd.f32 %v1914, %v2091
        %v2093 = vpop.f32.mrf.mxu0
        %v2094 = vadd.f32 %v1916, %v2093
        %2095 = vmatmul.bf16.gmra.mxu0 %v2072
        %v2096 = vpop.f32.mrf.mxu0
        %v2097 = vadd.f32 %v1919, %v2096
        %v2098 = vpop.f32.mrf.mxu0
        %v2099 = vadd.f32 %v1921, %v2098
        %2100 = vmatmul.bf16.gmra.mxu0 %v2075
        %v2101 = vpop.f32.mrf.mxu0
        %v2102 = vadd.f32 %v1924, %v2101
        %v2103 = vpop.f32.mrf.mxu0
        %v2104 = vadd.f32 %v1926, %v2103
        %2105 = vdwg.mxu0
        %v2110 = vunpack.c.l.b16 %v1841
        %v2111 = vunpack.c.l.b16 %v1842
        %v2112 = vunpack.c.l.b16 %v1843
        %v2113 = vunpack.c.l.b16 %v1844
        %v2114 = vpack.c.b16 %v2111, %v2110
        %v2115 = vpack.c.b16 %v2113, %v2112
        %2118 = vmatpush.bf16.msra.mxu0 0
        %2119 = vmatpush.bf16.msra.mxu0 0
        %2120 = vmatpush.bf16.msra.mxu0 0
        %2121 = vmatpush.bf16.msra.mxu0 0
        %2122 = vmatpush.bf16.msra.mxu0 0
        %2123 = vmatpush.bf16.msra.mxu0 0
        %2124 = vmatpush.bf16.msra.mxu0 %v2115
        %2125 = vmatpush.bf16.msra.mxu0 %v2114
        %2126 = vmatmul.bf16.gmra.mxu0 %v2066
        %v2127 = vpop.f32.mrf.mxu0
        %v2128 = vadd.f32 %v1944, %v2127
        %v2129 = vpop.f32.mrf.mxu0
        %v2130 = vadd.f32 %v1946, %v2129
        %2131 = vmatmul.bf16.gmra.mxu0 %v2069
        %v2132 = vpop.f32.mrf.mxu0
        %v2133 = vadd.f32 %v1949, %v2132
        %v2134 = vpop.f32.mrf.mxu0
        %v2135 = vadd.f32 %v1951, %v2134
        %2136 = vmatmul.bf16.gmra.mxu0 %v2072
        %v2137 = vpop.f32.mrf.mxu0
        %v2138 = vadd.f32 %v1954, %v2137
        %v2139 = vpop.f32.mrf.mxu0
        %v2140 = vadd.f32 %v1956, %v2139
        %2141 = vmatmul.bf16.gmra.mxu0 %v2075
        %v2142 = vpop.f32.mrf.mxu0
        %v2143 = vadd.f32 %v1959, %v2142
        %v2144 = vpop.f32.mrf.mxu0
        %v2145 = vadd.f32 %v1961, %v2144
        %2146 = vdwg.mxu0
        %v2151 = vunpack.c.l.b16 %v1845
        %v2152 = vunpack.c.l.b16 %v1846
        %v2153 = vunpack.c.l.b16 %v1847
        %v2154 = vunpack.c.l.b16 %v1848
        %v2155 = vpack.c.b16 %v2152, %v2151
        %v2156 = vpack.c.b16 %v2154, %v2153
        %2159 = vmatpush.bf16.msra.mxu0 0
        %2160 = vmatpush.bf16.msra.mxu0 0
        %2161 = vmatpush.bf16.msra.mxu0 0
        %2162 = vmatpush.bf16.msra.mxu0 0
        %2163 = vmatpush.bf16.msra.mxu0 0
        %2164 = vmatpush.bf16.msra.mxu0 0
        %2165 = vmatpush.bf16.msra.mxu0 %v2156
        %2166 = vmatpush.bf16.msra.mxu0 %v2155
        %2167 = vmatmul.bf16.gmra.mxu0 %v2066
        %v2168 = vpop.f32.mrf.mxu0
        %v2169 = vadd.f32 %v1979, %v2168
        %v2170 = vpop.f32.mrf.mxu0
        %v2171 = vadd.f32 %v1981, %v2170
        %2172 = vmatmul.bf16.gmra.mxu0 %v2069
        %v2173 = vpop.f32.mrf.mxu0
        %v2174 = vadd.f32 %v1984, %v2173
        %v2175 = vpop.f32.mrf.mxu0
        %v2176 = vadd.f32 %v1986, %v2175
        %2177 = vmatmul.bf16.gmra.mxu0 %v2072
        %v2178 = vpop.f32.mrf.mxu0
        %v2179 = vadd.f32 %v1989, %v2178
        %v2180 = vpop.f32.mrf.mxu0
        %v2181 = vadd.f32 %v1991, %v2180
        %2182 = vmatmul.bf16.gmra.mxu0 %v2075
        %v2183 = vpop.f32.mrf.mxu0
        %v2184 = vadd.f32 %v1994, %v2183
        %v2185 = vpop.f32.mrf.mxu0
        %v2186 = vadd.f32 %v1996, %v2185
        %2187 = vdwg.mxu0
        %v2192 = vunpack.c.l.b16 %v1849
        %v2193 = vunpack.c.l.b16 %v1850
        %v2194 = vunpack.c.l.b16 %v1851
        %v2195 = vunpack.c.l.b16 %v1852
        %v2196 = vpack.c.b16 %v2193, %v2192
        %v2197 = vpack.c.b16 %v2195, %v2194
        %2200 = vmatpush.bf16.msra.mxu0 0
        %2201 = vmatpush.bf16.msra.mxu0 0
        %2202 = vmatpush.bf16.msra.mxu0 0
        %2203 = vmatpush.bf16.msra.mxu0 0
        %2204 = vmatpush.bf16.msra.mxu0 0
        %2205 = vmatpush.bf16.msra.mxu0 0
        %2206 = vmatpush.bf16.msra.mxu0 %v2197
        %2207 = vmatpush.bf16.msra.mxu0 %v2196
        %2208 = vmatmul.bf16.gmra.mxu0 %v2066
        %v2209 = vpop.f32.mrf.mxu0
        %v2210 = vadd.f32 %v2014, %v2209
        %v2211 = vpop.f32.mrf.mxu0
        %v2212 = vadd.f32 %v2016, %v2211
        %2213 = vmatmul.bf16.gmra.mxu0 %v2069
        %v2214 = vpop.f32.mrf.mxu0
        %v2215 = vadd.f32 %v2019, %v2214
        %v2216 = vpop.f32.mrf.mxu0
        %v2217 = vadd.f32 %v2021, %v2216
        %2218 = vmatmul.bf16.gmra.mxu0 %v2072
        %v2219 = vpop.f32.mrf.mxu0
        %v2220 = vadd.f32 %v2024, %v2219
        %v2221 = vpop.f32.mrf.mxu0
        %v2222 = vadd.f32 %v2026, %v2221
        %2223 = vmatmul.bf16.gmra.mxu0 %v2075
        %v2224 = vpop.f32.mrf.mxu0
        %v2225 = vadd.f32 %v2029, %v2224
        %v2226 = vpop.f32.mrf.mxu0
        %v2227 = vadd.f32 %v2031, %v2226
        %2228 = vdwg.mxu0
        %v2229 = vld [vmem:[%s1372] sm:$0x1]
        %v2230 = vld [vmem:[%s1372 + $0x1] sm:$0x1]
        %v2231 = vld [vmem:[%s1372 + $0x2] sm:$0x1]
        %v2232 = vld [vmem:[%s1372 + $0x3] sm:$0x1]
        %v2237 = vperm.slane %v2229, 0
        %v2238 = vperm.slane %v2230, 0
        %v2239 = vperm.slane %v2231, 0
        %v2240 = vperm.slane %v2232, 0
        %v2245 = vadd.f32 %v2087, %v2237
        %v2246 = vadd.f32 %v2089, %v2237
        %v2247 = vadd.f32 %v2092, %v2237
        %v2248 = vadd.f32 %v2094, %v2237
        %v2249 = vadd.f32 %v2097, %v2237
        %v2250 = vadd.f32 %v2099, %v2237
        %v2251 = vadd.f32 %v2102, %v2237
        %v2252 = vadd.f32 %v2104, %v2237
        %v2253 = vadd.f32 %v2128, %v2238
        %v2254 = vadd.f32 %v2130, %v2238
        %v2255 = vadd.f32 %v2133, %v2238
        %v2256 = vadd.f32 %v2135, %v2238
        %v2257 = vadd.f32 %v2138, %v2238
        %v2258 = vadd.f32 %v2140, %v2238
        %v2259 = vadd.f32 %v2143, %v2238
        %v2260 = vadd.f32 %v2145, %v2238
        %v2261 = vadd.f32 %v2169, %v2239
        %v2262 = vadd.f32 %v2171, %v2239
        %v2263 = vadd.f32 %v2174, %v2239
        %v2264 = vadd.f32 %v2176, %v2239
        %v2265 = vadd.f32 %v2179, %v2239
        %v2266 = vadd.f32 %v2181, %v2239
        %v2267 = vadd.f32 %v2184, %v2239
        %v2268 = vadd.f32 %v2186, %v2239
        %v2269 = vadd.f32 %v2210, %v2240
        %v2270 = vadd.f32 %v2212, %v2240
        %v2271 = vadd.f32 %v2215, %v2240
        %v2272 = vadd.f32 %v2217, %v2240
        %v2273 = vadd.f32 %v2220, %v2240
        %v2274 = vadd.f32 %v2222, %v2240
        %v2275 = vadd.f32 %v2225, %v2240
        %v2276 = vadd.f32 %v2227, %v2240
        %v2277 = vld [vmem:[%s1377] sm:$0xf]
        %v2278 = vld [vmem:[%s1377 + $0x4] sm:$0xf]
        %v2279 = vld [vmem:[%s1377 + $0x8] sm:$0xf]
        %v2280 = vld [vmem:[%s1377 + $0xc] sm:$0xf]
        %v2281 = vld [vmem:[%s1377 + $0x10] sm:$0xf]
        %v2282 = vld [vmem:[%s1377 + $0x14] sm:$0xf]
        %v2283 = vld [vmem:[%s1377 + $0x18] sm:$0xf]
        %v2284 = vld [vmem:[%s1377 + $0x1c] sm:$0xf]
        %v2285 = vld [vmem:[%s1377 + $0x20] sm:$0xf]
        %v2286 = vld [vmem:[%s1377 + $0x24] sm:$0xf]
        %v2287 = vld [vmem:[%s1377 + $0x28] sm:$0xf]
        %v2288 = vld [vmem:[%s1377 + $0x2c] sm:$0xf]
        %v2289 = vld [vmem:[%s1377 + $0x30] sm:$0xf]
        %v2290 = vld [vmem:[%s1377 + $0x34] sm:$0xf]
        %v2291 = vld [vmem:[%s1377 + $0x38] sm:$0xf]
        %v2292 = vld [vmem:[%s1377 + $0x3c] sm:$0xf]
        %v2293 = vld [vmem:[%s1381] sm:$0x1]
        %v2294 = vld [vmem:[%s1381 + $0x1] sm:$0x1]
        %v2295 = vld [vmem:[%s1381 + $0x2] sm:$0x1]
        %v2296 = vld [vmem:[%s1381 + $0x3] sm:$0x1]
        %v2301 = vperm.slane %v2293, 0
        %v2302 = vperm.slane %v2294, 0
        %v2303 = vperm.slane %v2295, 0
        %v2304 = vperm.slane %v2296, 0
        %v2313 = vunpack.c.l.b16 %v2277
        %v2314 = vunpack.c.l.b16 %v2278
        %v2315 = vunpack.c.l.b16 %v2279
        %v2316 = vunpack.c.l.b16 %v2280
        %v2317 = vpack.c.b16 %v2314, %v2313
        %v2318 = vpack.c.b16 %v2316, %v2315
        %v2322 = vsel %vm1464, %v1836, 0
        %2324 = vmatpush.bf16.msra.mxu0 0
        %2325 = vmatpush.bf16.msra.mxu0 0
        %2326 = vmatpush.bf16.msra.mxu0 0
        %2327 = vmatpush.bf16.msra.mxu0 0
        %2328 = vmatpush.bf16.msra.mxu0 0
        %2329 = vmatpush.bf16.msra.mxu0 0
        %2330 = vmatpush.bf16.msra.mxu0 %v2318
        %2331 = vmatpush.bf16.msra.mxu0 %v2317
        %2332 = vmatmul.bf16.gmra.mxu0 %v2322
        %v2333 = vpop.f32.mrf.mxu0
        %v2334 = vadd.f32 %v2301, %v2333
        %v2335 = vpop.f32.mrf.mxu0
        %2336 = vdwg.mxu0
        %v2341 = vunpack.c.l.b16 %v2281
        %v2342 = vunpack.c.l.b16 %v2282
        %v2343 = vunpack.c.l.b16 %v2283
        %v2344 = vunpack.c.l.b16 %v2284
        %v2345 = vpack.c.b16 %v2342, %v2341
        %v2346 = vpack.c.b16 %v2344, %v2343
        %2349 = vmatpush.bf16.msra.mxu0 0
        %2350 = vmatpush.bf16.msra.mxu0 0
        %2351 = vmatpush.bf16.msra.mxu0 0
        %2352 = vmatpush.bf16.msra.mxu0 0
        %2353 = vmatpush.bf16.msra.mxu0 0
        %2354 = vmatpush.bf16.msra.mxu0 0
        %2355 = vmatpush.bf16.msra.mxu0 %v2346
        %2356 = vmatpush.bf16.msra.mxu0 %v2345
        %2357 = vmatmul.bf16.gmra.mxu0 %v2322
        %v2358 = vpop.f32.mrf.mxu0
        %v2359 = vadd.f32 %v2302, %v2358
        %v2360 = vpop.f32.mrf.mxu0
        %2361 = vdwg.mxu0
        %v2366 = vunpack.c.l.b16 %v2285
        %v2367 = vunpack.c.l.b16 %v2286
        %v2368 = vunpack.c.l.b16 %v2287
        %v2369 = vunpack.c.l.b16 %v2288
        %v2370 = vpack.c.b16 %v2367, %v2366
        %v2371 = vpack.c.b16 %v2369, %v2368
        %2374 = vmatpush.bf16.msra.mxu0 0
        %2375 = vmatpush.bf16.msra.mxu0 0
        %2376 = vmatpush.bf16.msra.mxu0 0
        %2377 = vmatpush.bf16.msra.mxu0 0
        %2378 = vmatpush.bf16.msra.mxu0 0
        %2379 = vmatpush.bf16.msra.mxu0 0
        %2380 = vmatpush.bf16.msra.mxu0 %v2371
        %2381 = vmatpush.bf16.msra.mxu0 %v2370
        %2382 = vmatmul.bf16.gmra.mxu0 %v2322
        %v2383 = vpop.f32.mrf.mxu0
        %v2384 = vadd.f32 %v2303, %v2383
        %v2385 = vpop.f32.mrf.mxu0
        %2386 = vdwg.mxu0
        %v2391 = vunpack.c.l.b16 %v2289
        %v2392 = vunpack.c.l.b16 %v2290
        %v2393 = vunpack.c.l.b16 %v2291
        %v2394 = vunpack.c.l.b16 %v2292
        %v2395 = vpack.c.b16 %v2392, %v2391
        %v2396 = vpack.c.b16 %v2394, %v2393
        %2399 = vmatpush.bf16.msra.mxu0 0
        %2400 = vmatpush.bf16.msra.mxu0 0
        %2401 = vmatpush.bf16.msra.mxu0 0
        %2402 = vmatpush.bf16.msra.mxu0 0
        %2403 = vmatpush.bf16.msra.mxu0 0
        %2404 = vmatpush.bf16.msra.mxu0 0
        %2405 = vmatpush.bf16.msra.mxu0 %v2396
        %2406 = vmatpush.bf16.msra.mxu0 %v2395
        %2407 = vmatmul.bf16.gmra.mxu0 %v2322
        %v2408 = vpop.f32.mrf.mxu0
        %v2409 = vadd.f32 %v2304, %v2408
        %v2410 = vpop.f32.mrf.mxu0
        %2411 = vdwg.mxu0
        %v2412 = vld [vmem:[%s1386] sm:$0xf]
        %v2413 = vld [vmem:[%s1386 + $0x4] sm:$0xf]
        %v2414 = vld [vmem:[%s1386 + $0x8] sm:$0xf]
        %v2415 = vld [vmem:[%s1386 + $0xc] sm:$0xf]
        %v2416 = vld [vmem:[%s1386 + $0x10] sm:$0xf]
        %v2417 = vld [vmem:[%s1386 + $0x14] sm:$0xf]
        %v2418 = vld [vmem:[%s1386 + $0x18] sm:$0xf]
        %v2419 = vld [vmem:[%s1386 + $0x1c] sm:$0xf]
        %v2420 = vld [vmem:[%s1386 + $0x20] sm:$0xf]
        %v2421 = vld [vmem:[%s1386 + $0x24] sm:$0xf]
        %v2422 = vld [vmem:[%s1386 + $0x28] sm:$0xf]
        %v2423 = vld [vmem:[%s1386 + $0x2c] sm:$0xf]
        %v2424 = vld [vmem:[%s1386 + $0x30] sm:$0xf]
        %v2425 = vld [vmem:[%s1386 + $0x34] sm:$0xf]
        %v2426 = vld [vmem:[%s1386 + $0x38] sm:$0xf]
        %v2427 = vld [vmem:[%s1386 + $0x3c] sm:$0xf]
        %v2428 = vld [vmem:[%s1390] sm:$0x1]
        %v2429 = vld [vmem:[%s1390 + $0x1] sm:$0x1]
        %v2430 = vld [vmem:[%s1390 + $0x2] sm:$0x1]
        %v2431 = vld [vmem:[%s1390 + $0x3] sm:$0x1]
        %v2436 = vperm.slane %v2428, 0
        %v2437 = vperm.slane %v2429, 0
        %v2438 = vperm.slane %v2430, 0
        %v2439 = vperm.slane %v2431, 0
        %v2448 = vunpack.c.l.b16 %v2412
        %v2449 = vunpack.c.l.b16 %v2413
        %v2450 = vunpack.c.l.b16 %v2414
        %v2451 = vunpack.c.l.b16 %v2415
        %v2452 = vpack.c.b16 %v2449, %v2448
        %v2453 = vpack.c.b16 %v2451, %v2450
        %2456 = vmatpush.bf16.msra.mxu0 0
        %2457 = vmatpush.bf16.msra.mxu0 0
        %2458 = vmatpush.bf16.msra.mxu0 0
        %2459 = vmatpush.bf16.msra.mxu0 0
        %2460 = vmatpush.bf16.msra.mxu0 0
        %2461 = vmatpush.bf16.msra.mxu0 0
        %2462 = vmatpush.bf16.msra.mxu0 %v2453
        %2463 = vmatpush.bf16.msra.mxu0 %v2452
        %2464 = vmatmul.bf16.gmra.mxu0 %v2322
        %v2465 = vpop.f32.mrf.mxu0
        %v2466 = vadd.f32 %v2436, %v2465
        %v2467 = vpop.f32.mrf.mxu0
        %2468 = vdwg.mxu0
        %v2473 = vunpack.c.l.b16 %v2416
        %v2474 = vunpack.c.l.b16 %v2417
        %v2475 = vunpack.c.l.b16 %v2418
        %v2476 = vunpack.c.l.b16 %v2419
        %v2477 = vpack.c.b16 %v2474, %v2473
        %v2478 = vpack.c.b16 %v2476, %v2475
        %2481 = vmatpush.bf16.msra.mxu0 0
        %2482 = vmatpush.bf16.msra.mxu0 0
        %2483 = vmatpush.bf16.msra.mxu0 0
        %2484 = vmatpush.bf16.msra.mxu0 0
        %2485 = vmatpush.bf16.msra.mxu0 0
        %2486 = vmatpush.bf16.msra.mxu0 0
        %2487 = vmatpush.bf16.msra.mxu0 %v2478
        %2488 = vmatpush.bf16.msra.mxu0 %v2477
        %2489 = vmatmul.bf16.gmra.mxu0 %v2322
        %v2490 = vpop.f32.mrf.mxu0
        %v2491 = vadd.f32 %v2437, %v2490
        %v2492 = vpop.f32.mrf.mxu0
        %2493 = vdwg.mxu0
        %v2498 = vunpack.c.l.b16 %v2420
        %v2499 = vunpack.c.l.b16 %v2421
        %v2500 = vunpack.c.l.b16 %v2422
        %v2501 = vunpack.c.l.b16 %v2423
        %v2502 = vpack.c.b16 %v2499, %v2498
        %v2503 = vpack.c.b16 %v2501, %v2500
        %2506 = vmatpush.bf16.msra.mxu0 0
        %2507 = vmatpush.bf16.msra.mxu0 0
        %2508 = vmatpush.bf16.msra.mxu0 0
        %2509 = vmatpush.bf16.msra.mxu0 0
        %2510 = vmatpush.bf16.msra.mxu0 0
        %2511 = vmatpush.bf16.msra.mxu0 0
        %2512 = vmatpush.bf16.msra.mxu0 %v2503
        %2513 = vmatpush.bf16.msra.mxu0 %v2502
        %2514 = vmatmul.bf16.gmra.mxu0 %v2322
        %v2515 = vpop.f32.mrf.mxu0
        %v2516 = vadd.f32 %v2438, %v2515
        %v2517 = vpop.f32.mrf.mxu0
        %2518 = vdwg.mxu0
        %v2523 = vunpack.c.l.b16 %v2424
        %v2524 = vunpack.c.l.b16 %v2425
        %v2525 = vunpack.c.l.b16 %v2426
        %v2526 = vunpack.c.l.b16 %v2427
        %v2527 = vpack.c.b16 %v2524, %v2523
        %v2528 = vpack.c.b16 %v2526, %v2525
        %2531 = vmatpush.bf16.msra.mxu0 0
        %2532 = vmatpush.bf16.msra.mxu0 0
        %2533 = vmatpush.bf16.msra.mxu0 0
        %2534 = vmatpush.bf16.msra.mxu0 0
        %2535 = vmatpush.bf16.msra.mxu0 0
        %2536 = vmatpush.bf16.msra.mxu0 0
        %2537 = vmatpush.bf16.msra.mxu0 %v2528
        %2538 = vmatpush.bf16.msra.mxu0 %v2527
        %2539 = vmatmul.bf16.gmra.mxu0 %v2322
        %v2540 = vpop.f32.mrf.mxu0
        %v2541 = vadd.f32 %v2439, %v2540
        %v2542 = vpop.f32.mrf.mxu0
        %2543 = vdwg.mxu0
        %v2544 = vpack.c.bf16 %v2245, %v2245
        %v2545 = vpack.c.bf16 %v2246, %v2246
        %v2546 = vpack.c.bf16 %v2247, %v2247
        %v2547 = vpack.c.bf16 %v2248, %v2248
        %v2548 = vpack.c.bf16 %v2249, %v2249
        %v2549 = vpack.c.bf16 %v2250, %v2250
        %v2550 = vpack.c.bf16 %v2251, %v2251
        %v2551 = vpack.c.bf16 %v2252, %v2252
        %v2552 = vpack.c.bf16 %v2253, %v2253
        %v2553 = vpack.c.bf16 %v2254, %v2254
        %v2554 = vpack.c.bf16 %v2255, %v2255
        %v2555 = vpack.c.bf16 %v2256, %v2256
        %v2556 = vpack.c.bf16 %v2257, %v2257
        %v2557 = vpack.c.bf16 %v2258, %v2258
        %v2558 = vpack.c.bf16 %v2259, %v2259
        %v2559 = vpack.c.bf16 %v2260, %v2260
        %v2560 = vpack.c.bf16 %v2261, %v2261
        %v2561 = vpack.c.bf16 %v2262, %v2262
        %v2562 = vpack.c.bf16 %v2263, %v2263
        %v2563 = vpack.c.bf16 %v2264, %v2264
        %v2564 = vpack.c.bf16 %v2265, %v2265
        %v2565 = vpack.c.bf16 %v2266, %v2266
        %v2566 = vpack.c.bf16 %v2267, %v2267
        %v2567 = vpack.c.bf16 %v2268, %v2268
        %v2568 = vpack.c.bf16 %v2269, %v2269
        %v2569 = vpack.c.bf16 %v2270, %v2270
        %v2570 = vpack.c.bf16 %v2271, %v2271
        %v2571 = vpack.c.bf16 %v2272, %v2272
        %v2572 = vpack.c.bf16 %v2273, %v2273
        %v2573 = vpack.c.bf16 %v2274, %v2274
        %v2574 = vpack.c.bf16 %v2275, %v2275
        %v2575 = vpack.c.bf16 %v2276, %v2276
        %v2576 = vpack.c.bf16 %v2334, %v2334
        %v2577 = vpack.c.bf16 %v2359, %v2359
        %v2578 = vpack.c.bf16 %v2384, %v2384
        %v2579 = vpack.c.bf16 %v2409, %v2409
        %v2588 = vunpack.c.l.b16 %v2544
        %v2589 = vunpack.c.l.b16 %v2545
        %v2590 = vunpack.c.l.b16 %v2546
        %v2591 = vunpack.c.l.b16 %v2547
        %v2592 = vunpack.c.l.b16 %v2548
        %v2593 = vunpack.c.l.b16 %v2549
        %v2594 = vunpack.c.l.b16 %v2550
        %v2595 = vunpack.c.l.b16 %v2551
        %v2596 = vpack.c.b16 %v2589, %v2588
        %v2597 = vpack.c.b16 %v2591, %v2590
        %v2598 = vpack.c.b16 %v2593, %v2592
        %v2599 = vpack.c.b16 %v2595, %v2594
        %vm2600 = vcmask 64512
        %v2602 = vsel %vm2600, %v2596, 0
        %v2605 = vsel %vm2600, %v2597, 0
        %v2608 = vsel %vm2600, %v2598, 0
        %v2611 = vsel %vm2600, %v2599, 0
        %v2614 = vsel %vm2600, %v2576, 0
        %2616 = vmatpush.bf16.xpose.msra.mxu0 0
        %2617 = vmatpush.bf16.xpose.msra.mxu0 0
        %2618 = vmatpush.bf16.xpose.msra.mxu0 0
        %2619 = vmatpush.bf16.xpose.msra.mxu0 0
        %2620 = vmatpush.bf16.xpose.msra.mxu0 0
        %2621 = vmatpush.bf16.xpose.msra.mxu0 0
        %2622 = vmatpush.bf16.xpose.msra.mxu0 0
        %2623 = vmatpush.bf16.xpose.msra.mxu0 %v2614
        %2624 = vmatmul.bf16.gmra.mxu0 %v2602
        %v2625 = vpop.f32.mrf.mxu0
        %v2626 = vadd.f32 0.0, %v2625
        %v2627 = vpop.f32.mrf.mxu0
        %v2628 = vadd.f32 0.0, %v2627
        %2629 = vmatmul.bf16.gmra.mxu0 %v2605
        %v2630 = vpop.f32.mrf.mxu0
        %v2631 = vadd.f32 0.0, %v2630
        %v2632 = vpop.f32.mrf.mxu0
        %v2633 = vadd.f32 0.0, %v2632
        %2634 = vmatmul.bf16.gmra.mxu0 %v2608
        %v2635 = vpop.f32.mrf.mxu0
        %v2636 = vadd.f32 0.0, %v2635
        %v2637 = vpop.f32.mrf.mxu0
        %v2638 = vadd.f32 0.0, %v2637
        %2639 = vmatmul.bf16.gmra.mxu0 %v2611
        %v2640 = vpop.f32.mrf.mxu0
        %v2641 = vadd.f32 0.0, %v2640
        %v2642 = vpop.f32.mrf.mxu0
        %v2643 = vadd.f32 0.0, %v2642
        %2644 = vdwg.mxu0
        %v2653 = vunpack.c.l.b16 %v2552
        %v2654 = vunpack.c.l.b16 %v2553
        %v2655 = vunpack.c.l.b16 %v2554
        %v2656 = vunpack.c.l.b16 %v2555
        %v2657 = vunpack.c.l.b16 %v2556
        %v2658 = vunpack.c.l.b16 %v2557
        %v2659 = vunpack.c.l.b16 %v2558
        %v2660 = vunpack.c.l.b16 %v2559
        %v2661 = vpack.c.b16 %v2654, %v2653
        %v2662 = vpack.c.b16 %v2656, %v2655
        %v2663 = vpack.c.b16 %v2658, %v2657
        %v2664 = vpack.c.b16 %v2660, %v2659
        %v2666 = vsel %vm2600, %v2661, 0
        %v2669 = vsel %vm2600, %v2662, 0
        %v2672 = vsel %vm2600, %v2663, 0
        %v2675 = vsel %vm2600, %v2664, 0
        %v2678 = vsel %vm2600, %v2577, 0
        %2680 = vmatpush.bf16.xpose.msra.mxu0 0
        %2681 = vmatpush.bf16.xpose.msra.mxu0 0
        %2682 = vmatpush.bf16.xpose.msra.mxu0 0
        %2683 = vmatpush.bf16.xpose.msra.mxu0 0
        %2684 = vmatpush.bf16.xpose.msra.mxu0 0
        %2685 = vmatpush.bf16.xpose.msra.mxu0 0
        %2686 = vmatpush.bf16.xpose.msra.mxu0 0
        %2687 = vmatpush.bf16.xpose.msra.mxu0 %v2678
        %2688 = vmatmul.bf16.gmra.mxu0 %v2666
        %v2689 = vpop.f32.mrf.mxu0
        %v2690 = vadd.f32 0.0, %v2689
        %v2691 = vpop.f32.mrf.mxu0
        %v2692 = vadd.f32 0.0, %v2691
        %2693 = vmatmul.bf16.gmra.mxu0 %v2669
        %v2694 = vpop.f32.mrf.mxu0
        %v2695 = vadd.f32 0.0, %v2694
        %v2696 = vpop.f32.mrf.mxu0
        %v2697 = vadd.f32 0.0, %v2696
        %2698 = vmatmul.bf16.gmra.mxu0 %v2672
        %v2699 = vpop.f32.mrf.mxu0
        %v2700 = vadd.f32 0.0, %v2699
        %v2701 = vpop.f32.mrf.mxu0
        %v2702 = vadd.f32 0.0, %v2701
        %2703 = vmatmul.bf16.gmra.mxu0 %v2675
        %v2704 = vpop.f32.mrf.mxu0
        %v2705 = vadd.f32 0.0, %v2704
        %v2706 = vpop.f32.mrf.mxu0
        %v2707 = vadd.f32 0.0, %v2706
        %2708 = vdwg.mxu0
        %v2717 = vunpack.c.l.b16 %v2560
        %v2718 = vunpack.c.l.b16 %v2561
        %v2719 = vunpack.c.l.b16 %v2562
        %v2720 = vunpack.c.l.b16 %v2563
        %v2721 = vunpack.c.l.b16 %v2564
        %v2722 = vunpack.c.l.b16 %v2565
        %v2723 = vunpack.c.l.b16 %v2566
        %v2724 = vunpack.c.l.b16 %v2567
        %v2725 = vpack.c.b16 %v2718, %v2717
        %v2726 = vpack.c.b16 %v2720, %v2719
        %v2727 = vpack.c.b16 %v2722, %v2721
        %v2728 = vpack.c.b16 %v2724, %v2723
        %v2730 = vsel %vm2600, %v2725, 0
        %v2733 = vsel %vm2600, %v2726, 0
        %v2736 = vsel %vm2600, %v2727, 0
        %v2739 = vsel %vm2600, %v2728, 0
        %v2742 = vsel %vm2600, %v2578, 0
        %2744 = vmatpush.bf16.xpose.msra.mxu0 0
        %2745 = vmatpush.bf16.xpose.msra.mxu0 0
        %2746 = vmatpush.bf16.xpose.msra.mxu0 0
        %2747 = vmatpush.bf16.xpose.msra.mxu0 0
        %2748 = vmatpush.bf16.xpose.msra.mxu0 0
        %2749 = vmatpush.bf16.xpose.msra.mxu0 0
        %2750 = vmatpush.bf16.xpose.msra.mxu0 0
        %2751 = vmatpush.bf16.xpose.msra.mxu0 %v2742
        %2752 = vmatmul.bf16.gmra.mxu0 %v2730
        %v2753 = vpop.f32.mrf.mxu0
        %v2754 = vadd.f32 0.0, %v2753
        %v2755 = vpop.f32.mrf.mxu0
        %v2756 = vadd.f32 0.0, %v2755
        %2757 = vmatmul.bf16.gmra.mxu0 %v2733
        %v2758 = vpop.f32.mrf.mxu0
        %v2759 = vadd.f32 0.0, %v2758
        %v2760 = vpop.f32.mrf.mxu0
        %v2761 = vadd.f32 0.0, %v2760
        %2762 = vmatmul.bf16.gmra.mxu0 %v2736
        %v2763 = vpop.f32.mrf.mxu0
        %v2764 = vadd.f32 0.0, %v2763
        %v2765 = vpop.f32.mrf.mxu0
        %v2766 = vadd.f32 0.0, %v2765
        %2767 = vmatmul.bf16.gmra.mxu0 %v2739
        %v2768 = vpop.f32.mrf.mxu0
        %v2769 = vadd.f32 0.0, %v2768
        %v2770 = vpop.f32.mrf.mxu0
        %v2771 = vadd.f32 0.0, %v2770
        %2772 = vdwg.mxu0
        %v2781 = vunpack.c.l.b16 %v2568
        %v2782 = vunpack.c.l.b16 %v2569
        %v2783 = vunpack.c.l.b16 %v2570
        %v2784 = vunpack.c.l.b16 %v2571
        %v2785 = vunpack.c.l.b16 %v2572
        %v2786 = vunpack.c.l.b16 %v2573
        %v2787 = vunpack.c.l.b16 %v2574
        %v2788 = vunpack.c.l.b16 %v2575
        %v2789 = vpack.c.b16 %v2782, %v2781
        %v2790 = vpack.c.b16 %v2784, %v2783
        %v2791 = vpack.c.b16 %v2786, %v2785
        %v2792 = vpack.c.b16 %v2788, %v2787
        %v2794 = vsel %vm2600, %v2789, 0
        %v2797 = vsel %vm2600, %v2790, 0
        %v2800 = vsel %vm2600, %v2791, 0
        %v2803 = vsel %vm2600, %v2792, 0
        %v2806 = vsel %vm2600, %v2579, 0
        %2808 = vmatpush.bf16.xpose.msra.mxu0 0
        %2809 = vmatpush.bf16.xpose.msra.mxu0 0
        %2810 = vmatpush.bf16.xpose.msra.mxu0 0
        %2811 = vmatpush.bf16.xpose.msra.mxu0 0
        %2812 = vmatpush.bf16.xpose.msra.mxu0 0
        %2813 = vmatpush.bf16.xpose.msra.mxu0 0
        %2814 = vmatpush.bf16.xpose.msra.mxu0 0
        %2815 = vmatpush.bf16.xpose.msra.mxu0 %v2806
        %2816 = vmatmul.bf16.gmra.mxu0 %v2794
        %v2817 = vpop.f32.mrf.mxu0
        %v2818 = vadd.f32 0.0, %v2817
        %v2819 = vpop.f32.mrf.mxu0
        %v2820 = vadd.f32 0.0, %v2819
        %2821 = vmatmul.bf16.gmra.mxu0 %v2797
        %v2822 = vpop.f32.mrf.mxu0
        %v2823 = vadd.f32 0.0, %v2822
        %v2824 = vpop.f32.mrf.mxu0
        %v2825 = vadd.f32 0.0, %v2824
        %2826 = vmatmul.bf16.gmra.mxu0 %v2800
        %v2827 = vpop.f32.mrf.mxu0
        %v2828 = vadd.f32 0.0, %v2827
        %v2829 = vpop.f32.mrf.mxu0
        %v2830 = vadd.f32 0.0, %v2829
        %2831 = vmatmul.bf16.gmra.mxu0 %v2803
        %v2832 = vpop.f32.mrf.mxu0
        %v2833 = vadd.f32 0.0, %v2832
        %v2834 = vpop.f32.mrf.mxu0
        %v2835 = vadd.f32 0.0, %v2834
        %2836 = vdwg.mxu0
        %v2837 = vmul.f32 %v2626, 0.35355338
        %v2838 = vmul.f32 %v2628, 0.35355338
        %v2839 = vmul.f32 %v2631, 0.35355338
        %v2840 = vmul.f32 %v2633, 0.35355338
        %v2841 = vmul.f32 %v2636, 0.35355338
        %v2842 = vmul.f32 %v2638, 0.35355338
        %v2843 = vmul.f32 %v2641, 0.35355338
        %v2844 = vmul.f32 %v2643, 0.35355338
        %v2845 = vmul.f32 %v2690, 0.35355338
        %v2846 = vmul.f32 %v2692, 0.35355338
        %v2847 = vmul.f32 %v2695, 0.35355338
        %v2848 = vmul.f32 %v2697, 0.35355338
        %v2849 = vmul.f32 %v2700, 0.35355338
        %v2850 = vmul.f32 %v2702, 0.35355338
        %v2851 = vmul.f32 %v2705, 0.35355338
        %v2852 = vmul.f32 %v2707, 0.35355338
        %v2853 = vmul.f32 %v2754, 0.35355338
        %v2854 = vmul.f32 %v2756, 0.35355338
        %v2855 = vmul.f32 %v2759, 0.35355338
        %v2856 = vmul.f32 %v2761, 0.35355338
        %v2857 = vmul.f32 %v2764, 0.35355338
        %v2858 = vmul.f32 %v2766, 0.35355338
        %v2859 = vmul.f32 %v2769, 0.35355338
        %v2860 = vmul.f32 %v2771, 0.35355338
        %v2861 = vmul.f32 %v2818, 0.35355338
        %v2862 = vmul.f32 %v2820, 0.35355338
        %v2863 = vmul.f32 %v2823, 0.35355338
        %v2864 = vmul.f32 %v2825, 0.35355338
        %v2865 = vmul.f32 %v2828, 0.35355338
        %v2866 = vmul.f32 %v2830, 0.35355338
        %v2867 = vmul.f32 %v2833, 0.35355338
        %v2868 = vmul.f32 %v2835, 0.35355338
        %v2869 = vsel %vm2600, %v2837, -inf
        %2870 = vmax.xlane.f32.xlu0 %v2869
        %v2871 = vpop.xlane.xlu0 %2870
        %v2872 = vsel %vm2600, %v2838, -inf
        %2873 = vmax.xlane.f32.xlu0 %v2872
        %v2874 = vpop.xlane.xlu0 %2873
        %v2875 = vsel %vm2600, %v2839, -inf
        %2876 = vmax.xlane.f32.xlu0 %v2875
        %v2877 = vpop.xlane.xlu0 %2876
        %v2878 = vsel %vm2600, %v2840, -inf
        %2879 = vmax.xlane.f32.xlu0 %v2878
        %v2880 = vpop.xlane.xlu0 %2879
        %v2881 = vsel %vm2600, %v2841, -inf
        %2882 = vmax.xlane.f32.xlu0 %v2881
        %v2883 = vpop.xlane.xlu0 %2882
        %v2884 = vsel %vm2600, %v2842, -inf
        %2885 = vmax.xlane.f32.xlu0 %v2884
        %v2886 = vpop.xlane.xlu0 %2885
        %v2887 = vsel %vm2600, %v2843, -inf
        %2888 = vmax.xlane.f32.xlu0 %v2887
        %v2889 = vpop.xlane.xlu0 %2888
        %v2890 = vsel %vm2600, %v2844, -inf
        %2891 = vmax.xlane.f32.xlu0 %v2890
        %v2892 = vpop.xlane.xlu0 %2891
        %v2893 = vsel %vm2600, %v2845, -inf
        %2894 = vmax.xlane.f32.xlu0 %v2893
        %v2895 = vpop.xlane.xlu0 %2894
        %v2896 = vsel %vm2600, %v2846, -inf
        %2897 = vmax.xlane.f32.xlu0 %v2896
        %v2898 = vpop.xlane.xlu0 %2897
        %v2899 = vsel %vm2600, %v2847, -inf
        %2900 = vmax.xlane.f32.xlu0 %v2899
        %v2901 = vpop.xlane.xlu0 %2900
        %v2902 = vsel %vm2600, %v2848, -inf
        %2903 = vmax.xlane.f32.xlu0 %v2902
        %v2904 = vpop.xlane.xlu0 %2903
        %v2905 = vsel %vm2600, %v2849, -inf
        %2906 = vmax.xlane.f32.xlu0 %v2905
        %v2907 = vpop.xlane.xlu0 %2906
        %v2908 = vsel %vm2600, %v2850, -inf
        %2909 = vmax.xlane.f32.xlu0 %v2908
        %v2910 = vpop.xlane.xlu0 %2909
        %v2911 = vsel %vm2600, %v2851, -inf
        %2912 = vmax.xlane.f32.xlu0 %v2911
        %v2913 = vpop.xlane.xlu0 %2912
        %v2914 = vsel %vm2600, %v2852, -inf
        %2915 = vmax.xlane.f32.xlu0 %v2914
        %v2916 = vpop.xlane.xlu0 %2915
        %v2917 = vsel %vm2600, %v2853, -inf
        %2918 = vmax.xlane.f32.xlu0 %v2917
        %v2919 = vpop.xlane.xlu0 %2918
        %v2920 = vsel %vm2600, %v2854, -inf
        %2921 = vmax.xlane.f32.xlu0 %v2920
        %v2922 = vpop.xlane.xlu0 %2921
        %v2923 = vsel %vm2600, %v2855, -inf
        %2924 = vmax.xlane.f32.xlu0 %v2923
        %v2925 = vpop.xlane.xlu0 %2924
        %v2926 = vsel %vm2600, %v2856, -inf
        %2927 = vmax.xlane.f32.xlu0 %v2926
        %v2928 = vpop.xlane.xlu0 %2927
        %v2929 = vsel %vm2600, %v2857, -inf
        %2930 = vmax.xlane.f32.xlu0 %v2929
        %v2931 = vpop.xlane.xlu0 %2930
        %v2932 = vsel %vm2600, %v2858, -inf
        %2933 = vmax.xlane.f32.xlu0 %v2932
        %v2934 = vpop.xlane.xlu0 %2933
        %v2935 = vsel %vm2600, %v2859, -inf
        %2936 = vmax.xlane.f32.xlu0 %v2935
        %v2937 = vpop.xlane.xlu0 %2936
        %v2938 = vsel %vm2600, %v2860, -inf
        %2939 = vmax.xlane.f32.xlu0 %v2938
        %v2940 = vpop.xlane.xlu0 %2939
        %v2941 = vsel %vm2600, %v2861, -inf
        %2942 = vmax.xlane.f32.xlu0 %v2941
        %v2943 = vpop.xlane.xlu0 %2942
        %v2944 = vsel %vm2600, %v2862, -inf
        %2945 = vmax.xlane.f32.xlu0 %v2944
        %v2946 = vpop.xlane.xlu0 %2945
        %v2947 = vsel %vm2600, %v2863, -inf
        %2948 = vmax.xlane.f32.xlu0 %v2947
        %v2949 = vpop.xlane.xlu0 %2948
        %v2950 = vsel %vm2600, %v2864, -inf
        %2951 = vmax.xlane.f32.xlu0 %v2950
        %v2952 = vpop.xlane.xlu0 %2951
        %v2953 = vsel %vm2600, %v2865, -inf
        %2954 = vmax.xlane.f32.xlu0 %v2953
        %v2955 = vpop.xlane.xlu0 %2954
        %v2956 = vsel %vm2600, %v2866, -inf
        %2957 = vmax.xlane.f32.xlu0 %v2956
        %v2958 = vpop.xlane.xlu0 %2957
        %v2959 = vsel %vm2600, %v2867, -inf
        %2960 = vmax.xlane.f32.xlu0 %v2959
        %v2961 = vpop.xlane.xlu0 %2960
        %v2962 = vsel %vm2600, %v2868, -inf
        %2963 = vmax.xlane.f32.xlu0 %v2962
        %v2964 = vpop.xlane.xlu0 %2963
        %v2965 = vsub.f32 %v2837, %v2871
        %v2966 = vsub.f32 %v2838, %v2874
        %v2967 = vsub.f32 %v2839, %v2877
        %v2968 = vsub.f32 %v2840, %v2880
        %v2969 = vsub.f32 %v2841, %v2883
        %v2970 = vsub.f32 %v2842, %v2886
        %v2971 = vsub.f32 %v2843, %v2889
        %v2972 = vsub.f32 %v2844, %v2892
        %v2973 = vsub.f32 %v2845, %v2895
        %v2974 = vsub.f32 %v2846, %v2898
        %v2975 = vsub.f32 %v2847, %v2901
        %v2976 = vsub.f32 %v2848, %v2904
        %v2977 = vsub.f32 %v2849, %v2907
        %v2978 = vsub.f32 %v2850, %v2910
        %v2979 = vsub.f32 %v2851, %v2913
        %v2980 = vsub.f32 %v2852, %v2916
        %v2981 = vsub.f32 %v2853, %v2919
        %v2982 = vsub.f32 %v2854, %v2922
        %v2983 = vsub.f32 %v2855, %v2925
        %v2984 = vsub.f32 %v2856, %v2928
        %v2985 = vsub.f32 %v2857, %v2931
        %v2986 = vsub.f32 %v2858, %v2934
        %v2987 = vsub.f32 %v2859, %v2937
        %v2988 = vsub.f32 %v2860, %v2940
        %v2989 = vsub.f32 %v2861, %v2943
        %v2990 = vsub.f32 %v2862, %v2946
        %v2991 = vsub.f32 %v2863, %v2949
        %v2992 = vsub.f32 %v2864, %v2952
        %v2993 = vsub.f32 %v2865, %v2955
        %v2994 = vsub.f32 %v2866, %v2958
        %v2995 = vsub.f32 %v2867, %v2961
        %v2996 = vsub.f32 %v2868, %v2964
        %v2997 = vmul.f32 %v2965, 1.442695
        %v2998 = vpow.pop %v2997
        %v2999 = vmul.f32 %v2966, 1.442695
        %v3000 = vpow.pop %v2999
        %v3001 = vmul.f32 %v2967, 1.442695
        %v3002 = vpow.pop %v3001
        %v3003 = vmul.f32 %v2968, 1.442695
        %v3004 = vpow.pop %v3003
        %v3005 = vmul.f32 %v2969, 1.442695
        %v3006 = vpow.pop %v3005
        %v3007 = vmul.f32 %v2970, 1.442695
        %v3008 = vpow.pop %v3007
        %v3009 = vmul.f32 %v2971, 1.442695
        %v3010 = vpow.pop %v3009
        %v3011 = vmul.f32 %v2972, 1.442695
        %v3012 = vpow.pop %v3011
        %v3013 = vmul.f32 %v2973, 1.442695
        %v3014 = vpow.pop %v3013
        %v3015 = vmul.f32 %v2974, 1.442695
        %v3016 = vpow.pop %v3015
        %v3017 = vmul.f32 %v2975, 1.442695
        %v3018 = vpow.pop %v3017
        %v3019 = vmul.f32 %v2976, 1.442695
        %v3020 = vpow.pop %v3019
        %v3021 = vmul.f32 %v2977, 1.442695
        %v3022 = vpow.pop %v3021
        %v3023 = vmul.f32 %v2978, 1.442695
        %v3024 = vpow.pop %v3023
        %v3025 = vmul.f32 %v2979, 1.442695
        %v3026 = vpow.pop %v3025
        %v3027 = vmul.f32 %v2980, 1.442695
        %v3028 = vpow.pop %v3027
        %v3029 = vmul.f32 %v2981, 1.442695
        %v3030 = vpow.pop %v3029
        %v3031 = vmul.f32 %v2982, 1.442695
        %v3032 = vpow.pop %v3031
        %v3033 = vmul.f32 %v2983, 1.442695
        %v3034 = vpow.pop %v3033
        %v3035 = vmul.f32 %v2984, 1.442695
        %v3036 = vpow.pop %v3035
        %v3037 = vmul.f32 %v2985, 1.442695
        %v3038 = vpow.pop %v3037
        %v3039 = vmul.f32 %v2986, 1.442695
        %v3040 = vpow.pop %v3039
        %v3041 = vmul.f32 %v2987, 1.442695
        %v3042 = vpow.pop %v3041
        %v3043 = vmul.f32 %v2988, 1.442695
        %v3044 = vpow.pop %v3043
        %v3045 = vmul.f32 %v2989, 1.442695
        %v3046 = vpow.pop %v3045
        %v3047 = vmul.f32 %v2990, 1.442695
        %v3048 = vpow.pop %v3047
        %v3049 = vmul.f32 %v2991, 1.442695
        %v3050 = vpow.pop %v3049
        %v3051 = vmul.f32 %v2992, 1.442695
        %v3052 = vpow.pop %v3051
        %v3053 = vmul.f32 %v2993, 1.442695
        %v3054 = vpow.pop %v3053
        %v3055 = vmul.f32 %v2994, 1.442695
        %v3056 = vpow.pop %v3055
        %v3057 = vmul.f32 %v2995, 1.442695
        %v3058 = vpow.pop %v3057
        %v3059 = vmul.f32 %v2996, 1.442695
        %v3060 = vpow.pop %v3059
        %v3061 = vsel %vm2600, %v2998, 0.0
        %3062 = vadd.xlane.f32.xlu0 %v3061
        %v3063 = vpop.xlane.xlu0 %3062
        %v3064 = vsel %vm2600, %v3000, 0.0
        %3065 = vadd.xlane.f32.xlu0 %v3064
        %v3066 = vpop.xlane.xlu0 %3065
        %v3067 = vsel %vm2600, %v3002, 0.0
        %3068 = vadd.xlane.f32.xlu0 %v3067
        %v3069 = vpop.xlane.xlu0 %3068
        %v3070 = vsel %vm2600, %v3004, 0.0
        %3071 = vadd.xlane.f32.xlu0 %v3070
        %v3072 = vpop.xlane.xlu0 %3071
        %v3073 = vsel %vm2600, %v3006, 0.0
        %3074 = vadd.xlane.f32.xlu0 %v3073
        %v3075 = vpop.xlane.xlu0 %3074
        %v3076 = vsel %vm2600, %v3008, 0.0
        %3077 = vadd.xlane.f32.xlu0 %v3076
        %v3078 = vpop.xlane.xlu0 %3077
        %v3079 = vsel %vm2600, %v3010, 0.0
        %3080 = vadd.xlane.f32.xlu0 %v3079
        %v3081 = vpop.xlane.xlu0 %3080
        %v3082 = vsel %vm2600, %v3012, 0.0
        %3083 = vadd.xlane.f32.xlu0 %v3082
        %v3084 = vpop.xlane.xlu0 %3083
        %v3085 = vsel %vm2600, %v3014, 0.0
        %3086 = vadd.xlane.f32.xlu0 %v3085
        %v3087 = vpop.xlane.xlu0 %3086
        %v3088 = vsel %vm2600, %v3016, 0.0
        %3089 = vadd.xlane.f32.xlu0 %v3088
        %v3090 = vpop.xlane.xlu0 %3089
        %v3091 = vsel %vm2600, %v3018, 0.0
        %3092 = vadd.xlane.f32.xlu0 %v3091
        %v3093 = vpop.xlane.xlu0 %3092
        %v3094 = vsel %vm2600, %v3020, 0.0
        %3095 = vadd.xlane.f32.xlu0 %v3094
        %v3096 = vpop.xlane.xlu0 %3095
        %v3097 = vsel %vm2600, %v3022, 0.0
        %3098 = vadd.xlane.f32.xlu0 %v3097
        %v3099 = vpop.xlane.xlu0 %3098
        %v3100 = vsel %vm2600, %v3024, 0.0
        %3101 = vadd.xlane.f32.xlu0 %v3100
        %v3102 = vpop.xlane.xlu0 %3101
        %v3103 = vsel %vm2600, %v3026, 0.0
        %3104 = vadd.xlane.f32.xlu0 %v3103
        %v3105 = vpop.xlane.xlu0 %3104
        %v3106 = vsel %vm2600, %v3028, 0.0
        %3107 = vadd.xlane.f32.xlu0 %v3106
        %v3108 = vpop.xlane.xlu0 %3107
        %v3109 = vsel %vm2600, %v3030, 0.0
        %3110 = vadd.xlane.f32.xlu0 %v3109
        %v3111 = vpop.xlane.xlu0 %3110
        %v3112 = vsel %vm2600, %v3032, 0.0
        %3113 = vadd.xlane.f32.xlu0 %v3112
        %v3114 = vpop.xlane.xlu0 %3113
        %v3115 = vsel %vm2600, %v3034, 0.0
        %3116 = vadd.xlane.f32.xlu0 %v3115
        %v3117 = vpop.xlane.xlu0 %3116
        %v3118 = vsel %vm2600, %v3036, 0.0
        %3119 = vadd.xlane.f32.xlu0 %v3118
        %v3120 = vpop.xlane.xlu0 %3119
        %v3121 = vsel %vm2600, %v3038, 0.0
        %3122 = vadd.xlane.f32.xlu0 %v3121
        %v3123 = vpop.xlane.xlu0 %3122
        %v3124 = vsel %vm2600, %v3040, 0.0
        %3125 = vadd.xlane.f32.xlu0 %v3124
        %v3126 = vpop.xlane.xlu0 %3125
        %v3127 = vsel %vm2600, %v3042, 0.0
        %3128 = vadd.xlane.f32.xlu0 %v3127
        %v3129 = vpop.xlane.xlu0 %3128
        %v3130 = vsel %vm2600, %v3044, 0.0
        %3131 = vadd.xlane.f32.xlu0 %v3130
        %v3132 = vpop.xlane.xlu0 %3131
        %v3133 = vsel %vm2600, %v3046, 0.0
        %3134 = vadd.xlane.f32.xlu0 %v3133
        %v3135 = vpop.xlane.xlu0 %3134
        %v3136 = vsel %vm2600, %v3048, 0.0
        %3137 = vadd.xlane.f32.xlu0 %v3136
        %v3138 = vpop.xlane.xlu0 %3137
        %v3139 = vsel %vm2600, %v3050, 0.0
        %3140 = vadd.xlane.f32.xlu0 %v3139
        %v3141 = vpop.xlane.xlu0 %3140
        %v3142 = vsel %vm2600, %v3052, 0.0
        %3143 = vadd.xlane.f32.xlu0 %v3142
        %v3144 = vpop.xlane.xlu0 %3143
        %v3145 = vsel %vm2600, %v3054, 0.0
        %3146 = vadd.xlane.f32.xlu0 %v3145
        %v3147 = vpop.xlane.xlu0 %3146
        %v3148 = vsel %vm2600, %v3056, 0.0
        %3149 = vadd.xlane.f32.xlu0 %v3148
        %v3150 = vpop.xlane.xlu0 %3149
        %v3151 = vsel %vm2600, %v3058, 0.0
        %3152 = vadd.xlane.f32.xlu0 %v3151
        %v3153 = vpop.xlane.xlu0 %3152
        %v3154 = vsel %vm2600, %v3060, 0.0
        %3155 = vadd.xlane.f32.xlu0 %v3154
        %v3156 = vpop.xlane.xlu0 %3155
        %v3157 = vrcp.pop %v3063
        %v3158 = vrcp.pop %v3066
        %v3159 = vrcp.pop %v3069
        %v3160 = vrcp.pop %v3072
        %v3161 = vrcp.pop %v3075
        %v3162 = vrcp.pop %v3078
        %v3163 = vrcp.pop %v3081
        %v3164 = vrcp.pop %v3084
        %v3165 = vrcp.pop %v3087
        %v3166 = vrcp.pop %v3090
        %v3167 = vrcp.pop %v3093
        %v3168 = vrcp.pop %v3096
        %v3169 = vrcp.pop %v3099
        %v3170 = vrcp.pop %v3102
        %v3171 = vrcp.pop %v3105
        %v3172 = vrcp.pop %v3108
        %v3173 = vrcp.pop %v3111
        %v3174 = vrcp.pop %v3114
        %v3175 = vrcp.pop %v3117
        %v3176 = vrcp.pop %v3120
        %v3177 = vrcp.pop %v3123
        %v3178 = vrcp.pop %v3126
        %v3179 = vrcp.pop %v3129
        %v3180 = vrcp.pop %v3132
        %v3181 = vrcp.pop %v3135
        %v3182 = vrcp.pop %v3138
        %v3183 = vrcp.pop %v3141
        %v3184 = vrcp.pop %v3144
        %v3185 = vrcp.pop %v3147
        %v3186 = vrcp.pop %v3150
        %v3187 = vrcp.pop %v3153
        %v3188 = vrcp.pop %v3156
        %v3189 = vmul.f32 %v2998, %v3157
        %v3190 = vmul.f32 %v3000, %v3158
        %v3191 = vmul.f32 %v3002, %v3159
        %v3192 = vmul.f32 %v3004, %v3160
        %v3193 = vmul.f32 %v3006, %v3161
        %v3194 = vmul.f32 %v3008, %v3162
        %v3195 = vmul.f32 %v3010, %v3163
        %v3196 = vmul.f32 %v3012, %v3164
        %v3197 = vmul.f32 %v3014, %v3165
        %v3198 = vmul.f32 %v3016, %v3166
        %v3199 = vmul.f32 %v3018, %v3167
        %v3200 = vmul.f32 %v3020, %v3168
        %v3201 = vmul.f32 %v3022, %v3169
        %v3202 = vmul.f32 %v3024, %v3170
        %v3203 = vmul.f32 %v3026, %v3171
        %v3204 = vmul.f32 %v3028, %v3172
        %v3205 = vmul.f32 %v3030, %v3173
        %v3206 = vmul.f32 %v3032, %v3174
        %v3207 = vmul.f32 %v3034, %v3175
        %v3208 = vmul.f32 %v3036, %v3176
        %v3209 = vmul.f32 %v3038, %v3177
        %v3210 = vmul.f32 %v3040, %v3178
        %v3211 = vmul.f32 %v3042, %v3179
        %v3212 = vmul.f32 %v3044, %v3180
        %v3213 = vmul.f32 %v3046, %v3181
        %v3214 = vmul.f32 %v3048, %v3182
        %v3215 = vmul.f32 %v3050, %v3183
        %v3216 = vmul.f32 %v3052, %v3184
        %v3217 = vmul.f32 %v3054, %v3185
        %v3218 = vmul.f32 %v3056, %v3186
        %v3219 = vmul.f32 %v3058, %v3187
        %v3220 = vmul.f32 %v3060, %v3188
        %v3221 = vpack.c.bf16 %v3189, %v3189
        %v3222 = vpack.c.bf16 %v3190, %v3190
        %v3223 = vpack.c.bf16 %v3191, %v3191
        %v3224 = vpack.c.bf16 %v3192, %v3192
        %v3225 = vpack.c.bf16 %v3193, %v3193
        %v3226 = vpack.c.bf16 %v3194, %v3194
        %v3227 = vpack.c.bf16 %v3195, %v3195
        %v3228 = vpack.c.bf16 %v3196, %v3196
        %v3229 = vpack.c.bf16 %v3197, %v3197
        %v3230 = vpack.c.bf16 %v3198, %v3198
        %v3231 = vpack.c.bf16 %v3199, %v3199
        %v3232 = vpack.c.bf16 %v3200, %v3200
        %v3233 = vpack.c.bf16 %v3201, %v3201
        %v3234 = vpack.c.bf16 %v3202, %v3202
        %v3235 = vpack.c.bf16 %v3203, %v3203
        %v3236 = vpack.c.bf16 %v3204, %v3204
        %v3237 = vpack.c.bf16 %v3205, %v3205
        %v3238 = vpack.c.bf16 %v3206, %v3206
        %v3239 = vpack.c.bf16 %v3207, %v3207
        %v3240 = vpack.c.bf16 %v3208, %v3208
        %v3241 = vpack.c.bf16 %v3209, %v3209
        %v3242 = vpack.c.bf16 %v3210, %v3210
        %v3243 = vpack.c.bf16 %v3211, %v3211
        %v3244 = vpack.c.bf16 %v3212, %v3212
        %v3245 = vpack.c.bf16 %v3213, %v3213
        %v3246 = vpack.c.bf16 %v3214, %v3214
        %v3247 = vpack.c.bf16 %v3215, %v3215
        %v3248 = vpack.c.bf16 %v3216, %v3216
        %v3249 = vpack.c.bf16 %v3217, %v3217
        %v3250 = vpack.c.bf16 %v3218, %v3218
        %v3251 = vpack.c.bf16 %v3219, %v3219
        %v3252 = vpack.c.bf16 %v3220, %v3220
        %v3253 = vpack.c.bf16 %v2466, %v2466
        %v3254 = vpack.c.bf16 %v2491, %v2491
        %v3255 = vpack.c.bf16 %v2516, %v2516
        %v3256 = vpack.c.bf16 %v2541, %v2541
        %v3265 = vunpack.c.l.b16 %v3221
        %v3266 = vunpack.c.l.b16 %v3222
        %v3267 = vunpack.c.l.b16 %v3223
        %v3268 = vunpack.c.l.b16 %v3224
        %v3269 = vunpack.c.l.b16 %v3225
        %v3270 = vunpack.c.l.b16 %v3226
        %v3271 = vunpack.c.l.b16 %v3227
        %v3272 = vunpack.c.l.b16 %v3228
        %v3273 = vpack.c.b16 %v3266, %v3265
        %v3274 = vpack.c.b16 %v3268, %v3267
        %v3275 = vpack.c.b16 %v3270, %v3269
        %v3276 = vpack.c.b16 %v3272, %v3271
        %v3278 = vsel %vm2600, %v3273, 0
        %v3281 = vsel %vm2600, %v3274, 0
        %v3284 = vsel %vm2600, %v3275, 0
        %v3287 = vsel %vm2600, %v3276, 0
        %vm3289 = vcmask 1043456
        %v3291 = vsel %vm3289, %v3253, 0
        %3293 = vmatpush.bf16.msra.mxu0 0
        %3294 = vmatpush.bf16.msra.mxu0 0
        %3295 = vmatpush.bf16.msra.mxu0 0
        %3296 = vmatpush.bf16.msra.mxu0 0
        %3297 = vmatpush.bf16.msra.mxu0 0
        %3298 = vmatpush.bf16.msra.mxu0 0
        %3299 = vmatpush.bf16.msra.mxu0 0
        %3300 = vmatpush.bf16.msra.mxu0 %v3291
        %3301 = vmatmul.bf16.gmra.mxu0 %v3278
        %v3302 = vpop.f32.mrf.mxu0
        %v3303 = vadd.f32 0.0, %v3302
        %v3304 = vpop.f32.mrf.mxu0
        %v3305 = vadd.f32 0.0, %v3304
        %3306 = vmatmul.bf16.gmra.mxu0 %v3281
        %v3307 = vpop.f32.mrf.mxu0
        %v3308 = vadd.f32 0.0, %v3307
        %v3309 = vpop.f32.mrf.mxu0
        %v3310 = vadd.f32 0.0, %v3309
        %3311 = vmatmul.bf16.gmra.mxu0 %v3284
        %v3312 = vpop.f32.mrf.mxu0
        %v3313 = vadd.f32 0.0, %v3312
        %v3314 = vpop.f32.mrf.mxu0
        %v3315 = vadd.f32 0.0, %v3314
        %3316 = vmatmul.bf16.gmra.mxu0 %v3287
        %v3317 = vpop.f32.mrf.mxu0
        %v3318 = vadd.f32 0.0, %v3317
        %v3319 = vpop.f32.mrf.mxu0
        %v3320 = vadd.f32 0.0, %v3319
        %3321 = vdwg.mxu0
        %v3330 = vunpack.c.l.b16 %v3229
        %v3331 = vunpack.c.l.b16 %v3230
        %v3332 = vunpack.c.l.b16 %v3231
        %v3333 = vunpack.c.l.b16 %v3232
        %v3334 = vunpack.c.l.b16 %v3233
        %v3335 = vunpack.c.l.b16 %v3234
        %v3336 = vunpack.c.l.b16 %v3235
        %v3337 = vunpack.c.l.b16 %v3236
        %v3338 = vpack.c.b16 %v3331, %v3330
        %v3339 = vpack.c.b16 %v3333, %v3332
        %v3340 = vpack.c.b16 %v3335, %v3334
        %v3341 = vpack.c.b16 %v3337, %v3336
        %v3343 = vsel %vm2600, %v3338, 0
        %v3346 = vsel %vm2600, %v3339, 0
        %v3349 = vsel %vm2600, %v3340, 0
        %v3352 = vsel %vm2600, %v3341, 0
        %v3355 = vsel %vm3289, %v3254, 0
        %3357 = vmatpush.bf16.msra.mxu0 0
        %3358 = vmatpush.bf16.msra.mxu0 0
        %3359 = vmatpush.bf16.msra.mxu0 0
        %3360 = vmatpush.bf16.msra.mxu0 0
        %3361 = vmatpush.bf16.msra.mxu0 0
        %3362 = vmatpush.bf16.msra.mxu0 0
        %3363 = vmatpush.bf16.msra.mxu0 0
        %3364 = vmatpush.bf16.msra.mxu0 %v3355
        %3365 = vmatmul.bf16.gmra.mxu0 %v3343
        %v3366 = vpop.f32.mrf.mxu0
        %v3367 = vadd.f32 0.0, %v3366
        %v3368 = vpop.f32.mrf.mxu0
        %v3369 = vadd.f32 0.0, %v3368
        %3370 = vmatmul.bf16.gmra.mxu0 %v3346
        %v3371 = vpop.f32.mrf.mxu0
        %v3372 = vadd.f32 0.0, %v3371
        %v3373 = vpop.f32.mrf.mxu0
        %v3374 = vadd.f32 0.0, %v3373
        %3375 = vmatmul.bf16.gmra.mxu0 %v3349
        %v3376 = vpop.f32.mrf.mxu0
        %v3377 = vadd.f32 0.0, %v3376
        %v3378 = vpop.f32.mrf.mxu0
        %v3379 = vadd.f32 0.0, %v3378
        %3380 = vmatmul.bf16.gmra.mxu0 %v3352
        %v3381 = vpop.f32.mrf.mxu0
        %v3382 = vadd.f32 0.0, %v3381
        %v3383 = vpop.f32.mrf.mxu0
        %v3384 = vadd.f32 0.0, %v3383
        %3385 = vdwg.mxu0
        %v3394 = vunpack.c.l.b16 %v3237
        %v3395 = vunpack.c.l.b16 %v3238
        %v3396 = vunpack.c.l.b16 %v3239
        %v3397 = vunpack.c.l.b16 %v3240
        %v3398 = vunpack.c.l.b16 %v3241
        %v3399 = vunpack.c.l.b16 %v3242
        %v3400 = vunpack.c.l.b16 %v3243
        %v3401 = vunpack.c.l.b16 %v3244
        %v3402 = vpack.c.b16 %v3395, %v3394
        %v3403 = vpack.c.b16 %v3397, %v3396
        %v3404 = vpack.c.b16 %v3399, %v3398
        %v3405 = vpack.c.b16 %v3401, %v3400
        %v3407 = vsel %vm2600, %v3402, 0
        %v3410 = vsel %vm2600, %v3403, 0
        %v3413 = vsel %vm2600, %v3404, 0
        %v3416 = vsel %vm2600, %v3405, 0
        %v3419 = vsel %vm3289, %v3255, 0
        %3421 = vmatpush.bf16.msra.mxu0 0
        %3422 = vmatpush.bf16.msra.mxu0 0
        %3423 = vmatpush.bf16.msra.mxu0 0
        %3424 = vmatpush.bf16.msra.mxu0 0
        %3425 = vmatpush.bf16.msra.mxu0 0
        %3426 = vmatpush.bf16.msra.mxu0 0
        %3427 = vmatpush.bf16.msra.mxu0 0
        %3428 = vmatpush.bf16.msra.mxu0 %v3419
        %3429 = vmatmul.bf16.gmra.mxu0 %v3407
        %v3430 = vpop.f32.mrf.mxu0
        %v3431 = vadd.f32 0.0, %v3430
        %v3432 = vpop.f32.mrf.mxu0
        %v3433 = vadd.f32 0.0, %v3432
        %3434 = vmatmul.bf16.gmra.mxu0 %v3410
        %v3435 = vpop.f32.mrf.mxu0
        %v3436 = vadd.f32 0.0, %v3435
        %v3437 = vpop.f32.mrf.mxu0
        %v3438 = vadd.f32 0.0, %v3437
        %3439 = vmatmul.bf16.gmra.mxu0 %v3413
        %v3440 = vpop.f32.mrf.mxu0
        %v3441 = vadd.f32 0.0, %v3440
        %v3442 = vpop.f32.mrf.mxu0
        %v3443 = vadd.f32 0.0, %v3442
        %3444 = vmatmul.bf16.gmra.mxu0 %v3416
        %v3445 = vpop.f32.mrf.mxu0
        %v3446 = vadd.f32 0.0, %v3445
        %v3447 = vpop.f32.mrf.mxu0
        %v3448 = vadd.f32 0.0, %v3447
        %3449 = vdwg.mxu0
        %v3458 = vunpack.c.l.b16 %v3245
        %v3459 = vunpack.c.l.b16 %v3246
        %v3460 = vunpack.c.l.b16 %v3247
        %v3461 = vunpack.c.l.b16 %v3248
        %v3462 = vunpack.c.l.b16 %v3249
        %v3463 = vunpack.c.l.b16 %v3250
        %v3464 = vunpack.c.l.b16 %v3251
        %v3465 = vunpack.c.l.b16 %v3252
        %v3466 = vpack.c.b16 %v3459, %v3458
        %v3467 = vpack.c.b16 %v3461, %v3460
        %v3468 = vpack.c.b16 %v3463, %v3462
        %v3469 = vpack.c.b16 %v3465, %v3464
        %v3471 = vsel %vm2600, %v3466, 0
        %v3474 = vsel %vm2600, %v3467, 0
        %v3477 = vsel %vm2600, %v3468, 0
        %v3480 = vsel %vm2600, %v3469, 0
        %v3483 = vsel %vm3289, %v3256, 0
        %3485 = vmatpush.bf16.msra.mxu0 0
        %3486 = vmatpush.bf16.msra.mxu0 0
        %3487 = vmatpush.bf16.msra.mxu0 0
        %3488 = vmatpush.bf16.msra.mxu0 0
        %3489 = vmatpush.bf16.msra.mxu0 0
        %3490 = vmatpush.bf16.msra.mxu0 0
        %3491 = vmatpush.bf16.msra.mxu0 0
        %3492 = vmatpush.bf16.msra.mxu0 %v3483
        %3493 = vmatmul.bf16.gmra.mxu0 %v3471
        %v3494 = vpop.f32.mrf.mxu0
        %v3495 = vadd.f32 0.0, %v3494
        %v3496 = vpop.f32.mrf.mxu0
        %v3497 = vadd.f32 0.0, %v3496
        %3498 = vmatmul.bf16.gmra.mxu0 %v3474
        %v3499 = vpop.f32.mrf.mxu0
        %v3500 = vadd.f32 0.0, %v3499
        %v3501 = vpop.f32.mrf.mxu0
        %v3502 = vadd.f32 0.0, %v3501
        %3503 = vmatmul.bf16.gmra.mxu0 %v3477
        %v3504 = vpop.f32.mrf.mxu0
        %v3505 = vadd.f32 0.0, %v3504
        %v3506 = vpop.f32.mrf.mxu0
        %v3507 = vadd.f32 0.0, %v3506
        %3508 = vmatmul.bf16.gmra.mxu0 %v3480
        %v3509 = vpop.f32.mrf.mxu0
        %v3510 = vadd.f32 0.0, %v3509
        %v3511 = vpop.f32.mrf.mxu0
        %v3512 = vadd.f32 0.0, %v3511
        %3513 = vdwg.mxu0
        %v3514 = vpack.c.bf16 %v3303, %v3303
        %v3515 = vpack.c.bf16 %v3305, %v3305
        %v3516 = vpack.c.bf16 %v3308, %v3308
        %v3517 = vpack.c.bf16 %v3310, %v3310
        %v3518 = vpack.c.bf16 %v3313, %v3313
        %v3519 = vpack.c.bf16 %v3315, %v3315
        %v3520 = vpack.c.bf16 %v3318, %v3318
        %v3521 = vpack.c.bf16 %v3320, %v3320
        %v3522 = vpack.c.bf16 %v3367, %v3367
        %v3523 = vpack.c.bf16 %v3369, %v3369
        %v3524 = vpack.c.bf16 %v3372, %v3372
        %v3525 = vpack.c.bf16 %v3374, %v3374
        %v3526 = vpack.c.bf16 %v3377, %v3377
        %v3527 = vpack.c.bf16 %v3379, %v3379
        %v3528 = vpack.c.bf16 %v3382, %v3382
        %v3529 = vpack.c.bf16 %v3384, %v3384
        %v3530 = vpack.c.bf16 %v3431, %v3431
        %v3531 = vpack.c.bf16 %v3433, %v3433
        %v3532 = vpack.c.bf16 %v3436, %v3436
        %v3533 = vpack.c.bf16 %v3438, %v3438
        %v3534 = vpack.c.bf16 %v3441, %v3441
        %v3535 = vpack.c.bf16 %v3443, %v3443
        %v3536 = vpack.c.bf16 %v3446, %v3446
        %v3537 = vpack.c.bf16 %v3448, %v3448
        %v3538 = vpack.c.bf16 %v3495, %v3495
        %v3539 = vpack.c.bf16 %v3497, %v3497
        %v3540 = vpack.c.bf16 %v3500, %v3500
        %v3541 = vpack.c.bf16 %v3502, %v3502
        %v3542 = vpack.c.bf16 %v3505, %v3505
        %v3543 = vpack.c.bf16 %v3507, %v3507
        %v3544 = vpack.c.bf16 %v3510, %v3510
        %v3545 = vpack.c.bf16 %v3512, %v3512
        %v3546 = vld [vmem:[%s1395] sm:$0xf]
        %v3547 = vld [vmem:[%s1395 + $0x4] sm:$0xf]
        %v3548 = vld [vmem:[%s1395 + $0x8] sm:$0xf]
        %v3549 = vld [vmem:[%s1395 + $0xc] sm:$0xf]
        %v3558 = vunpack.c.l.b16 %v3514
        %v3559 = vunpack.c.l.b16 %v3515
        %v3560 = vunpack.c.l.b16 %v3516
        %v3561 = vunpack.c.l.b16 %v3517
        %v3562 = vunpack.c.l.b16 %v3518
        %v3563 = vunpack.c.l.b16 %v3519
        %v3564 = vunpack.c.l.b16 %v3520
        %v3565 = vunpack.c.l.b16 %v3521
        %v3566 = vpack.c.b16 %v3559, %v3558
        %v3567 = vpack.c.b16 %v3561, %v3560
        %v3568 = vpack.c.b16 %v3563, %v3562
        %v3569 = vpack.c.b16 %v3565, %v3564
        %v3571 = vsel %vm2600, %v3566, 0
        %v3574 = vsel %vm2600, %v3567, 0
        %v3577 = vsel %vm2600, %v3568, 0
        %v3580 = vsel %vm2600, %v3569, 0
        %v3583 = vsel %vm3289, %v3546, 0
        %3585 = vmatpush.bf16.msra.mxu0 0
        %3586 = vmatpush.bf16.msra.mxu0 0
        %3587 = vmatpush.bf16.msra.mxu0 0
        %3588 = vmatpush.bf16.msra.mxu0 0
        %3589 = vmatpush.bf16.msra.mxu0 0
        %3590 = vmatpush.bf16.msra.mxu0 0
        %3591 = vmatpush.bf16.msra.mxu0 0
        %3592 = vmatpush.bf16.msra.mxu0 %v3583
        %3593 = vmatmul.bf16.gmra.mxu0 %v3571
        %v3594 = vpop.f32.mrf.mxu0
        %v3595 = vadd.f32 0.0, %v3594
        %v3596 = vpop.f32.mrf.mxu0
        %v3597 = vadd.f32 0.0, %v3596
        %3598 = vmatmul.bf16.gmra.mxu0 %v3574
        %v3599 = vpop.f32.mrf.mxu0
        %v3600 = vadd.f32 0.0, %v3599
        %v3601 = vpop.f32.mrf.mxu0
        %v3602 = vadd.f32 0.0, %v3601
        %3603 = vmatmul.bf16.gmra.mxu0 %v3577
        %v3604 = vpop.f32.mrf.mxu0
        %v3605 = vadd.f32 0.0, %v3604
        %v3606 = vpop.f32.mrf.mxu0
        %v3607 = vadd.f32 0.0, %v3606
        %3608 = vmatmul.bf16.gmra.mxu0 %v3580
        %v3609 = vpop.f32.mrf.mxu0
        %v3610 = vadd.f32 0.0, %v3609
        %v3611 = vpop.f32.mrf.mxu0
        %v3612 = vadd.f32 0.0, %v3611
        %3613 = vdwg.mxu0
        %v3622 = vunpack.c.l.b16 %v3522
        %v3623 = vunpack.c.l.b16 %v3523
        %v3624 = vunpack.c.l.b16 %v3524
        %v3625 = vunpack.c.l.b16 %v3525
        %v3626 = vunpack.c.l.b16 %v3526
        %v3627 = vunpack.c.l.b16 %v3527
        %v3628 = vunpack.c.l.b16 %v3528
        %v3629 = vunpack.c.l.b16 %v3529
        %v3630 = vpack.c.b16 %v3623, %v3622
        %v3631 = vpack.c.b16 %v3625, %v3624
        %v3632 = vpack.c.b16 %v3627, %v3626
        %v3633 = vpack.c.b16 %v3629, %v3628
        %v3635 = vsel %vm2600, %v3630, 0
        %v3638 = vsel %vm2600, %v3631, 0
        %v3641 = vsel %vm2600, %v3632, 0
        %v3644 = vsel %vm2600, %v3633, 0
        %v3647 = vsel %vm3289, %v3547, 0
        %3649 = vmatpush.bf16.msra.mxu0 0
        %3650 = vmatpush.bf16.msra.mxu0 0
        %3651 = vmatpush.bf16.msra.mxu0 0
        %3652 = vmatpush.bf16.msra.mxu0 0
        %3653 = vmatpush.bf16.msra.mxu0 0
        %3654 = vmatpush.bf16.msra.mxu0 0
        %3655 = vmatpush.bf16.msra.mxu0 0
        %3656 = vmatpush.bf16.msra.mxu0 %v3647
        %3657 = vmatmul.bf16.gmra.mxu0 %v3635
        %v3658 = vpop.f32.mrf.mxu0
        %v3659 = vadd.f32 0.0, %v3658
        %v3660 = vpop.f32.mrf.mxu0
        %v3661 = vadd.f32 0.0, %v3660
        %3662 = vmatmul.bf16.gmra.mxu0 %v3638
        %v3663 = vpop.f32.mrf.mxu0
        %v3664 = vadd.f32 0.0, %v3663
        %v3665 = vpop.f32.mrf.mxu0
        %v3666 = vadd.f32 0.0, %v3665
        %3667 = vmatmul.bf16.gmra.mxu0 %v3641
        %v3668 = vpop.f32.mrf.mxu0
        %v3669 = vadd.f32 0.0, %v3668
        %v3670 = vpop.f32.mrf.mxu0
        %v3671 = vadd.f32 0.0, %v3670
        %3672 = vmatmul.bf16.gmra.mxu0 %v3644
        %v3673 = vpop.f32.mrf.mxu0
        %v3674 = vadd.f32 0.0, %v3673
        %v3675 = vpop.f32.mrf.mxu0
        %v3676 = vadd.f32 0.0, %v3675
        %3677 = vdwg.mxu0
        %v3686 = vunpack.c.l.b16 %v3530
        %v3687 = vunpack.c.l.b16 %v3531
        %v3688 = vunpack.c.l.b16 %v3532
        %v3689 = vunpack.c.l.b16 %v3533
        %v3690 = vunpack.c.l.b16 %v3534
        %v3691 = vunpack.c.l.b16 %v3535
        %v3692 = vunpack.c.l.b16 %v3536
        %v3693 = vunpack.c.l.b16 %v3537
        %v3694 = vpack.c.b16 %v3687, %v3686
        %v3695 = vpack.c.b16 %v3689, %v3688
        %v3696 = vpack.c.b16 %v3691, %v3690
        %v3697 = vpack.c.b16 %v3693, %v3692
        %v3699 = vsel %vm2600, %v3694, 0
        %v3702 = vsel %vm2600, %v3695, 0
        %v3705 = vsel %vm2600, %v3696, 0
        %v3708 = vsel %vm2600, %v3697, 0
        %v3711 = vsel %vm3289, %v3548, 0
        %3713 = vmatpush.bf16.msra.mxu0 0
        %3714 = vmatpush.bf16.msra.mxu0 0
        %3715 = vmatpush.bf16.msra.mxu0 0
        %3716 = vmatpush.bf16.msra.mxu0 0
        %3717 = vmatpush.bf16.msra.mxu0 0
        %3718 = vmatpush.bf16.msra.mxu0 0
        %3719 = vmatpush.bf16.msra.mxu0 0
        %3720 = vmatpush.bf16.msra.mxu0 %v3711
        %3721 = vmatmul.bf16.gmra.mxu0 %v3699
        %v3722 = vpop.f32.mrf.mxu0
        %v3723 = vadd.f32 0.0, %v3722
        %v3724 = vpop.f32.mrf.mxu0
        %v3725 = vadd.f32 0.0, %v3724
        %3726 = vmatmul.bf16.gmra.mxu0 %v3702
        %v3727 = vpop.f32.mrf.mxu0
        %v3728 = vadd.f32 0.0, %v3727
        %v3729 = vpop.f32.mrf.mxu0
        %v3730 = vadd.f32 0.0, %v3729
        %3731 = vmatmul.bf16.gmra.mxu0 %v3705
        %v3732 = vpop.f32.mrf.mxu0
        %v3733 = vadd.f32 0.0, %v3732
        %v3734 = vpop.f32.mrf.mxu0
        %v3735 = vadd.f32 0.0, %v3734
        %3736 = vmatmul.bf16.gmra.mxu0 %v3708
        %v3737 = vpop.f32.mrf.mxu0
        %v3738 = vadd.f32 0.0, %v3737
        %v3739 = vpop.f32.mrf.mxu0
        %v3740 = vadd.f32 0.0, %v3739
        %3741 = vdwg.mxu0
        %v3750 = vunpack.c.l.b16 %v3538
        %v3751 = vunpack.c.l.b16 %v3539
        %v3752 = vunpack.c.l.b16 %v3540
        %v3753 = vunpack.c.l.b16 %v3541
        %v3754 = vunpack.c.l.b16 %v3542
        %v3755 = vunpack.c.l.b16 %v3543
        %v3756 = vunpack.c.l.b16 %v3544
        %v3757 = vunpack.c.l.b16 %v3545
        %v3758 = vpack.c.b16 %v3751, %v3750
        %v3759 = vpack.c.b16 %v3753, %v3752
        %v3760 = vpack.c.b16 %v3755, %v3754
        %v3761 = vpack.c.b16 %v3757, %v3756
        %v3763 = vsel %vm2600, %v3758, 0
        %v3766 = vsel %vm2600, %v3759, 0
        %v3769 = vsel %vm2600, %v3760, 0
        %v3772 = vsel %vm2600, %v3761, 0
        %v3775 = vsel %vm3289, %v3549, 0
        %3777 = vmatpush.bf16.msra.mxu0 0
        %3778 = vmatpush.bf16.msra.mxu0 0
        %3779 = vmatpush.bf16.msra.mxu0 0
        %3780 = vmatpush.bf16.msra.mxu0 0
        %3781 = vmatpush.bf16.msra.mxu0 0
        %3782 = vmatpush.bf16.msra.mxu0 0
        %3783 = vmatpush.bf16.msra.mxu0 0
        %3784 = vmatpush.bf16.msra.mxu0 %v3775
        %3785 = vmatmul.bf16.gmra.mxu0 %v3763
        %v3786 = vpop.f32.mrf.mxu0
        %v3787 = vadd.f32 0.0, %v3786
        %v3788 = vpop.f32.mrf.mxu0
        %v3789 = vadd.f32 0.0, %v3788
        %3790 = vmatmul.bf16.gmra.mxu0 %v3766
        %v3791 = vpop.f32.mrf.mxu0
        %v3792 = vadd.f32 0.0, %v3791
        %v3793 = vpop.f32.mrf.mxu0
        %v3794 = vadd.f32 0.0, %v3793
        %3795 = vmatmul.bf16.gmra.mxu0 %v3769
        %v3796 = vpop.f32.mrf.mxu0
        %v3797 = vadd.f32 0.0, %v3796
        %v3798 = vpop.f32.mrf.mxu0
        %v3799 = vadd.f32 0.0, %v3798
        %3800 = vmatmul.bf16.gmra.mxu0 %v3772
        %v3801 = vpop.f32.mrf.mxu0
        %v3802 = vadd.f32 0.0, %v3801
        %v3803 = vpop.f32.mrf.mxu0
        %v3804 = vadd.f32 0.0, %v3803
        %3805 = vdwg.mxu0
        %v3806 = vsel %vm1464, %v3595, 0.0
        %v3807 = vsel %vm1464, %v3659, 0.0
        %v3808 = vadd.f32 %v3806, %v3807
        %v3809 = vsel %vm1464, %v3723, 0.0
        %v3810 = vadd.f32 %v3808, %v3809
        %v3811 = vsel %vm1464, %v3787, 0.0
        %v3812 = vadd.f32 %v3810, %v3811
        %v3813 = vsel %vm1464, %v3597, 0.0
        %v3814 = vsel %vm1464, %v3661, 0.0
        %v3815 = vadd.f32 %v3813, %v3814
        %v3816 = vsel %vm1464, %v3725, 0.0
        %v3817 = vadd.f32 %v3815, %v3816
        %v3818 = vsel %vm1464, %v3789, 0.0
        %v3819 = vadd.f32 %v3817, %v3818
        %v3820 = vsel %vm1464, %v3600, 0.0
        %v3821 = vsel %vm1464, %v3664, 0.0
        %v3822 = vadd.f32 %v3820, %v3821
        %v3823 = vsel %vm1464, %v3728, 0.0
        %v3824 = vadd.f32 %v3822, %v3823
        %v3825 = vsel %vm1464, %v3792, 0.0
        %v3826 = vadd.f32 %v3824, %v3825
        %v3827 = vsel %vm1464, %v3602, 0.0
        %v3828 = vsel %vm1464, %v3666, 0.0
        %v3829 = vadd.f32 %v3827, %v3828
        %v3830 = vsel %vm1464, %v3730, 0.0
        %v3831 = vadd.f32 %v3829, %v3830
        %v3832 = vsel %vm1464, %v3794, 0.0
        %v3833 = vadd.f32 %v3831, %v3832
        %v3834 = vsel %vm1464, %v3605, 0.0
        %v3835 = vsel %vm1464, %v3669, 0.0
        %v3836 = vadd.f32 %v3834, %v3835
        %v3837 = vsel %vm1464, %v3733, 0.0
        %v3838 = vadd.f32 %v3836, %v3837
        %v3839 = vsel %vm1464, %v3797, 0.0
        %v3840 = vadd.f32 %v3838, %v3839
        %v3841 = vsel %vm1464, %v3607, 0.0
        %v3842 = vsel %vm1464, %v3671, 0.0
        %v3843 = vadd.f32 %v3841, %v3842
        %v3844 = vsel %vm1464, %v3735, 0.0
        %v3845 = vadd.f32 %v3843, %v3844
        %v3846 = vsel %vm1464, %v3799, 0.0
        %v3847 = vadd.f32 %v3845, %v3846
        %v3848 = vsel %vm1464, %v3610, 0.0
        %v3849 = vsel %vm1464, %v3674, 0.0
        %v3850 = vadd.f32 %v3848, %v3849
        %v3851 = vsel %vm1464, %v3738, 0.0
        %v3852 = vadd.f32 %v3850, %v3851
        %v3853 = vsel %vm1464, %v3802, 0.0
        %v3854 = vadd.f32 %v3852, %v3853
        %v3855 = vsel %vm1464, %v3612, 0.0
        %v3856 = vsel %vm1464, %v3676, 0.0
        %v3857 = vadd.f32 %v3855, %v3856
        %v3858 = vsel %vm1464, %v3740, 0.0
        %v3859 = vadd.f32 %v3857, %v3858
        %v3860 = vsel %vm1464, %v3804, 0.0
        %v3861 = vadd.f32 %v3859, %v3860
        %v3862 = vld [vmem:[%s1398] sm:$0x1]
        %v3864 = vperm.slane %v3862, 0
        %v3866 = vadd.f32 %v3812, %v3864
        %v3867 = vadd.f32 %v3819, %v3864
        %v3868 = vadd.f32 %v3826, %v3864
        %v3869 = vadd.f32 %v3833, %v3864
        %v3870 = vadd.f32 %v3840, %v3864
        %v3871 = vadd.f32 %v3847, %v3864
        %v3872 = vadd.f32 %v3854, %v3864
        %v3873 = vadd.f32 %v3861, %v3864
        %v3874 = vadd.f32 %v1443, %v3866
        %v3875 = vadd.f32 %v1444, %v3867
        %v3876 = vadd.f32 %v1445, %v3868
        %v3877 = vadd.f32 %v1446, %v3869
        %v3878 = vadd.f32 %v1447, %v3870
        %v3879 = vadd.f32 %v1448, %v3871
        %v3880 = vadd.f32 %v1449, %v3872
        %v3881 = vadd.f32 %v1450, %v3873
        %v3882 = vld [vmem:[%s1401] sm:$0x1]
        %v3883 = vld [vmem:[%s1404] sm:$0x1]
        %v3884 = vsel %vm1464, %v3874, 0.0
        %3885 = vadd.xlane.f32.xlu0 %v3884
        %v3886 = vpop.xlane.xlu0 %3885
        %v3887 = vsel %vm1464, %v3875, 0.0
        %3888 = vadd.xlane.f32.xlu0 %v3887
        %v3889 = vpop.xlane.xlu0 %3888
        %v3890 = vsel %vm1464, %v3876, 0.0
        %3891 = vadd.xlane.f32.xlu0 %v3890
        %v3892 = vpop.xlane.xlu0 %3891
        %v3893 = vsel %vm1464, %v3877, 0.0
        %3894 = vadd.xlane.f32.xlu0 %v3893
        %v3895 = vpop.xlane.xlu0 %3894
        %v3896 = vsel %vm1464, %v3878, 0.0
        %3897 = vadd.xlane.f32.xlu0 %v3896
        %v3898 = vpop.xlane.xlu0 %3897
        %v3899 = vsel %vm1464, %v3879, 0.0
        %3900 = vadd.xlane.f32.xlu0 %v3899
        %v3901 = vpop.xlane.xlu0 %3900
        %v3902 = vsel %vm1464, %v3880, 0.0
        %3903 = vadd.xlane.f32.xlu0 %v3902
        %v3904 = vpop.xlane.xlu0 %3903
        %v3905 = vsel %vm1464, %v3881, 0.0
        %3906 = vadd.xlane.f32.xlu0 %v3905
        %v3907 = vpop.xlane.xlu0 %3906
        %v3908 = vmul.f32 %v3886, %v1792
        %v3909 = vmul.f32 %v3889, %v1792
        %v3910 = vmul.f32 %v3892, %v1792
        %v3911 = vmul.f32 %v3895, %v1792
        %v3912 = vmul.f32 %v3898, %v1792
        %v3913 = vmul.f32 %v3901, %v1792
        %v3914 = vmul.f32 %v3904, %v1792
        %v3915 = vmul.f32 %v3907, %v1792
        %v3916 = vsub.f32 %v3874, %v3908
        %v3917 = vsub.f32 %v3875, %v3909
        %v3918 = vsub.f32 %v3876, %v3910
        %v3919 = vsub.f32 %v3877, %v3911
        %v3920 = vsub.f32 %v3878, %v3912
        %v3921 = vsub.f32 %v3879, %v3913
        %v3922 = vsub.f32 %v3880, %v3914
        %v3923 = vsub.f32 %v3881, %v3915
        %v3924 = vmul.f32 %v3916, %v3916
        %v3925 = vmul.f32 %v3917, %v3917
        %v3926 = vmul.f32 %v3918, %v3918
        %v3927 = vmul.f32 %v3919, %v3919
        %v3928 = vmul.f32 %v3920, %v3920
        %v3929 = vmul.f32 %v3921, %v3921
        %v3930 = vmul.f32 %v3922, %v3922
        %v3931 = vmul.f32 %v3923, %v3923
        %v3932 = vsel %vm1464, %v3924, 0.0
        %3933 = vadd.xlane.f32.xlu0 %v3932
        %v3934 = vpop.xlane.xlu0 %3933
        %v3935 = vsel %vm1464, %v3925, 0.0
        %3936 = vadd.xlane.f32.xlu0 %v3935
        %v3937 = vpop.xlane.xlu0 %3936
        %v3938 = vsel %vm1464, %v3926, 0.0
        %3939 = vadd.xlane.f32.xlu0 %v3938
        %v3940 = vpop.xlane.xlu0 %3939
        %v3941 = vsel %vm1464, %v3927, 0.0
        %3942 = vadd.xlane.f32.xlu0 %v3941
        %v3943 = vpop.xlane.xlu0 %3942
        %v3944 = vsel %vm1464, %v3928, 0.0
        %3945 = vadd.xlane.f32.xlu0 %v3944
        %v3946 = vpop.xlane.xlu0 %3945
        %v3947 = vsel %vm1464, %v3929, 0.0
        %3948 = vadd.xlane.f32.xlu0 %v3947
        %v3949 = vpop.xlane.xlu0 %3948
        %v3950 = vsel %vm1464, %v3930, 0.0
        %3951 = vadd.xlane.f32.xlu0 %v3950
        %v3952 = vpop.xlane.xlu0 %3951
        %v3953 = vsel %vm1464, %v3931, 0.0
        %3954 = vadd.xlane.f32.xlu0 %v3953
        %v3955 = vpop.xlane.xlu0 %3954
        %v3956 = vmul.f32 %v3934, %v1792
        %v3957 = vmul.f32 %v3937, %v1792
        %v3958 = vmul.f32 %v3940, %v1792
        %v3959 = vmul.f32 %v3943, %v1792
        %v3960 = vmul.f32 %v3946, %v1792
        %v3961 = vmul.f32 %v3949, %v1792
        %v3962 = vmul.f32 %v3952, %v1792
        %v3963 = vmul.f32 %v3955, %v1792
        %v3964 = vadd.f32 %v3956, 1e-06
        %v3965 = vadd.f32 %v3957, 1e-06
        %v3966 = vadd.f32 %v3958, 1e-06
        %v3967 = vadd.f32 %v3959, 1e-06
        %v3968 = vadd.f32 %v3960, 1e-06
        %v3969 = vadd.f32 %v3961, 1e-06
        %v3970 = vadd.f32 %v3962, 1e-06
        %v3971 = vadd.f32 %v3963, 1e-06
        %v3972 = vrsqrt.pop %v3964
        %v3973 = vmul.f32 %v3972, %v3964
        %v3974 = vmul.f32 %v3973, %v3972
        %v3975 = vmul.f32 0.5, %v3974
        %v3976 = vsub.f32 1.5, %v3975
        %v3977 = vmul.f32 %v3972, %v3976
        %vm3978 = vweird.f32 %v3964
        %vm3979 = vweird.f32 %v3972
        %vm3980 = vmor %vm3978, %vm3979
        %v3981 = vsel %vm3980, %v3972, %v3977
        %v3982 = vrsqrt.pop %v3965
        %v3983 = vmul.f32 %v3982, %v3965
        %v3984 = vmul.f32 %v3983, %v3982
        %v3985 = vmul.f32 0.5, %v3984
        %v3986 = vsub.f32 1.5, %v3985
        %v3987 = vmul.f32 %v3982, %v3986
        %vm3988 = vweird.f32 %v3965
        %vm3989 = vweird.f32 %v3982
        %vm3990 = vmor %vm3988, %vm3989
        %v3991 = vsel %vm3990, %v3982, %v3987
        %v3992 = vrsqrt.pop %v3966
        %v3993 = vmul.f32 %v3992, %v3966
        %v3994 = vmul.f32 %v3993, %v3992
        %v3995 = vmul.f32 0.5, %v3994
        %v3996 = vsub.f32 1.5, %v3995
        %v3997 = vmul.f32 %v3992, %v3996
        %vm3998 = vweird.f32 %v3966
        %vm3999 = vweird.f32 %v3992
        %vm4000 = vmor %vm3998, %vm3999
        %v4001 = vsel %vm4000, %v3992, %v3997
        %v4002 = vrsqrt.pop %v3967
        %v4003 = vmul.f32 %v4002, %v3967
        %v4004 = vmul.f32 %v4003, %v4002
        %v4005 = vmul.f32 0.5, %v4004
        %v4006 = vsub.f32 1.5, %v4005
        %v4007 = vmul.f32 %v4002, %v4006
        %vm4008 = vweird.f32 %v3967
        %vm4009 = vweird.f32 %v4002
        %vm4010 = vmor %vm4008, %vm4009
        %v4011 = vsel %vm4010, %v4002, %v4007
        %v4012 = vrsqrt.pop %v3968
        %v4013 = vmul.f32 %v4012, %v3968
        %v4014 = vmul.f32 %v4013, %v4012
        %v4015 = vmul.f32 0.5, %v4014
        %v4016 = vsub.f32 1.5, %v4015
        %v4017 = vmul.f32 %v4012, %v4016
        %vm4018 = vweird.f32 %v3968
        %vm4019 = vweird.f32 %v4012
        %vm4020 = vmor %vm4018, %vm4019
        %v4021 = vsel %vm4020, %v4012, %v4017
        %v4022 = vrsqrt.pop %v3969
        %v4023 = vmul.f32 %v4022, %v3969
        %v4024 = vmul.f32 %v4023, %v4022
        %v4025 = vmul.f32 0.5, %v4024
        %v4026 = vsub.f32 1.5, %v4025
        %v4027 = vmul.f32 %v4022, %v4026
        %vm4028 = vweird.f32 %v3969
        %vm4029 = vweird.f32 %v4022
        %vm4030 = vmor %vm4028, %vm4029
        %v4031 = vsel %vm4030, %v4022, %v4027
        %v4032 = vrsqrt.pop %v3970
        %v4033 = vmul.f32 %v4032, %v3970
        %v4034 = vmul.f32 %v4033, %v4032
        %v4035 = vmul.f32 0.5, %v4034
        %v4036 = vsub.f32 1.5, %v4035
        %v4037 = vmul.f32 %v4032, %v4036
        %vm4038 = vweird.f32 %v3970
        %vm4039 = vweird.f32 %v4032
        %vm4040 = vmor %vm4038, %vm4039
        %v4041 = vsel %vm4040, %v4032, %v4037
        %v4042 = vrsqrt.pop %v3971
        %v4043 = vmul.f32 %v4042, %v3971
        %v4044 = vmul.f32 %v4043, %v4042
        %v4045 = vmul.f32 0.5, %v4044
        %v4046 = vsub.f32 1.5, %v4045
        %v4047 = vmul.f32 %v4042, %v4046
        %vm4048 = vweird.f32 %v3971
        %vm4049 = vweird.f32 %v4042
        %vm4050 = vmor %vm4048, %vm4049
        %v4051 = vsel %vm4050, %v4042, %v4047
        %v4052 = vmul.f32 %v3916, %v3981
        %v4053 = vmul.f32 %v3917, %v3991
        %v4054 = vmul.f32 %v3918, %v4001
        %v4055 = vmul.f32 %v3919, %v4011
        %v4056 = vmul.f32 %v3920, %v4021
        %v4057 = vmul.f32 %v3921, %v4031
        %v4058 = vmul.f32 %v3922, %v4041
        %v4059 = vmul.f32 %v3923, %v4051
        %v4061 = vperm.slane %v3882, 0
        %v4063 = vmul.f32 %v4052, %v4061
        %v4064 = vmul.f32 %v4053, %v4061
        %v4065 = vmul.f32 %v4054, %v4061
        %v4066 = vmul.f32 %v4055, %v4061
        %v4067 = vmul.f32 %v4056, %v4061
        %v4068 = vmul.f32 %v4057, %v4061
        %v4069 = vmul.f32 %v4058, %v4061
        %v4070 = vmul.f32 %v4059, %v4061
        %v4072 = vperm.slane %v3883, 0
        %v4074 = vadd.f32 %v4063, %v4072
        %v4075 = vadd.f32 %v4064, %v4072
        %v4076 = vadd.f32 %v4065, %v4072
        %v4077 = vadd.f32 %v4066, %v4072
        %v4078 = vadd.f32 %v4067, %v4072
        %v4079 = vadd.f32 %v4068, %v4072
        %v4080 = vadd.f32 %v4069, %v4072
        %v4081 = vadd.f32 %v4070, %v4072
        %v4082 = vpack.c.bf16 %v4075, %v4074
        %v4083 = vpack.c.bf16 %v4077, %v4076
        %v4084 = vpack.c.bf16 %v4079, %v4078
        %v4085 = vpack.c.bf16 %v4081, %v4080
        %v4086 = vld [vmem:[%s1409] sm:$0xf]
        %v4087 = vld [vmem:[%s1409 + $0x4] sm:$0xf]
        %v4088 = vld [vmem:[%s1409 + $0x8] sm:$0xf]
        %v4089 = vld [vmem:[%s1409 + $0xc] sm:$0xf]
        %v4090 = vld [vmem:[%s1412] sm:$0x1]
        %v4092 = vperm.slane %v4090, 0
        %v4098 = vunpack.c.l.b16 %v4086
        %v4099 = vunpack.c.l.b16 %v4087
        %v4100 = vunpack.c.l.b16 %v4088
        %v4101 = vunpack.c.l.b16 %v4089
        %v4102 = vpack.c.b16 %v4099, %v4098
        %v4103 = vpack.c.b16 %v4101, %v4100
        %v4107 = vsel %vm1464, %v4082, 0
        %v4110 = vsel %vm1464, %v4083, 0
        %v4113 = vsel %vm1464, %v4084, 0
        %v4116 = vsel %vm1464, %v4085, 0
        %4118 = vmatpush.bf16.msra.mxu0 0
        %4119 = vmatpush.bf16.msra.mxu0 0
        %4120 = vmatpush.bf16.msra.mxu0 0
        %4121 = vmatpush.bf16.msra.mxu0 0
        %4122 = vmatpush.bf16.msra.mxu0 0
        %4123 = vmatpush.bf16.msra.mxu0 0
        %4124 = vmatpush.bf16.msra.mxu0 %v4103
        %4125 = vmatpush.bf16.msra.mxu0 %v4102
        %4126 = vmatmul.bf16.gmra.mxu0 %v4107
        %v4127 = vpop.f32.mrf.mxu0
        %v4128 = vadd.f32 %v4092, %v4127
        %v4129 = vpop.f32.mrf.mxu0
        %v4130 = vadd.f32 %v4092, %v4129
        %4131 = vmatmul.bf16.gmra.mxu0 %v4110
        %v4132 = vpop.f32.mrf.mxu0
        %v4133 = vadd.f32 %v4092, %v4132
        %v4134 = vpop.f32.mrf.mxu0
        %v4135 = vadd.f32 %v4092, %v4134
        %4136 = vmatmul.bf16.gmra.mxu0 %v4113
        %v4137 = vpop.f32.mrf.mxu0
        %v4138 = vadd.f32 %v4092, %v4137
        %v4139 = vpop.f32.mrf.mxu0
        %v4140 = vadd.f32 %v4092, %v4139
        %4141 = vmatmul.bf16.gmra.mxu0 %v4116
        %v4142 = vpop.f32.mrf.mxu0
        %v4143 = vadd.f32 %v4092, %v4142
        %v4144 = vpop.f32.mrf.mxu0
        %v4145 = vadd.f32 %v4092, %v4144
        %4146 = vdwg.mxu0
        %v4147 = vxor.u32 %v4128, 2147483648
        %v4148 = vxor.u32 %v4130, 2147483648
        %v4149 = vxor.u32 %v4133, 2147483648
        %v4150 = vxor.u32 %v4135, 2147483648
        %v4151 = vxor.u32 %v4138, 2147483648
        %v4152 = vxor.u32 %v4140, 2147483648
        %v4153 = vxor.u32 %v4143, 2147483648
        %v4154 = vxor.u32 %v4145, 2147483648
        %v4155 = vmul.f32 %v4147, 1.442695
        %v4156 = vpow.pop %v4155
        %v4157 = vmul.f32 %v4148, 1.442695
        %v4158 = vpow.pop %v4157
        %v4159 = vmul.f32 %v4149, 1.442695
        %v4160 = vpow.pop %v4159
        %v4161 = vmul.f32 %v4150, 1.442695
        %v4162 = vpow.pop %v4161
        %v4163 = vmul.f32 %v4151, 1.442695
        %v4164 = vpow.pop %v4163
        %v4165 = vmul.f32 %v4152, 1.442695
        %v4166 = vpow.pop %v4165
        %v4167 = vmul.f32 %v4153, 1.442695
        %v4168 = vpow.pop %v4167
        %v4169 = vmul.f32 %v4154, 1.442695
        %v4170 = vpow.pop %v4169
        %v4171 = vadd.f32 %v4156, 1.0
        %v4172 = vadd.f32 %v4158, 1.0
        %v4173 = vadd.f32 %v4160, 1.0
        %v4174 = vadd.f32 %v4162, 1.0
        %v4175 = vadd.f32 %v4164, 1.0
        %v4176 = vadd.f32 %v4166, 1.0
        %v4177 = vadd.f32 %v4168, 1.0
        %v4178 = vadd.f32 %v4170, 1.0
        %v4179 = vrcp.pop %v4171
        %v4180 = vmul.f32 %v4171, %v4179
        %v4181 = vsub.f32 1.0, %v4180
        %v4182 = vmul.f32 %v4179, %v4181
        %v4183 = vadd.f32 %v4179, %v4182
        %vm4184 = vweird.f32 %v4171
        %vm4185 = vweird.f32 %v4179
        %vm4186 = vmor %vm4184, %vm4185
        %v4187 = vsel %vm4186, %v4179, %v4183
        %v4188 = vand.u32 2147483647, %v4171
        %vm4189 = vcmp.eq.f32.partialorder %v4188, 8.507059e+37
        %v4190 = vand.u32 %v4171, 2147483648
        %v4191 = vor.u32 1.1754944e-38, %v4190
        %v4192 = vsel %vm4189, %v4191, %v4187
        %v4193 = vmul.f32 1.0, %v4192
        %v4194 = vrcp.pop %v4172
        %v4195 = vmul.f32 %v4172, %v4194
        %v4196 = vsub.f32 1.0, %v4195
        %v4197 = vmul.f32 %v4194, %v4196
        %v4198 = vadd.f32 %v4194, %v4197
        %vm4199 = vweird.f32 %v4172
        %vm4200 = vweird.f32 %v4194
        %vm4201 = vmor %vm4199, %vm4200
        %v4202 = vsel %vm4201, %v4194, %v4198
        %v4203 = vand.u32 2147483647, %v4172
        %vm4204 = vcmp.eq.f32.partialorder %v4203, 8.507059e+37
        %v4205 = vand.u32 %v4172, 2147483648
        %v4206 = vor.u32 1.1754944e-38, %v4205
        %v4207 = vsel %vm4204, %v4206, %v4202
        %v4208 = vmul.f32 1.0, %v4207
        %v4209 = vrcp.pop %v4173
        %v4210 = vmul.f32 %v4173, %v4209
        %v4211 = vsub.f32 1.0, %v4210
        %v4212 = vmul.f32 %v4209, %v4211
        %v4213 = vadd.f32 %v4209, %v4212
        %vm4214 = vweird.f32 %v4173
        %vm4215 = vweird.f32 %v4209
        %vm4216 = vmor %vm4214, %vm4215
        %v4217 = vsel %vm4216, %v4209, %v4213
        %v4218 = vand.u32 2147483647, %v4173
        %vm4219 = vcmp.eq.f32.partialorder %v4218, 8.507059e+37
        %v4220 = vand.u32 %v4173, 2147483648
        %v4221 = vor.u32 1.1754944e-38, %v4220
        %v4222 = vsel %vm4219, %v4221, %v4217
        %v4223 = vmul.f32 1.0, %v4222
        %v4224 = vrcp.pop %v4174
        %v4225 = vmul.f32 %v4174, %v4224
        %v4226 = vsub.f32 1.0, %v4225
        %v4227 = vmul.f32 %v4224, %v4226
        %v4228 = vadd.f32 %v4224, %v4227
        %vm4229 = vweird.f32 %v4174
        %vm4230 = vweird.f32 %v4224
        %vm4231 = vmor %vm4229, %vm4230
        %v4232 = vsel %vm4231, %v4224, %v4228
        %v4233 = vand.u32 2147483647, %v4174
        %vm4234 = vcmp.eq.f32.partialorder %v4233, 8.507059e+37
        %v4235 = vand.u32 %v4174, 2147483648
        %v4236 = vor.u32 1.1754944e-38, %v4235
        %v4237 = vsel %vm4234, %v4236, %v4232
        %v4238 = vmul.f32 1.0, %v4237
        %v4239 = vrcp.pop %v4175
        %v4240 = vmul.f32 %v4175, %v4239
        %v4241 = vsub.f32 1.0, %v4240
        %v4242 = vmul.f32 %v4239, %v4241
        %v4243 = vadd.f32 %v4239, %v4242
        %vm4244 = vweird.f32 %v4175
        %vm4245 = vweird.f32 %v4239
        %vm4246 = vmor %vm4244, %vm4245
        %v4247 = vsel %vm4246, %v4239, %v4243
        %v4248 = vand.u32 2147483647, %v4175
        %vm4249 = vcmp.eq.f32.partialorder %v4248, 8.507059e+37
        %v4250 = vand.u32 %v4175, 2147483648
        %v4251 = vor.u32 1.1754944e-38, %v4250
        %v4252 = vsel %vm4249, %v4251, %v4247
        %v4253 = vmul.f32 1.0, %v4252
        %v4254 = vrcp.pop %v4176
        %v4255 = vmul.f32 %v4176, %v4254
        %v4256 = vsub.f32 1.0, %v4255
        %v4257 = vmul.f32 %v4254, %v4256
        %v4258 = vadd.f32 %v4254, %v4257
        %vm4259 = vweird.f32 %v4176
        %vm4260 = vweird.f32 %v4254
        %vm4261 = vmor %vm4259, %vm4260
        %v4262 = vsel %vm4261, %v4254, %v4258
        %v4263 = vand.u32 2147483647, %v4176
        %vm4264 = vcmp.eq.f32.partialorder %v4263, 8.507059e+37
        %v4265 = vand.u32 %v4176, 2147483648
        %v4266 = vor.u32 1.1754944e-38, %v4265
        %v4267 = vsel %vm4264, %v4266, %v4262
        %v4268 = vmul.f32 1.0, %v4267
        %v4269 = vrcp.pop %v4177
        %v4270 = vmul.f32 %v4177, %v4269
        %v4271 = vsub.f32 1.0, %v4270
        %v4272 = vmul.f32 %v4269, %v4271
        %v4273 = vadd.f32 %v4269, %v4272
        %vm4274 = vweird.f32 %v4177
        %vm4275 = vweird.f32 %v4269
        %vm4276 = vmor %vm4274, %vm4275
        %v4277 = vsel %vm4276, %v4269, %v4273
        %v4278 = vand.u32 2147483647, %v4177
        %vm4279 = vcmp.eq.f32.partialorder %v4278, 8.507059e+37
        %v4280 = vand.u32 %v4177, 2147483648
        %v4281 = vor.u32 1.1754944e-38, %v4280
        %v4282 = vsel %vm4279, %v4281, %v4277
        %v4283 = vmul.f32 1.0, %v4282
        %v4284 = vrcp.pop %v4178
        %v4285 = vmul.f32 %v4178, %v4284
        %v4286 = vsub.f32 1.0, %v4285
        %v4287 = vmul.f32 %v4284, %v4286
        %v4288 = vadd.f32 %v4284, %v4287
        %vm4289 = vweird.f32 %v4178
        %vm4290 = vweird.f32 %v4284
        %vm4291 = vmor %vm4289, %vm4290
        %v4292 = vsel %vm4291, %v4284, %v4288
        %v4293 = vand.u32 2147483647, %v4178
        %vm4294 = vcmp.eq.f32.partialorder %v4293, 8.507059e+37
        %v4295 = vand.u32 %v4178, 2147483648
        %v4296 = vor.u32 1.1754944e-38, %v4295
        %v4297 = vsel %vm4294, %v4296, %v4292
        %v4298 = vmul.f32 1.0, %v4297
        %v4299 = vmul.f32 %v4128, %v4193
        %v4300 = vmul.f32 %v4130, %v4208
        %v4301 = vmul.f32 %v4133, %v4223
        %v4302 = vmul.f32 %v4135, %v4238
        %v4303 = vmul.f32 %v4138, %v4253
        %v4304 = vmul.f32 %v4140, %v4268
        %v4305 = vmul.f32 %v4143, %v4283
        %v4306 = vmul.f32 %v4145, %v4298
        %v4307 = vpack.c.bf16 %v4300, %v4299
        %v4308 = vpack.c.bf16 %v4302, %v4301
        %v4309 = vpack.c.bf16 %v4304, %v4303
        %v4310 = vpack.c.bf16 %v4306, %v4305
        %v4311 = vld [vmem:[%s1417] sm:$0xf]
        %v4312 = vld [vmem:[%s1417 + $0x4] sm:$0xf]
        %v4313 = vld [vmem:[%s1417 + $0x8] sm:$0xf]
        %v4314 = vld [vmem:[%s1417 + $0xc] sm:$0xf]
        %v4315 = vld [vmem:[%s1417 + $0x10] sm:$0xf]
        %v4316 = vld [vmem:[%s1417 + $0x14] sm:$0xf]
        %v4317 = vld [vmem:[%s1417 + $0x18] sm:$0xf]
        %v4318 = vld [vmem:[%s1417 + $0x1c] sm:$0xf]
        %v4319 = vld [vmem:[%s1420] sm:$0x1]
        %v4321 = vperm.slane %v4319, 0
        %v4331 = vunpack.c.l.b16 %v4311
        %v4332 = vunpack.c.l.b16 %v4312
        %v4333 = vunpack.c.l.b16 %v4313
        %v4334 = vunpack.c.l.b16 %v4314
        %v4335 = vunpack.c.l.b16 %v4315
        %v4336 = vunpack.c.l.b16 %v4316
        %v4337 = vunpack.c.l.b16 %v4317
        %v4338 = vunpack.c.l.b16 %v4318
        %v4339 = vpack.c.b16 %v4332, %v4331
        %v4340 = vpack.c.b16 %v4334, %v4333
        %v4341 = vpack.c.b16 %v4336, %v4335
        %v4342 = vpack.c.b16 %v4338, %v4337
        %vm4347 = vcmask 523264
        %v4349 = vsel %vm4347, %v4307, 0
        %v4352 = vsel %vm4347, %v4308, 0
        %v4355 = vsel %vm4347, %v4309, 0
        %v4358 = vsel %vm4347, %v4310, 0
        %4360 = vmatpush.bf16.msra.mxu0 0
        %4361 = vmatpush.bf16.msra.mxu0 0
        %4362 = vmatpush.bf16.msra.mxu0 0
        %4363 = vmatpush.bf16.msra.mxu0 0
        %4364 = vmatpush.bf16.msra.mxu0 %v4342
        %4365 = vmatpush.bf16.msra.mxu0 %v4341
        %4366 = vmatpush.bf16.msra.mxu0 %v4340
        %4367 = vmatpush.bf16.msra.mxu0 %v4339
        %4368 = vmatmul.bf16.gmra.mxu0 %v4349
        %v4369 = vpop.f32.mrf.mxu0
        %v4370 = vadd.f32 %v4321, %v4369
        %v4371 = vpop.f32.mrf.mxu0
        %v4372 = vadd.f32 %v4321, %v4371
        %4373 = vmatmul.bf16.gmra.mxu0 %v4352
        %v4374 = vpop.f32.mrf.mxu0
        %v4375 = vadd.f32 %v4321, %v4374
        %v4376 = vpop.f32.mrf.mxu0
        %v4377 = vadd.f32 %v4321, %v4376
        %4378 = vmatmul.bf16.gmra.mxu0 %v4355
        %v4379 = vpop.f32.mrf.mxu0
        %v4380 = vadd.f32 %v4321, %v4379
        %v4381 = vpop.f32.mrf.mxu0
        %v4382 = vadd.f32 %v4321, %v4381
        %4383 = vmatmul.bf16.gmra.mxu0 %v4358
        %v4384 = vpop.f32.mrf.mxu0
        %v4385 = vadd.f32 %v4321, %v4384
        %v4386 = vpop.f32.mrf.mxu0
        %v4387 = vadd.f32 %v4321, %v4386
        %4388 = vdwg.mxu0
        %v4389 = vadd.f32 %v3874, %v4370
        %v4390 = vadd.f32 %v3875, %v4372
        %v4391 = vadd.f32 %v3876, %v4375
        %v4392 = vadd.f32 %v3877, %v4377
        %v4393 = vadd.f32 %v3878, %v4380
        %v4394 = vadd.f32 %v3879, %v4382
        %v4395 = vadd.f32 %v3880, %v4385
        %v4396 = vadd.f32 %v3881, %v4387
        %4397 = vst.msk [vmem:[#allocation2] sm:$0xff] %vm1464, %v4389
        %4398 = vst.msk [vmem:[#allocation2 + $0x8] sm:$0xff] %vm1464, %v4390
        %4399 = vst.msk [vmem:[#allocation2 + $0x10] sm:$0xff] %vm1464, %v4391
        %4400 = vst.msk [vmem:[#allocation2 + $0x18] sm:$0xff] %vm1464, %v4392
        %4401 = vst.msk [vmem:[#allocation2 + $0x20] sm:$0xff] %vm1464, %v4393
        %4402 = vst.msk [vmem:[#allocation2 + $0x28] sm:$0xff] %vm1464, %v4394
        %4403 = vst.msk [vmem:[#allocation2 + $0x30] sm:$0xff] %vm1464, %v4395
        %4404 = vst.msk [vmem:[#allocation2 + $0x38] sm:$0xff] %vm1464, %v4396
        %p4405 = scmp.eq.s32.totalorder %s88, 1
        // Predicated region
        $region153: #{tpu_custom_call.1} parent=147 // pred_check
          %p4406 = pneg %p4405
        $region154: #{tpu_custom_call.1} parent=147 // pred_check_branch
          %4408 = sbr.rel (%p4406) target = $region156
        $region155: #{tpu_custom_call.1} parent=147 // pred_region
          %v4409 = vld [vmem:[%s49] sm:$0x1]
          %v4410 = vld [vmem:[%s51] sm:$0x1]
          %v4411 = vsel %vm1464, %v4389, 0.0
          %4412 = vadd.xlane.f32.xlu0 %v4411
          %v4413 = vpop.xlane.xlu0 %4412
          %v4414 = vsel %vm1464, %v4390, 0.0
          %4415 = vadd.xlane.f32.xlu0 %v4414
          %v4416 = vpop.xlane.xlu0 %4415
          %v4417 = vsel %vm1464, %v4391, 0.0
          %4418 = vadd.xlane.f32.xlu0 %v4417
          %v4419 = vpop.xlane.xlu0 %4418
          %v4420 = vsel %vm1464, %v4392, 0.0
          %4421 = vadd.xlane.f32.xlu0 %v4420
          %v4422 = vpop.xlane.xlu0 %4421
          %v4423 = vsel %vm1464, %v4393, 0.0
          %4424 = vadd.xlane.f32.xlu0 %v4423
          %v4425 = vpop.xlane.xlu0 %4424
          %v4426 = vsel %vm1464, %v4394, 0.0
          %4427 = vadd.xlane.f32.xlu0 %v4426
          %v4428 = vpop.xlane.xlu0 %4427
          %v4429 = vsel %vm1464, %v4395, 0.0
          %4430 = vadd.xlane.f32.xlu0 %v4429
          %v4431 = vpop.xlane.xlu0 %4430
          %v4432 = vsel %vm1464, %v4396, 0.0
          %4433 = vadd.xlane.f32.xlu0 %v4432
          %v4434 = vpop.xlane.xlu0 %4433
          %v4435 = vmul.f32 %v4413, %v1792
          %v4436 = vmul.f32 %v4416, %v1792
          %v4437 = vmul.f32 %v4419, %v1792
          %v4438 = vmul.f32 %v4422, %v1792
          %v4439 = vmul.f32 %v4425, %v1792
          %v4440 = vmul.f32 %v4428, %v1792
          %v4441 = vmul.f32 %v4431, %v1792
          %v4442 = vmul.f32 %v4434, %v1792
          %v4443 = vsub.f32 %v4389, %v4435
          %v4444 = vsub.f32 %v4390, %v4436
          %v4445 = vsub.f32 %v4391, %v4437
          %v4446 = vsub.f32 %v4392, %v4438
          %v4447 = vsub.f32 %v4393, %v4439
          %v4448 = vsub.f32 %v4394, %v4440
          %v4449 = vsub.f32 %v4395, %v4441
          %v4450 = vsub.f32 %v4396, %v4442
          %v4451 = vmul.f32 %v4443, %v4443
          %v4452 = vmul.f32 %v4444, %v4444
          %v4453 = vmul.f32 %v4445, %v4445
          %v4454 = vmul.f32 %v4446, %v4446
          %v4455 = vmul.f32 %v4447, %v4447
          %v4456 = vmul.f32 %v4448, %v4448
          %v4457 = vmul.f32 %v4449, %v4449
          %v4458 = vmul.f32 %v4450, %v4450
          %v4459 = vsel %vm1464, %v4451, 0.0
          %4460 = vadd.xlane.f32.xlu0 %v4459
          %v4461 = vpop.xlane.xlu0 %4460
          %v4462 = vsel %vm1464, %v4452, 0.0
          %4463 = vadd.xlane.f32.xlu0 %v4462
          %v4464 = vpop.xlane.xlu0 %4463
          %v4465 = vsel %vm1464, %v4453, 0.0
          %4466 = vadd.xlane.f32.xlu0 %v4465
          %v4467 = vpop.xlane.xlu0 %4466
          %v4468 = vsel %vm1464, %v4454, 0.0
          %4469 = vadd.xlane.f32.xlu0 %v4468
          %v4470 = vpop.xlane.xlu0 %4469
          %v4471 = vsel %vm1464, %v4455, 0.0
          %4472 = vadd.xlane.f32.xlu0 %v4471
          %v4473 = vpop.xlane.xlu0 %4472
          %v4474 = vsel %vm1464, %v4456, 0.0
          %4475 = vadd.xlane.f32.xlu0 %v4474
          %v4476 = vpop.xlane.xlu0 %4475
          %v4477 = vsel %vm1464, %v4457, 0.0
          %4478 = vadd.xlane.f32.xlu0 %v4477
          %v4479 = vpop.xlane.xlu0 %4478
          %v4480 = vsel %vm1464, %v4458, 0.0
          %4481 = vadd.xlane.f32.xlu0 %v4480
          %v4482 = vpop.xlane.xlu0 %4481
          %v4483 = vmul.f32 %v4461, %v1792
          %v4484 = vmul.f32 %v4464, %v1792
          %v4485 = vmul.f32 %v4467, %v1792
          %v4486 = vmul.f32 %v4470, %v1792
          %v4487 = vmul.f32 %v4473, %v1792
          %v4488 = vmul.f32 %v4476, %v1792
          %v4489 = vmul.f32 %v4479, %v1792
          %v4490 = vmul.f32 %v4482, %v1792
          %v4491 = vadd.f32 %v4483, 1e-06
          %v4492 = vadd.f32 %v4484, 1e-06
          %v4493 = vadd.f32 %v4485, 1e-06
          %v4494 = vadd.f32 %v4486, 1e-06
          %v4495 = vadd.f32 %v4487, 1e-06
          %v4496 = vadd.f32 %v4488, 1e-06
          %v4497 = vadd.f32 %v4489, 1e-06
          %v4498 = vadd.f32 %v4490, 1e-06
          %v4499 = vrsqrt.pop %v4491
          %v4500 = vmul.f32 %v4499, %v4491
          %v4501 = vmul.f32 %v4500, %v4499
          %v4502 = vmul.f32 0.5, %v4501
          %v4503 = vsub.f32 1.5, %v4502
          %v4504 = vmul.f32 %v4499, %v4503
          %vm4505 = vweird.f32 %v4491
          %vm4506 = vweird.f32 %v4499
          %vm4507 = vmor %vm4505, %vm4506
          %v4508 = vsel %vm4507, %v4499, %v4504
          %v4509 = vrsqrt.pop %v4492
          %v4510 = vmul.f32 %v4509, %v4492
          %v4511 = vmul.f32 %v4510, %v4509
          %v4512 = vmul.f32 0.5, %v4511
          %v4513 = vsub.f32 1.5, %v4512
          %v4514 = vmul.f32 %v4509, %v4513
          %vm4515 = vweird.f32 %v4492
          %vm4516 = vweird.f32 %v4509
          %vm4517 = vmor %vm4515, %vm4516
          %v4518 = vsel %vm4517, %v4509, %v4514
          %v4519 = vrsqrt.pop %v4493
          %v4520 = vmul.f32 %v4519, %v4493
          %v4521 = vmul.f32 %v4520, %v4519
          %v4522 = vmul.f32 0.5, %v4521
          %v4523 = vsub.f32 1.5, %v4522
          %v4524 = vmul.f32 %v4519, %v4523
          %vm4525 = vweird.f32 %v4493
          %vm4526 = vweird.f32 %v4519
          %vm4527 = vmor %vm4525, %vm4526
          %v4528 = vsel %vm4527, %v4519, %v4524
          %v4529 = vrsqrt.pop %v4494
          %v4530 = vmul.f32 %v4529, %v4494
          %v4531 = vmul.f32 %v4530, %v4529
          %v4532 = vmul.f32 0.5, %v4531
          %v4533 = vsub.f32 1.5, %v4532
          %v4534 = vmul.f32 %v4529, %v4533
          %vm4535 = vweird.f32 %v4494
          %vm4536 = vweird.f32 %v4529
          %vm4537 = vmor %vm4535, %vm4536
          %v4538 = vsel %vm4537, %v4529, %v4534
          %v4539 = vrsqrt.pop %v4495
          %v4540 = vmul.f32 %v4539, %v4495
          %v4541 = vmul.f32 %v4540, %v4539
          %v4542 = vmul.f32 0.5, %v4541
          %v4543 = vsub.f32 1.5, %v4542
          %v4544 = vmul.f32 %v4539, %v4543
          %vm4545 = vweird.f32 %v4495
          %vm4546 = vweird.f32 %v4539
          %vm4547 = vmor %vm4545, %vm4546
          %v4548 = vsel %vm4547, %v4539, %v4544
          %v4549 = vrsqrt.pop %v4496
          %v4550 = vmul.f32 %v4549, %v4496
          %v4551 = vmul.f32 %v4550, %v4549
          %v4552 = vmul.f32 0.5, %v4551
          %v4553 = vsub.f32 1.5, %v4552
          %v4554 = vmul.f32 %v4549, %v4553
          %vm4555 = vweird.f32 %v4496
          %vm4556 = vweird.f32 %v4549
          %vm4557 = vmor %vm4555, %vm4556
          %v4558 = vsel %vm4557, %v4549, %v4554
          %v4559 = vrsqrt.pop %v4497
          %v4560 = vmul.f32 %v4559, %v4497
          %v4561 = vmul.f32 %v4560, %v4559
          %v4562 = vmul.f32 0.5, %v4561
          %v4563 = vsub.f32 1.5, %v4562
          %v4564 = vmul.f32 %v4559, %v4563
          %vm4565 = vweird.f32 %v4497
          %vm4566 = vweird.f32 %v4559
          %vm4567 = vmor %vm4565, %vm4566
          %v4568 = vsel %vm4567, %v4559, %v4564
          %v4569 = vrsqrt.pop %v4498
          %v4570 = vmul.f32 %v4569, %v4498
          %v4571 = vmul.f32 %v4570, %v4569
          %v4572 = vmul.f32 0.5, %v4571
          %v4573 = vsub.f32 1.5, %v4572
          %v4574 = vmul.f32 %v4569, %v4573
          %vm4575 = vweird.f32 %v4498
          %vm4576 = vweird.f32 %v4569
          %vm4577 = vmor %vm4575, %vm4576
          %v4578 = vsel %vm4577, %v4569, %v4574
          %v4579 = vmul.f32 %v4443, %v4508
          %v4580 = vmul.f32 %v4444, %v4518
          %v4581 = vmul.f32 %v4445, %v4528
          %v4582 = vmul.f32 %v4446, %v4538
          %v4583 = vmul.f32 %v4447, %v4548
          %v4584 = vmul.f32 %v4448, %v4558
          %v4585 = vmul.f32 %v4449, %v4568
          %v4586 = vmul.f32 %v4450, %v4578
          %v4588 = vperm.slane %v4409, 0
          %v4590 = vmul.f32 %v4579, %v4588
          %v4591 = vmul.f32 %v4580, %v4588
          %v4592 = vmul.f32 %v4581, %v4588
          %v4593 = vmul.f32 %v4582, %v4588
          %v4594 = vmul.f32 %v4583, %v4588
          %v4595 = vmul.f32 %v4584, %v4588
          %v4596 = vmul.f32 %v4585, %v4588
          %v4597 = vmul.f32 %v4586, %v4588
          %v4599 = vperm.slane %v4410, 0
          %v4601 = vadd.f32 %v4590, %v4599
          %v4602 = vadd.f32 %v4591, %v4599
          %v4603 = vadd.f32 %v4592, %v4599
          %v4604 = vadd.f32 %v4593, %v4599
          %v4605 = vadd.f32 %v4594, %v4599
          %v4606 = vadd.f32 %v4595, %v4599
          %v4607 = vadd.f32 %v4596, %v4599
          %v4608 = vadd.f32 %v4597, %v4599
          %v4609 = vpack.c.bf16 %v4602, %v4601
          %v4610 = vpack.c.bf16 %v4604, %v4603
          %v4611 = vpack.c.bf16 %v4606, %v4605
          %v4612 = vpack.c.bf16 %v4608, %v4607
          %v4613 = vld [vmem:[%s53] sm:$0xf]
          %v4614 = vld [vmem:[%s53 + $0x4] sm:$0xf]
          %v4615 = vld [vmem:[%s53 + $0x8] sm:$0xf]
          %v4616 = vld [vmem:[%s53 + $0xc] sm:$0xf]
          %v4617 = vld [vmem:[%s55] sm:$0x1]
          %v4619 = vperm.slane %v4617, 0
          %v4625 = vunpack.c.l.b16 %v4613
          %v4626 = vunpack.c.l.b16 %v4614
          %v4627 = vunpack.c.l.b16 %v4615
          %v4628 = vunpack.c.l.b16 %v4616
          %v4629 = vpack.c.b16 %v4626, %v4625
          %v4630 = vpack.c.b16 %v4628, %v4627
          %v4634 = vsel %vm1464, %v4609, 0
          %v4637 = vsel %vm1464, %v4610, 0
          %v4640 = vsel %vm1464, %v4611, 0
          %v4643 = vsel %vm1464, %v4612, 0
          %4645 = vmatpush.bf16.msra.mxu0 0
          %4646 = vmatpush.bf16.msra.mxu0 0
          %4647 = vmatpush.bf16.msra.mxu0 0
          %4648 = vmatpush.bf16.msra.mxu0 0
          %4649 = vmatpush.bf16.msra.mxu0 0
          %4650 = vmatpush.bf16.msra.mxu0 0
          %4651 = vmatpush.bf16.msra.mxu0 %v4630
          %4652 = vmatpush.bf16.msra.mxu0 %v4629
          %4653 = vmatmul.bf16.gmra.mxu0 %v4634
          %v4654 = vpop.f32.mrf.mxu0
          %v4655 = vadd.f32 %v4619, %v4654
          %v4656 = vpop.f32.mrf.mxu0
          %v4657 = vadd.f32 %v4619, %v4656
          %4658 = vmatmul.bf16.gmra.mxu0 %v4637
          %v4659 = vpop.f32.mrf.mxu0
          %v4660 = vadd.f32 %v4619, %v4659
          %v4661 = vpop.f32.mrf.mxu0
          %v4662 = vadd.f32 %v4619, %v4661
          %4663 = vmatmul.bf16.gmra.mxu0 %v4640
          %v4664 = vpop.f32.mrf.mxu0
          %v4665 = vadd.f32 %v4619, %v4664
          %v4666 = vpop.f32.mrf.mxu0
          %v4667 = vadd.f32 %v4619, %v4666
          %4668 = vmatmul.bf16.gmra.mxu0 %v4643
          %v4669 = vpop.f32.mrf.mxu0
          %v4670 = vadd.f32 %v4619, %v4669
          %v4671 = vpop.f32.mrf.mxu0
          %v4672 = vadd.f32 %v4619, %v4671
          %4673 = vdwg.mxu0
          %v4674 = vld [vmem:[%s57] sm:$0x1]
          %v4675 = vld [vmem:[%s59] sm:$0x1]
          %v4676 = vsel %vm1464, %v4655, 0.0
          %4677 = vadd.xlane.f32.xlu0 %v4676
          %v4678 = vpop.xlane.xlu0 %4677
          %v4679 = vsel %vm1464, %v4657, 0.0
          %4680 = vadd.xlane.f32.xlu0 %v4679
          %v4681 = vpop.xlane.xlu0 %4680
          %v4682 = vsel %vm1464, %v4660, 0.0
          %4683 = vadd.xlane.f32.xlu0 %v4682
          %v4684 = vpop.xlane.xlu0 %4683
          %v4685 = vsel %vm1464, %v4662, 0.0
          %4686 = vadd.xlane.f32.xlu0 %v4685
          %v4687 = vpop.xlane.xlu0 %4686
          %v4688 = vsel %vm1464, %v4665, 0.0
          %4689 = vadd.xlane.f32.xlu0 %v4688
          %v4690 = vpop.xlane.xlu0 %4689
          %v4691 = vsel %vm1464, %v4667, 0.0
          %4692 = vadd.xlane.f32.xlu0 %v4691
          %v4693 = vpop.xlane.xlu0 %4692
          %v4694 = vsel %vm1464, %v4670, 0.0
          %4695 = vadd.xlane.f32.xlu0 %v4694
          %v4696 = vpop.xlane.xlu0 %4695
          %v4697 = vsel %vm1464, %v4672, 0.0
          %4698 = vadd.xlane.f32.xlu0 %v4697
          %v4699 = vpop.xlane.xlu0 %4698
          %v4700 = vmul.f32 %v4678, %v1792
          %v4701 = vmul.f32 %v4681, %v1792
          %v4702 = vmul.f32 %v4684, %v1792
          %v4703 = vmul.f32 %v4687, %v1792
          %v4704 = vmul.f32 %v4690, %v1792
          %v4705 = vmul.f32 %v4693, %v1792
          %v4706 = vmul.f32 %v4696, %v1792
          %v4707 = vmul.f32 %v4699, %v1792
          %v4708 = vsub.f32 %v4655, %v4700
          %v4709 = vsub.f32 %v4657, %v4701
          %v4710 = vsub.f32 %v4660, %v4702
          %v4711 = vsub.f32 %v4662, %v4703
          %v4712 = vsub.f32 %v4665, %v4704
          %v4713 = vsub.f32 %v4667, %v4705
          %v4714 = vsub.f32 %v4670, %v4706
          %v4715 = vsub.f32 %v4672, %v4707
          %v4716 = vmul.f32 %v4708, %v4708
          %v4717 = vmul.f32 %v4709, %v4709
          %v4718 = vmul.f32 %v4710, %v4710
          %v4719 = vmul.f32 %v4711, %v4711
          %v4720 = vmul.f32 %v4712, %v4712
          %v4721 = vmul.f32 %v4713, %v4713
          %v4722 = vmul.f32 %v4714, %v4714
          %v4723 = vmul.f32 %v4715, %v4715
          %v4724 = vsel %vm1464, %v4716, 0.0
          %4725 = vadd.xlane.f32.xlu0 %v4724
          %v4726 = vpop.xlane.xlu0 %4725
          %v4727 = vsel %vm1464, %v4717, 0.0
          %4728 = vadd.xlane.f32.xlu0 %v4727
          %v4729 = vpop.xlane.xlu0 %4728
          %v4730 = vsel %vm1464, %v4718, 0.0
          %4731 = vadd.xlane.f32.xlu0 %v4730
          %v4732 = vpop.xlane.xlu0 %4731
          %v4733 = vsel %vm1464, %v4719, 0.0
          %4734 = vadd.xlane.f32.xlu0 %v4733
          %v4735 = vpop.xlane.xlu0 %4734
          %v4736 = vsel %vm1464, %v4720, 0.0
          %4737 = vadd.xlane.f32.xlu0 %v4736
          %v4738 = vpop.xlane.xlu0 %4737
          %v4739 = vsel %vm1464, %v4721, 0.0
          %4740 = vadd.xlane.f32.xlu0 %v4739
          %v4741 = vpop.xlane.xlu0 %4740
          %v4742 = vsel %vm1464, %v4722, 0.0
          %4743 = vadd.xlane.f32.xlu0 %v4742
          %v4744 = vpop.xlane.xlu0 %4743
          %v4745 = vsel %vm1464, %v4723, 0.0
          %4746 = vadd.xlane.f32.xlu0 %v4745
          %v4747 = vpop.xlane.xlu0 %4746
          %v4748 = vmul.f32 %v4726, %v1792
          %v4749 = vmul.f32 %v4729, %v1792
          %v4750 = vmul.f32 %v4732, %v1792
          %v4751 = vmul.f32 %v4735, %v1792
          %v4752 = vmul.f32 %v4738, %v1792
          %v4753 = vmul.f32 %v4741, %v1792
          %v4754 = vmul.f32 %v4744, %v1792
          %v4755 = vmul.f32 %v4747, %v1792
          %v4756 = vadd.f32 %v4748, 1e-06
          %v4757 = vadd.f32 %v4749, 1e-06
          %v4758 = vadd.f32 %v4750, 1e-06
          %v4759 = vadd.f32 %v4751, 1e-06
          %v4760 = vadd.f32 %v4752, 1e-06
          %v4761 = vadd.f32 %v4753, 1e-06
          %v4762 = vadd.f32 %v4754, 1e-06
          %v4763 = vadd.f32 %v4755, 1e-06
          %v4764 = vrsqrt.pop %v4756
          %v4765 = vmul.f32 %v4764, %v4756
          %v4766 = vmul.f32 %v4765, %v4764
          %v4767 = vmul.f32 0.5, %v4766
          %v4768 = vsub.f32 1.5, %v4767
          %v4769 = vmul.f32 %v4764, %v4768
          %vm4770 = vweird.f32 %v4756
          %vm4771 = vweird.f32 %v4764
          %vm4772 = vmor %vm4770, %vm4771
          %v4773 = vsel %vm4772, %v4764, %v4769
          %v4774 = vrsqrt.pop %v4757
          %v4775 = vmul.f32 %v4774, %v4757
          %v4776 = vmul.f32 %v4775, %v4774
          %v4777 = vmul.f32 0.5, %v4776
          %v4778 = vsub.f32 1.5, %v4777
          %v4779 = vmul.f32 %v4774, %v4778
          %vm4780 = vweird.f32 %v4757
          %vm4781 = vweird.f32 %v4774
          %vm4782 = vmor %vm4780, %vm4781
          %v4783 = vsel %vm4782, %v4774, %v4779
          %v4784 = vrsqrt.pop %v4758
          %v4785 = vmul.f32 %v4784, %v4758
          %v4786 = vmul.f32 %v4785, %v4784
          %v4787 = vmul.f32 0.5, %v4786
          %v4788 = vsub.f32 1.5, %v4787
          %v4789 = vmul.f32 %v4784, %v4788
          %vm4790 = vweird.f32 %v4758
          %vm4791 = vweird.f32 %v4784
          %vm4792 = vmor %vm4790, %vm4791
          %v4793 = vsel %vm4792, %v4784, %v4789
          %v4794 = vrsqrt.pop %v4759
          %v4795 = vmul.f32 %v4794, %v4759
          %v4796 = vmul.f32 %v4795, %v4794
          %v4797 = vmul.f32 0.5, %v4796
          %v4798 = vsub.f32 1.5, %v4797
          %v4799 = vmul.f32 %v4794, %v4798
          %vm4800 = vweird.f32 %v4759
          %vm4801 = vweird.f32 %v4794
          %vm4802 = vmor %vm4800, %vm4801
          %v4803 = vsel %vm4802, %v4794, %v4799
          %v4804 = vrsqrt.pop %v4760
          %v4805 = vmul.f32 %v4804, %v4760
          %v4806 = vmul.f32 %v4805, %v4804
          %v4807 = vmul.f32 0.5, %v4806
          %v4808 = vsub.f32 1.5, %v4807
          %v4809 = vmul.f32 %v4804, %v4808
          %vm4810 = vweird.f32 %v4760
          %vm4811 = vweird.f32 %v4804
          %vm4812 = vmor %vm4810, %vm4811
          %v4813 = vsel %vm4812, %v4804, %v4809
          %v4814 = vrsqrt.pop %v4761
          %v4815 = vmul.f32 %v4814, %v4761
          %v4816 = vmul.f32 %v4815, %v4814
          %v4817 = vmul.f32 0.5, %v4816
          %v4818 = vsub.f32 1.5, %v4817
          %v4819 = vmul.f32 %v4814, %v4818
          %vm4820 = vweird.f32 %v4761
          %vm4821 = vweird.f32 %v4814
          %vm4822 = vmor %vm4820, %vm4821
          %v4823 = vsel %vm4822, %v4814, %v4819
          %v4824 = vrsqrt.pop %v4762
          %v4825 = vmul.f32 %v4824, %v4762
          %v4826 = vmul.f32 %v4825, %v4824
          %v4827 = vmul.f32 0.5, %v4826
          %v4828 = vsub.f32 1.5, %v4827
          %v4829 = vmul.f32 %v4824, %v4828
          %vm4830 = vweird.f32 %v4762
          %vm4831 = vweird.f32 %v4824
          %vm4832 = vmor %vm4830, %vm4831
          %v4833 = vsel %vm4832, %v4824, %v4829
          %v4834 = vrsqrt.pop %v4763
          %v4835 = vmul.f32 %v4834, %v4763
          %v4836 = vmul.f32 %v4835, %v4834
          %v4837 = vmul.f32 0.5, %v4836
          %v4838 = vsub.f32 1.5, %v4837
          %v4839 = vmul.f32 %v4834, %v4838
          %vm4840 = vweird.f32 %v4763
          %vm4841 = vweird.f32 %v4834
          %vm4842 = vmor %vm4840, %vm4841
          %v4843 = vsel %vm4842, %v4834, %v4839
          %v4844 = vmul.f32 %v4708, %v4773
          %v4845 = vmul.f32 %v4709, %v4783
          %v4846 = vmul.f32 %v4710, %v4793
          %v4847 = vmul.f32 %v4711, %v4803
          %v4848 = vmul.f32 %v4712, %v4813
          %v4849 = vmul.f32 %v4713, %v4823
          %v4850 = vmul.f32 %v4714, %v4833
          %v4851 = vmul.f32 %v4715, %v4843
          %v4853 = vperm.slane %v4674, 0
          %v4855 = vmul.f32 %v4844, %v4853
          %v4856 = vmul.f32 %v4845, %v4853
          %v4857 = vmul.f32 %v4846, %v4853
          %v4858 = vmul.f32 %v4847, %v4853
          %v4859 = vmul.f32 %v4848, %v4853
          %v4860 = vmul.f32 %v4849, %v4853
          %v4861 = vmul.f32 %v4850, %v4853
          %v4862 = vmul.f32 %v4851, %v4853
          %v4864 = vperm.slane %v4675, 0
          %v4866 = vadd.f32 %v4855, %v4864
          %v4867 = vadd.f32 %v4856, %v4864
          %v4868 = vadd.f32 %v4857, %v4864
          %v4869 = vadd.f32 %v4858, %v4864
          %v4870 = vadd.f32 %v4859, %v4864
          %v4871 = vadd.f32 %v4860, %v4864
          %v4872 = vadd.f32 %v4861, %v4864
          %v4873 = vadd.f32 %v4862, %v4864
          %v4874 = vld [vmem:[%s61] sm:$0x1]
          %v4875 = vpack.c.bf16 %v4867, %v4866
          %v4876 = vpack.c.bf16 %v4869, %v4868
          %v4877 = vpack.c.bf16 %v4871, %v4870
          %v4878 = vpack.c.bf16 %v4873, %v4872
          %v4879 = vld [vmem:[#allocation3] sm:$0x1]
          %4881 = vset.pattern.permute.xlu0 0
          %4882 = vperm.xlu0 %4881, %v4879
          %v4883 = vpop.permute.xlu0 %4882
          %v4885 = vperm.slane %v4883, 0
          %v4887 = vsel %vm1464, %v4874, 0
          %v4890 = vsel %vm1464, %v4875, 0
          %v4893 = vsel %vm1464, %v4876, 0
          %v4896 = vsel %vm1464, %v4877, 0
          %v4899 = vsel %vm1464, %v4878, 0
          %4901 = vmatpush.bf16.xpose.msra.mxu0 0
          %4902 = vmatpush.bf16.xpose.msra.mxu0 0
          %4903 = vmatpush.bf16.xpose.msra.mxu0 0
          %4904 = vmatpush.bf16.xpose.msra.mxu0 0
          %4905 = vmatpush.bf16.xpose.msra.mxu0 %v4899
          %4906 = vmatpush.bf16.xpose.msra.mxu0 %v4896
          %4907 = vmatpush.bf16.xpose.msra.mxu0 %v4893
          %4908 = vmatpush.bf16.xpose.msra.mxu0 %v4890
          %4909 = vmatmul.bf16.gmra.mxu0 %v4887
          %v4910 = vpop.f32.mrf.mxu0
          %v4911 = vadd.f32 %v4885, %v4910
          %v4912 = vpop.f32.mrf.mxu0
          %4913 = vdwg.mxu0
          %vm4914 = vcmask 516096
          %4915 = vst.msk [vmem:[%s1316] sm:$0x1] %vm4914, %v4911
        $region156: #{tpu_custom_call.1} parent=147 // pred_fallthru
          _
        %s4916 = sand.u32 %s906, 1
        %s4917 = scalar_lea.sflag [#allocation5], %s4916
        %s4918 = sand.u32 %s906, 1
        %s4919 = scalar_lea.vmem [#allocation4], %s4918
        // Predicated region
        $region157: #{tpu_custom_call.1} parent=147 // pred_check
          %p4920 = pneg %p916
        $region158: #{tpu_custom_call.1} parent=147 // pred_check_branch
          %4922 = sbr.rel (%p4920) target = $region160
        $region159: #{tpu_custom_call.1} parent=147 // pred_region
          %4924 = vsyncadd %s4917, 0
          %s4925 = sadd.s32 %s87, %s86
          %s4926 = scalar_lea.hbm %s65, %s4925
          %s4928 = sshll.u32 %s4919, 4
          %s4929 = int_to_ptr.vmem [resolvable:$true] %s4928
          %s4930 = sshll.u32 %s4926, 4
          %s4931 = int_to_ptr.hbm [resolvable:$true] %s4930
          %4933 = dma.vmem_to_hbm [thread:$0]  %s4929, 16, %s4931, %s4917
        $region160: #{tpu_custom_call.1} parent=147 // pred_fallthru
          _
      $region148: #{tpu_custom_call.1} parent=5 // pred_fallthru
        _
      %p4934 = scmp.le.s32.totalorder 2, %s76
      // Predicated region
      $region161: #{tpu_custom_call.1} parent=5 // pred_check
        %p4935 = pneg %p4934
      $region162: #{tpu_custom_call.1} parent=5 // pred_check_branch
        %4937 = sbr.rel (%p4935) target = $region164
      $region163: #{tpu_custom_call.1} parent=5 // pred_region
        %s4938 = ssub.s32 %s76, 2
        // Predicated region
        $region165: #{tpu_custom_call.1} parent=163 // pred_check
          %p4939 = pneg %p922
        $region166: #{tpu_custom_call.1} parent=163 // pred_check_branch
          %4941 = sbr.rel (%p4939) target = $region168
        $region167: #{tpu_custom_call.1} parent=163 // pred_region
          %s4942 = sand.u32 %s907, 1
          %s4943 = scalar_lea.sflag [#allocation5], %s4942
          %s4944 = sand.u32 %s907, 1
          %s4945 = scalar_lea.vmem [#allocation4], %s4944
          %4947 = dma.done %s4943, 16
        $region168: #{tpu_custom_call.1} parent=163 // pred_fallthru
          _
      $region164: #{tpu_custom_call.1} parent=5 // pred_fallthru
        _
    $region6: #{tpu_custom_call.1} parent=1 // loop_footer
      %s80 = sadd.s32 1, %s76
    $region7: #{tpu_custom_call.1} parent=1 // loop_footer_branch
      %75 = sbr.rel target = $region3
    $region8: #{tpu_custom_call.1} parent=1 // loop_exit
      _
    %4948 = vsyncpa [#allocation5], 1
    %s4949 = scalar_lea.sflag [#allocation5], 1
    %4950 = vsyncpa %s4949, 1

</llo_original>
